<compile_context>
chip_gen: v5e
topology: v5e:2x2
jax: 0.10.0
libtpu: 0.0.40
codegen_flags: <defaults>
</compile_context>

<pallas_src>
import jax
import jax.numpy as jnp
from jax.experimental import pallas as pl
from jax.experimental.pallas import tpu as pltpu


def _table_transform_kernel(feat_num_ref, w_num_ref, b_num_ref,
                            feat_cat_ref, emb_cat_ref, out_ref):
    tb, n_num = feat_num_ref.shape
    n_cat, n_cls, _ = emb_cat_ref.shape

    xs = []

    # ---- numerical columns: per-column affine embedding (VPU) -------------
    fn = feat_num_ref[...]                                        # (tb, Nn) f32
    for c in range(n_num):
        x_c = (fn[:, c:c + 1] * w_num_ref[c:c + 1, :]
               + b_num_ref[c:c + 1, :])                           # (tb, D) f32
        xs.append(x_c)

    # ---- categorical columns: embedding lookup as an MXU contraction ------
    # one-hot rows are exact 0/1 in f32; HIGHEST precision keeps the selected
    # embedding rows bit-exact w.r.t. a true gather (no bf16 rounding).
    fc = jnp.clip(feat_cat_ref[...], 0, n_cls - 1)                # (tb, Nc) i32
    iota_k = jax.lax.broadcasted_iota(jnp.int32, (tb, n_cls), 1)  # hoisted
    for c in range(n_cat):
        onehot = (fc[:, c:c + 1] == iota_k).astype(jnp.float32)   # (tb, K)
        x_c = jnp.dot(onehot, emb_cat_ref[c],
                      preferred_element_type=jnp.float32,
                      precision=jax.lax.Precision.HIGHEST)        # (tb, D)
        xs.append(x_c)

    # ---- fused torch.cat(dim=1): one lane-dense store of all columns ------
    out_ref[...] = jnp.concatenate(xs, axis=-1).astype(out_ref.dtype)


def _pick_batch_tile(batch):
    # Mem-bound kernel with tiny VMEM footprint: take the biggest tile that
    # does not exceed the batch (inputs are padded up to a tile multiple).
    for t in (1024, 512, 256, 128, 64, 32, 16, 8):
        if batch >= t:
            return t
    return max(batch, 1)


def table_type_transform(feat_num, w_num, b_num, feat_cat, emb_cat,
                         *, out_dtype=jnp.float32):
    """Returns (x, all_col_names) like TableTypeTransform.forward.

    out_dtype can be jnp.bfloat16 to halve output writeback traffic if the
    downstream model tolerates it (math stays f32 in-kernel).
    """
    B, Nn = feat_num.shape
    Nc = feat_cat.shape[1]
    K, D = emb_cat.shape[1], emb_cat.shape[2]
    n_cols = Nn + Nc

    tb = _pick_batch_tile(B)
    nb = pl.cdiv(B, tb)
    B_pad = nb * tb
    if B_pad != B:
        # zero-pad: pad category id 0 is valid after the in-kernel clamp,
        # padded rows are sliced off below.
        feat_num = jnp.pad(feat_num, ((0, B_pad - B), (0, 0)))
        feat_cat = jnp.pad(feat_cat, ((0, B_pad - B), (0, 0)))

    cost = pl.CostEstimate(
        flops=2 * B_pad * Nn * D + 2 * B_pad * Nc * K * D,
        transcendentals=0,
        bytes_accessed=4 * (feat_num.size + w_num.size + b_num.size
                            + feat_cat.size + emb_cat.size
                            + B_pad * n_cols * D),
    )

    x_flat = pl.pallas_call(
        _table_transform_kernel,
        out_shape=jax.ShapeDtypeStruct((B_pad, n_cols * D), out_dtype),
        grid=(nb,),
        in_specs=[
            pl.BlockSpec((tb, Nn), lambda i: (i, 0)),        # feat_num tile
            pl.BlockSpec((Nn, D), lambda i: (0, 0)),         # W     (resident)
            pl.BlockSpec((Nn, D), lambda i: (0, 0)),         # Bias  (resident)
            pl.BlockSpec((tb, Nc), lambda i: (i, 0)),        # feat_cat tile
            pl.BlockSpec((Nc, K, D), lambda i: (0, 0, 0)),   # emb   (resident)
        ],
        out_specs=pl.BlockSpec((tb, n_cols * D), lambda i: (i, 0)),
        compiler_params=pltpu.CompilerParams(
            dimension_semantics=("parallel",)),
        cost_estimate=cost,
    )(feat_num, w_num, b_num, feat_cat, emb_cat)

    if B_pad != B:
        x_flat = x_flat[:B]

    # Free reshape: out[b, c, d] == x_flat[b, c*D + d]  (torch.cat(dim=1)).
    x = x_flat.reshape(B, n_cols, D)
    all_col_names = ([f"num_{i}" for i in range(Nn)]
                     + [f"cat_{i}" for i in range(Nc)])
    return x, all_col_names


def _reference(feat_num, w_num, b_num, feat_cat, emb_cat):
    x_num = feat_num[:, :, None] * w_num[None] + b_num[None]
    x_cat = jnp.take_along_axis(
        emb_cat[None],                                  # (1, Nc, K, D)
        feat_cat[:, :, None, None],                     # (B, Nc, 1, 1)
        axis=2).squeeze(2)                              # (B, Nc, D)
    return jnp.concatenate([x_num, x_cat], axis=1)


if __name__ == "__main__":
    # Small but pipeline-exercising shapes: 2 batch tiles of 128 rows.
    B, Nn, Nc, K, D = 256, 4, 3, 5, 32

    key = jax.random.PRNGKey(0)
    k1, k2, k3, k4, k5 = jax.random.split(key, 5)

    feat_num = jax.random.normal(k1, (B, Nn), dtype=jnp.float32)
    feat_cat = jax.random.randint(k2, (B, Nc), 0, K, dtype=jnp.int32)

    # deterministic synthetic parameters (module __init__ would create these)
    w_num = jax.random.normal(k3, (Nn, D), dtype=jnp.float32) * 0.1
    b_num = jax.random.normal(k4, (Nn, D), dtype=jnp.float32) * 0.1
    emb_cat = jax.random.normal(k5, (Nc, K, D), dtype=jnp.float32) * 0.1

    out, col_names = table_type_transform(feat_num, w_num, b_num,
                                          feat_cat, emb_cat)
    out = jax.block_until_ready(out)

    ref = _reference(feat_num, w_num, b_num, feat_cat, emb_cat)
    assert out.shape == (B, Nn + Nc, D)
    assert len(col_names) == Nn + Nc
    assert jnp.allclose(out, ref, atol=1e-5, rtol=1e-5), "mismatch vs reference"

    # Also exercise the ragged-batch (padded) path.
    Br = 100
    out_r, _ = table_type_transform(feat_num[:Br], w_num, b_num,
                                    feat_cat[:Br], emb_cat)
    out_r = jax.block_until_ready(out_r)
    ref_r = _reference(feat_num[:Br], w_num, b_num, feat_cat[:Br], emb_cat)
    assert out_r.shape == (Br, Nn + Nc, D)
    assert jnp.allclose(out_r, ref_r, atol=1e-5, rtol=1e-5), "ragged mismatch"

    print("KERNEL_OK")
</pallas_src>

<mosaic_0001>
module attributes {stable_mosaic.version = 11 : i64} {
  func.func @_table_transform_kernel(%arg0: i32, %arg1: memref<256x4xf32, #tpu.memory_space<vmem>>, %arg2: memref<4x32xf32, #tpu.memory_space<vmem>>, %arg3: memref<4x32xf32, #tpu.memory_space<vmem>>, %arg4: memref<256x3xi32, #tpu.memory_space<vmem>>, %arg5: memref<3x5x32xf32, #tpu.memory_space<vmem>>, %arg6: memref<256x224xf32, #tpu.memory_space<vmem>>) attributes {dimension_semantics = [#tpu.dimension_semantics<parallel>], iteration_bounds = array<i64: 1>, scalar_prefetch = 0 : i64, scratch_operands = 0 : i64, tpu.core_type = #tpu.core_type<tc>, window_params = [{transform_indices = @transform_0, window_bounds = array<i64: 256, 4>}, {pipeline_mode = #tpu.pipeline_mode<synchronous>, transform_indices = @transform_1, window_bounds = array<i64: 4, 32>}, {pipeline_mode = #tpu.pipeline_mode<synchronous>, transform_indices = @transform_2, window_bounds = array<i64: 4, 32>}, {transform_indices = @transform_3, window_bounds = array<i64: 256, 3>}, {pipeline_mode = #tpu.pipeline_mode<synchronous>, transform_indices = @transform_4, window_bounds = array<i64: 3, 5, 32>}, {transform_indices = @transform_5, window_bounds = array<i64: 256, 224>}]} {
    %c0 = arith.constant 0 : index
    %c0_0 = arith.constant 0 : index
    %0 = vector.load %arg1[%c0, %c0_0] : memref<256x4xf32, #tpu.memory_space<vmem>>, vector<256x4xf32>
    %1 = vector.extract_strided_slice %0 {offsets = [0, 0], sizes = [256, 1], strides = [1, 1]} : vector<256x4xf32> to vector<256x1xf32>
    %c0_1 = arith.constant 0 : index
    %c0_2 = arith.constant 0 : index
    %2 = vector.load %arg2[%c0_1, %c0_2] : memref<4x32xf32, #tpu.memory_space<vmem>>, vector<1x32xf32>
    %3 = vector.broadcast %1 : vector<256x1xf32> to vector<256x32xf32>
    %4 = vector.broadcast %2 : vector<1x32xf32> to vector<256x32xf32>
    %5 = arith.mulf %3, %4 : vector<256x32xf32>
    %c0_3 = arith.constant 0 : index
    %c0_4 = arith.constant 0 : index
    %6 = vector.load %arg3[%c0_3, %c0_4] : memref<4x32xf32, #tpu.memory_space<vmem>>, vector<1x32xf32>
    %7 = vector.broadcast %6 : vector<1x32xf32> to vector<256x32xf32>
    %8 = arith.addf %5, %7 : vector<256x32xf32>
    %9 = vector.extract_strided_slice %0 {offsets = [0, 1], sizes = [256, 1], strides = [1, 1]} : vector<256x4xf32> to vector<256x1xf32>
    %c1 = arith.constant 1 : index
    %c0_5 = arith.constant 0 : index
    %10 = vector.load %arg2[%c1, %c0_5] : memref<4x32xf32, #tpu.memory_space<vmem>>, vector<1x32xf32>
    %11 = vector.broadcast %9 : vector<256x1xf32> to vector<256x32xf32>
    %12 = vector.broadcast %10 : vector<1x32xf32> to vector<256x32xf32>
    %13 = arith.mulf %11, %12 : vector<256x32xf32>
    %c1_6 = arith.constant 1 : index
    %c0_7 = arith.constant 0 : index
    %14 = vector.load %arg3[%c1_6, %c0_7] : memref<4x32xf32, #tpu.memory_space<vmem>>, vector<1x32xf32>
    %15 = vector.broadcast %14 : vector<1x32xf32> to vector<256x32xf32>
    %16 = arith.addf %13, %15 : vector<256x32xf32>
    %17 = vector.extract_strided_slice %0 {offsets = [0, 2], sizes = [256, 1], strides = [1, 1]} : vector<256x4xf32> to vector<256x1xf32>
    %c2 = arith.constant 2 : index
    %c0_8 = arith.constant 0 : index
    %18 = vector.load %arg2[%c2, %c0_8] : memref<4x32xf32, #tpu.memory_space<vmem>>, vector<1x32xf32>
    %19 = vector.broadcast %17 : vector<256x1xf32> to vector<256x32xf32>
    %20 = vector.broadcast %18 : vector<1x32xf32> to vector<256x32xf32>
    %21 = arith.mulf %19, %20 : vector<256x32xf32>
    %c2_9 = arith.constant 2 : index
    %c0_10 = arith.constant 0 : index
    %22 = vector.load %arg3[%c2_9, %c0_10] : memref<4x32xf32, #tpu.memory_space<vmem>>, vector<1x32xf32>
    %23 = vector.broadcast %22 : vector<1x32xf32> to vector<256x32xf32>
    %24 = arith.addf %21, %23 : vector<256x32xf32>
    %25 = vector.extract_strided_slice %0 {offsets = [0, 3], sizes = [256, 1], strides = [1, 1]} : vector<256x4xf32> to vector<256x1xf32>
    %c3 = arith.constant 3 : index
    %c0_11 = arith.constant 0 : index
    %26 = vector.load %arg2[%c3, %c0_11] : memref<4x32xf32, #tpu.memory_space<vmem>>, vector<1x32xf32>
    %27 = vector.broadcast %25 : vector<256x1xf32> to vector<256x32xf32>
    %28 = vector.broadcast %26 : vector<1x32xf32> to vector<256x32xf32>
    %29 = arith.mulf %27, %28 : vector<256x32xf32>
    %c3_12 = arith.constant 3 : index
    %c0_13 = arith.constant 0 : index
    %30 = vector.load %arg3[%c3_12, %c0_13] : memref<4x32xf32, #tpu.memory_space<vmem>>, vector<1x32xf32>
    %31 = vector.broadcast %30 : vector<1x32xf32> to vector<256x32xf32>
    %32 = arith.addf %29, %31 : vector<256x32xf32>
    %c0_14 = arith.constant 0 : index
    %c0_15 = arith.constant 0 : index
    %33 = vector.load %arg4[%c0_14, %c0_15] : memref<256x3xi32, #tpu.memory_space<vmem>>, vector<256x3xi32>
    %c0_i32 = arith.constant 0 : i32
    %c4_i32 = arith.constant 4 : i32
    %34 = vector.broadcast %c0_i32 : i32 to vector<256x3xi32>
    %35 = arith.maxsi %34, %33 : vector<256x3xi32>
    %36 = vector.broadcast %c4_i32 : i32 to vector<256x3xi32>
    %37 = arith.minsi %36, %35 : vector<256x3xi32>
    %38 = tpu.iota {dimensions = array<i32: 1>} : vector<256x5xi32>
    %39 = vector.extract_strided_slice %37 {offsets = [0, 0], sizes = [256, 1], strides = [1, 1]} : vector<256x3xi32> to vector<256x1xi32>
    %40 = vector.broadcast %39 : vector<256x1xi32> to vector<256x5xi32>
    %41 = arith.cmpi eq, %40, %38 : vector<256x5xi32>
    %42 = arith.extui %41 : vector<256x5xi1> to vector<256x5xi32>
    %43 = arith.sitofp %42 : vector<256x5xi32> to vector<256x5xf32>
    %c0_16 = arith.constant 0 : index
    %c0_17 = arith.constant 0 : index
    %c0_18 = arith.constant 0 : index
    %44 = vector.load %arg5[%c0_16, %c0_17, %c0_18] : memref<3x5x32xf32, #tpu.memory_space<vmem>>, vector<1x5x32xf32>
    %45 = vector.shape_cast %44 : vector<1x5x32xf32> to vector<5x32xf32>
    %cst = arith.constant dense<0.000000e+00> : vector<256x32xf32>
    %46 = tpu.matmul %43, %45, %cst {dimension_numbers = #tpu.dot_dimension_numbers<[1], [0], [0], [1], [0, 0, 1, 1], [], []>, precision = #tpu.contract_precision<fp32>} : vector<256x5xf32>, vector<5x32xf32>, vector<256x32xf32> -> vector<256x32xf32>
    %47 = vector.extract_strided_slice %37 {offsets = [0, 1], sizes = [256, 1], strides = [1, 1]} : vector<256x3xi32> to vector<256x1xi32>
    %48 = vector.broadcast %47 : vector<256x1xi32> to vector<256x5xi32>
    %49 = arith.cmpi eq, %48, %38 : vector<256x5xi32>
    %50 = arith.extui %49 : vector<256x5xi1> to vector<256x5xi32>
    %51 = arith.sitofp %50 : vector<256x5xi32> to vector<256x5xf32>
    %c1_19 = arith.constant 1 : index
    %c0_20 = arith.constant 0 : index
    %c0_21 = arith.constant 0 : index
    %52 = vector.load %arg5[%c1_19, %c0_20, %c0_21] : memref<3x5x32xf32, #tpu.memory_space<vmem>>, vector<1x5x32xf32>
    %53 = vector.shape_cast %52 : vector<1x5x32xf32> to vector<5x32xf32>
    %cst_22 = arith.constant dense<0.000000e+00> : vector<256x32xf32>
    %54 = tpu.matmul %51, %53, %cst_22 {dimension_numbers = #tpu.dot_dimension_numbers<[1], [0], [0], [1], [0, 0, 1, 1], [], []>, precision = #tpu.contract_precision<fp32>} : vector<256x5xf32>, vector<5x32xf32>, vector<256x32xf32> -> vector<256x32xf32>
    %55 = vector.extract_strided_slice %37 {offsets = [0, 2], sizes = [256, 1], strides = [1, 1]} : vector<256x3xi32> to vector<256x1xi32>
    %56 = vector.broadcast %55 : vector<256x1xi32> to vector<256x5xi32>
    %57 = arith.cmpi eq, %56, %38 : vector<256x5xi32>
    %58 = arith.extui %57 : vector<256x5xi1> to vector<256x5xi32>
    %59 = arith.sitofp %58 : vector<256x5xi32> to vector<256x5xf32>
    %c2_23 = arith.constant 2 : index
    %c0_24 = arith.constant 0 : index
    %c0_25 = arith.constant 0 : index
    %60 = vector.load %arg5[%c2_23, %c0_24, %c0_25] : memref<3x5x32xf32, #tpu.memory_space<vmem>>, vector<1x5x32xf32>
    %61 = vector.shape_cast %60 : vector<1x5x32xf32> to vector<5x32xf32>
    %cst_26 = arith.constant dense<0.000000e+00> : vector<256x32xf32>
    %62 = tpu.matmul %59, %61, %cst_26 {dimension_numbers = #tpu.dot_dimension_numbers<[1], [0], [0], [1], [0, 0, 1, 1], [], []>, precision = #tpu.contract_precision<fp32>} : vector<256x5xf32>, vector<5x32xf32>, vector<256x32xf32> -> vector<256x32xf32>
    %63 = tpu.concatenate %8, %16, %24, %32, %46, %54, %62 in 1 : vector<256x32xf32>, vector<256x32xf32>, vector<256x32xf32>, vector<256x32xf32>, vector<256x32xf32>, vector<256x32xf32>, vector<256x32xf32> -> vector<256x224xf32>
    %c0_27 = arith.constant 0 : index
    %c0_28 = arith.constant 0 : index
    %64 = vector.load %arg6[%c0_27, %c0_28] : memref<256x224xf32, #tpu.memory_space<vmem>>, vector<256x224xf32>
    tpu.vector_store %arg6[%c0_27, %c0_28], %63 {strides = array<i32>} : memref<256x224xf32, #tpu.memory_space<vmem>>, vector<256x224xf32>,
    return
  }
  func.func @transform_0(%arg0: i32) -> (i32, i32) {
    %c0_i32 = arith.constant 0 : i32
    %c0_i32_0 = arith.constant 0 : i32
    return %arg0, %c0_i32 : i32, i32
  }
  func.func @transform_1(%arg0: i32) -> (i32, i32) {
    %c0_i32 = arith.constant 0 : i32
    %c0_i32_0 = arith.constant 0 : i32
    %c0_i32_1 = arith.constant 0 : i32
    return %c0_i32, %c0_i32_0 : i32, i32
  }
  func.func @transform_2(%arg0: i32) -> (i32, i32) {
    %c0_i32 = arith.constant 0 : i32
    %c0_i32_0 = arith.constant 0 : i32
    %c0_i32_1 = arith.constant 0 : i32
    return %c0_i32, %c0_i32_0 : i32, i32
  }
  func.func @transform_3(%arg0: i32) -> (i32, i32) {
    %c0_i32 = arith.constant 0 : i32
    %c0_i32_0 = arith.constant 0 : i32
    return %arg0, %c0_i32 : i32, i32
  }
  func.func @transform_4(%arg0: i32) -> (i32, i32, i32) {
    %c0_i32 = arith.constant 0 : i32
    %c0_i32_0 = arith.constant 0 : i32
    %c0_i32_1 = arith.constant 0 : i32
    %c0_i32_2 = arith.constant 0 : i32
    return %c0_i32, %c0_i32_0, %c0_i32_1 : i32, i32, i32
  }
  func.func @transform_5(%arg0: i32) -> (i32, i32) {
    %c0_i32 = arith.constant 0 : i32
    %c0_i32_0 = arith.constant 0 : i32
    return %arg0, %c0_i32 : i32, i32
  }
}

</mosaic_0001>

<llo_original>
// kernel: tpu_custom_call.1
$region0: #{tpu_custom_call.1}
  #allocation0 [shape = 'u32[]', space=smem, size = 0x4, offset = 0x4, fixed_abs, tag = 'smem constant byte address 0x4 - core index']
  #allocation1 [shape = 'u32[72,128]{1,0:T(1,128)}', space=vmem, size = 0x9000, scoped, tag = 'internal scratch']
  %s0 = inlined_call_operand.vmem [shape: f32[256,4], index: 0, kind: input, shape index: {}]
  %s1 = inlined_call_operand.vmem [shape: f32[4,32], index: 1, kind: input, shape index: {}]
  %s2 = inlined_call_operand.vmem [shape: f32[4,32], index: 2, kind: input, shape index: {}]
  %s3 = inlined_call_operand.vmem [shape: s32[256,3], index: 3, kind: input, shape index: {}]
  %s4 = inlined_call_operand.vmem [shape: f32[3,5,32], index: 4, kind: input, shape index: {}]
  %s5 = inlined_call_operand.vmem [shape: f32[256,224], index: 5, kind: output, shape index: {}]
  %s6 = sld [smem:[#allocation0]]
  $region30: #{tpu_custom_call.1} parent=0
    _
  %s8 = ssub.s32 1, %s6
  %s9 = scalar_select 0, %s8, %s6
  // Predicated region
  $region2: #{tpu_custom_call.1} parent=0 // pred_check
    _
  $region3: #{tpu_custom_call.1} parent=0 // pred_check_branch
    %11 = sbr.rel (0) target = $region5
  $region4: #{tpu_custom_call.1} parent=0 // pred_region
    _
  $region5: #{tpu_custom_call.1} parent=0 // pred_fallthru
    _
  // Predicated region
  $region6: #{tpu_custom_call.1} parent=0 // pred_check
    _
  $region7: #{tpu_custom_call.1} parent=0 // pred_check_branch
    %13 = sbr.rel (0) target = $region9
  $region8: #{tpu_custom_call.1} parent=0 // pred_region
    _
  $region9: #{tpu_custom_call.1} parent=0 // pred_fallthru
    _
  // Predicated region
  $region10: #{tpu_custom_call.1} parent=0 // pred_check
    _
  $region11: #{tpu_custom_call.1} parent=0 // pred_check_branch
    %15 = sbr.rel (0) target = $region13
  $region12: #{tpu_custom_call.1} parent=0 // pred_region
    _
  $region13: #{tpu_custom_call.1} parent=0 // pred_fallthru
    _
  // Predicated region
  $region14: #{tpu_custom_call.1} parent=0 // pred_check
    _
  $region15: #{tpu_custom_call.1} parent=0 // pred_check_branch
    %17 = sbr.rel (0) target = $region17
  $region16: #{tpu_custom_call.1} parent=0 // pred_region
    _
  $region17: #{tpu_custom_call.1} parent=0 // pred_fallthru
    _
  // Predicated region
  $region18: #{tpu_custom_call.1} parent=0 // pred_check
    _
  $region19: #{tpu_custom_call.1} parent=0 // pred_check_branch
    %19 = sbr.rel (0) target = $region21
  $region20: #{tpu_custom_call.1} parent=0 // pred_region
    _
  $region21: #{tpu_custom_call.1} parent=0 // pred_fallthru
    _
  %v20 = vld [vmem:[%s0] sm:$0xff]
  %v21 = vld [vmem:[%s0 + $0x8] sm:$0xff]
  %v22 = vld [vmem:[%s0 + $0x10] sm:$0xff]
  %v23 = vld [vmem:[%s0 + $0x18] sm:$0xff]
  %v24 = vld [vmem:[%s0 + $0x20] sm:$0xff]
  %v25 = vld [vmem:[%s0 + $0x28] sm:$0xff]
  %v26 = vld [vmem:[%s0 + $0x30] sm:$0xff]
  %v27 = vld [vmem:[%s0 + $0x38] sm:$0xff]
  %v28 = vld [vmem:[%s0 + $0x40] sm:$0xff]
  %v29 = vld [vmem:[%s0 + $0x48] sm:$0xff]
  %v30 = vld [vmem:[%s0 + $0x50] sm:$0xff]
  %v31 = vld [vmem:[%s0 + $0x58] sm:$0xff]
  %v32 = vld [vmem:[%s0 + $0x60] sm:$0xff]
  %v33 = vld [vmem:[%s0 + $0x68] sm:$0xff]
  %v34 = vld [vmem:[%s0 + $0x70] sm:$0xff]
  %v35 = vld [vmem:[%s0 + $0x78] sm:$0xff]
  %v36 = vld [vmem:[%s0 + $0x80] sm:$0xff]
  %v37 = vld [vmem:[%s0 + $0x88] sm:$0xff]
  %v38 = vld [vmem:[%s0 + $0x90] sm:$0xff]
  %v39 = vld [vmem:[%s0 + $0x98] sm:$0xff]
  %v40 = vld [vmem:[%s0 + $0xa0] sm:$0xff]
  %v41 = vld [vmem:[%s0 + $0xa8] sm:$0xff]
  %v42 = vld [vmem:[%s0 + $0xb0] sm:$0xff]
  %v43 = vld [vmem:[%s0 + $0xb8] sm:$0xff]
  %v44 = vld [vmem:[%s0 + $0xc0] sm:$0xff]
  %v45 = vld [vmem:[%s0 + $0xc8] sm:$0xff]
  %v46 = vld [vmem:[%s0 + $0xd0] sm:$0xff]
  %v47 = vld [vmem:[%s0 + $0xd8] sm:$0xff]
  %v48 = vld [vmem:[%s0 + $0xe0] sm:$0xff]
  %v49 = vld [vmem:[%s0 + $0xe8] sm:$0xff]
  %v50 = vld [vmem:[%s0 + $0xf0] sm:$0xff]
  %v51 = vld [vmem:[%s0 + $0xf8] sm:$0xff]
  %v52 = vld [vmem:[%s1] sm:$0x1]
  %54 = vset.pattern.permute.xlu0 0
  %55 = vperm.xlu0 %54, %v20
  %v56 = vpop.permute.xlu0 %55
  %59 = vset.pattern.permute.xlu0 0
  %60 = vperm.xlu0 %59, %v21
  %v61 = vpop.permute.xlu0 %60
  %64 = vset.pattern.permute.xlu0 0
  %65 = vperm.xlu0 %64, %v22
  %v66 = vpop.permute.xlu0 %65
  %69 = vset.pattern.permute.xlu0 0
  %70 = vperm.xlu0 %69, %v23
  %v71 = vpop.permute.xlu0 %70
  %74 = vset.pattern.permute.xlu0 0
  %75 = vperm.xlu0 %74, %v24
  %v76 = vpop.permute.xlu0 %75
  %79 = vset.pattern.permute.xlu0 0
  %80 = vperm.xlu0 %79, %v25
  %v81 = vpop.permute.xlu0 %80
  %84 = vset.pattern.permute.xlu0 0
  %85 = vperm.xlu0 %84, %v26
  %v86 = vpop.permute.xlu0 %85
  %89 = vset.pattern.permute.xlu0 0
  %90 = vperm.xlu0 %89, %v27
  %v91 = vpop.permute.xlu0 %90
  %94 = vset.pattern.permute.xlu0 0
  %95 = vperm.xlu0 %94, %v28
  %v96 = vpop.permute.xlu0 %95
  %99 = vset.pattern.permute.xlu0 0
  %100 = vperm.xlu0 %99, %v29
  %v101 = vpop.permute.xlu0 %100
  %104 = vset.pattern.permute.xlu0 0
  %105 = vperm.xlu0 %104, %v30
  %v106 = vpop.permute.xlu0 %105
  %109 = vset.pattern.permute.xlu0 0
  %110 = vperm.xlu0 %109, %v31
  %v111 = vpop.permute.xlu0 %110
  %114 = vset.pattern.permute.xlu0 0
  %115 = vperm.xlu0 %114, %v32
  %v116 = vpop.permute.xlu0 %115
  %119 = vset.pattern.permute.xlu0 0
  %120 = vperm.xlu0 %119, %v33
  %v121 = vpop.permute.xlu0 %120
  %124 = vset.pattern.permute.xlu0 0
  %125 = vperm.xlu0 %124, %v34
  %v126 = vpop.permute.xlu0 %125
  %129 = vset.pattern.permute.xlu0 0
  %130 = vperm.xlu0 %129, %v35
  %v131 = vpop.permute.xlu0 %130
  %134 = vset.pattern.permute.xlu0 0
  %135 = vperm.xlu0 %134, %v36
  %v136 = vpop.permute.xlu0 %135
  %139 = vset.pattern.permute.xlu0 0
  %140 = vperm.xlu0 %139, %v37
  %v141 = vpop.permute.xlu0 %140
  %144 = vset.pattern.permute.xlu0 0
  %145 = vperm.xlu0 %144, %v38
  %v146 = vpop.permute.xlu0 %145
  %149 = vset.pattern.permute.xlu0 0
  %150 = vperm.xlu0 %149, %v39
  %v151 = vpop.permute.xlu0 %150
  %154 = vset.pattern.permute.xlu0 0
  %155 = vperm.xlu0 %154, %v40
  %v156 = vpop.permute.xlu0 %155
  %159 = vset.pattern.permute.xlu0 0
  %160 = vperm.xlu0 %159, %v41
  %v161 = vpop.permute.xlu0 %160
  %164 = vset.pattern.permute.xlu0 0
  %165 = vperm.xlu0 %164, %v42
  %v166 = vpop.permute.xlu0 %165
  %169 = vset.pattern.permute.xlu0 0
  %170 = vperm.xlu0 %169, %v43
  %v171 = vpop.permute.xlu0 %170
  %174 = vset.pattern.permute.xlu0 0
  %175 = vperm.xlu0 %174, %v44
  %v176 = vpop.permute.xlu0 %175
  %179 = vset.pattern.permute.xlu0 0
  %180 = vperm.xlu0 %179, %v45
  %v181 = vpop.permute.xlu0 %180
  %184 = vset.pattern.permute.xlu0 0
  %185 = vperm.xlu0 %184, %v46
  %v186 = vpop.permute.xlu0 %185
  %189 = vset.pattern.permute.xlu0 0
  %190 = vperm.xlu0 %189, %v47
  %v191 = vpop.permute.xlu0 %190
  %194 = vset.pattern.permute.xlu0 0
  %195 = vperm.xlu0 %194, %v48
  %v196 = vpop.permute.xlu0 %195
  %199 = vset.pattern.permute.xlu0 0
  %200 = vperm.xlu0 %199, %v49
  %v201 = vpop.permute.xlu0 %200
  %204 = vset.pattern.permute.xlu0 0
  %205 = vperm.xlu0 %204, %v50
  %v206 = vpop.permute.xlu0 %205
  %209 = vset.pattern.permute.xlu0 0
  %210 = vperm.xlu0 %209, %v51
  %v211 = vpop.permute.xlu0 %210
  %v213 = vperm.slane %v52, 0
  %v214 = vmul.f32 %v56, %v213
  %v215 = vmul.f32 %v61, %v213
  %v216 = vmul.f32 %v66, %v213
  %v217 = vmul.f32 %v71, %v213
  %v218 = vmul.f32 %v76, %v213
  %v219 = vmul.f32 %v81, %v213
  %v220 = vmul.f32 %v86, %v213
  %v221 = vmul.f32 %v91, %v213
  %v222 = vmul.f32 %v96, %v213
  %v223 = vmul.f32 %v101, %v213
  %v224 = vmul.f32 %v106, %v213
  %v225 = vmul.f32 %v111, %v213
  %v226 = vmul.f32 %v116, %v213
  %v227 = vmul.f32 %v121, %v213
  %v228 = vmul.f32 %v126, %v213
  %v229 = vmul.f32 %v131, %v213
  %v230 = vmul.f32 %v136, %v213
  %v231 = vmul.f32 %v141, %v213
  %v232 = vmul.f32 %v146, %v213
  %v233 = vmul.f32 %v151, %v213
  %v234 = vmul.f32 %v156, %v213
  %v235 = vmul.f32 %v161, %v213
  %v236 = vmul.f32 %v166, %v213
  %v237 = vmul.f32 %v171, %v213
  %v238 = vmul.f32 %v176, %v213
  %v239 = vmul.f32 %v181, %v213
  %v240 = vmul.f32 %v186, %v213
  %v241 = vmul.f32 %v191, %v213
  %v242 = vmul.f32 %v196, %v213
  %v243 = vmul.f32 %v201, %v213
  %v244 = vmul.f32 %v206, %v213
  %v245 = vmul.f32 %v211, %v213
  %v246 = vld [vmem:[%s2] sm:$0x1]
  %v247 = vperm.slane %v246, 0
  %v248 = vadd.f32 %v214, %v247
  %v249 = vadd.f32 %v215, %v247
  %v250 = vadd.f32 %v216, %v247
  %v251 = vadd.f32 %v217, %v247
  %v252 = vadd.f32 %v218, %v247
  %v253 = vadd.f32 %v219, %v247
  %v254 = vadd.f32 %v220, %v247
  %v255 = vadd.f32 %v221, %v247
  %v256 = vadd.f32 %v222, %v247
  %v257 = vadd.f32 %v223, %v247
  %v258 = vadd.f32 %v224, %v247
  %v259 = vadd.f32 %v225, %v247
  %v260 = vadd.f32 %v226, %v247
  %v261 = vadd.f32 %v227, %v247
  %v262 = vadd.f32 %v228, %v247
  %v263 = vadd.f32 %v229, %v247
  %v264 = vadd.f32 %v230, %v247
  %v265 = vadd.f32 %v231, %v247
  %v266 = vadd.f32 %v232, %v247
  %v267 = vadd.f32 %v233, %v247
  %v268 = vadd.f32 %v234, %v247
  %v269 = vadd.f32 %v235, %v247
  %v270 = vadd.f32 %v236, %v247
  %v271 = vadd.f32 %v237, %v247
  %v272 = vadd.f32 %v238, %v247
  %v273 = vadd.f32 %v239, %v247
  %v274 = vadd.f32 %v240, %v247
  %v275 = vadd.f32 %v241, %v247
  %v276 = vadd.f32 %v242, %v247
  %v277 = vadd.f32 %v243, %v247
  %v278 = vadd.f32 %v244, %v247
  %v279 = vadd.f32 %v245, %v247
  %v280 = vld [vmem:[%s1 + $0x1] sm:$0x1]
  %281 = vset.pattern.permute.xlu0 1
  %282 = vperm.xlu0 %281, %v20
  %v283 = vpop.permute.xlu0 %282
  %285 = vset.pattern.permute.xlu0 1
  %286 = vperm.xlu0 %285, %v21
  %v287 = vpop.permute.xlu0 %286
  %289 = vset.pattern.permute.xlu0 1
  %290 = vperm.xlu0 %289, %v22
  %v291 = vpop.permute.xlu0 %290
  %293 = vset.pattern.permute.xlu0 1
  %294 = vperm.xlu0 %293, %v23
  %v295 = vpop.permute.xlu0 %294
  %297 = vset.pattern.permute.xlu0 1
  %298 = vperm.xlu0 %297, %v24
  %v299 = vpop.permute.xlu0 %298
  %301 = vset.pattern.permute.xlu0 1
  %302 = vperm.xlu0 %301, %v25
  %v303 = vpop.permute.xlu0 %302
  %305 = vset.pattern.permute.xlu0 1
  %306 = vperm.xlu0 %305, %v26
  %v307 = vpop.permute.xlu0 %306
  %309 = vset.pattern.permute.xlu0 1
  %310 = vperm.xlu0 %309, %v27
  %v311 = vpop.permute.xlu0 %310
  %313 = vset.pattern.permute.xlu0 1
  %314 = vperm.xlu0 %313, %v28
  %v315 = vpop.permute.xlu0 %314
  %317 = vset.pattern.permute.xlu0 1
  %318 = vperm.xlu0 %317, %v29
  %v319 = vpop.permute.xlu0 %318
  %321 = vset.pattern.permute.xlu0 1
  %322 = vperm.xlu0 %321, %v30
  %v323 = vpop.permute.xlu0 %322
  %325 = vset.pattern.permute.xlu0 1
  %326 = vperm.xlu0 %325, %v31
  %v327 = vpop.permute.xlu0 %326
  %329 = vset.pattern.permute.xlu0 1
  %330 = vperm.xlu0 %329, %v32
  %v331 = vpop.permute.xlu0 %330
  %333 = vset.pattern.permute.xlu0 1
  %334 = vperm.xlu0 %333, %v33
  %v335 = vpop.permute.xlu0 %334
  %337 = vset.pattern.permute.xlu0 1
  %338 = vperm.xlu0 %337, %v34
  %v339 = vpop.permute.xlu0 %338
  %341 = vset.pattern.permute.xlu0 1
  %342 = vperm.xlu0 %341, %v35
  %v343 = vpop.permute.xlu0 %342
  %345 = vset.pattern.permute.xlu0 1
  %346 = vperm.xlu0 %345, %v36
  %v347 = vpop.permute.xlu0 %346
  %349 = vset.pattern.permute.xlu0 1
  %350 = vperm.xlu0 %349, %v37
  %v351 = vpop.permute.xlu0 %350
  %353 = vset.pattern.permute.xlu0 1
  %354 = vperm.xlu0 %353, %v38
  %v355 = vpop.permute.xlu0 %354
  %357 = vset.pattern.permute.xlu0 1
  %358 = vperm.xlu0 %357, %v39
  %v359 = vpop.permute.xlu0 %358
  %361 = vset.pattern.permute.xlu0 1
  %362 = vperm.xlu0 %361, %v40
  %v363 = vpop.permute.xlu0 %362
  %365 = vset.pattern.permute.xlu0 1
  %366 = vperm.xlu0 %365, %v41
  %v367 = vpop.permute.xlu0 %366
  %369 = vset.pattern.permute.xlu0 1
  %370 = vperm.xlu0 %369, %v42
  %v371 = vpop.permute.xlu0 %370
  %373 = vset.pattern.permute.xlu0 1
  %374 = vperm.xlu0 %373, %v43
  %v375 = vpop.permute.xlu0 %374
  %377 = vset.pattern.permute.xlu0 1
  %378 = vperm.xlu0 %377, %v44
  %v379 = vpop.permute.xlu0 %378
  %381 = vset.pattern.permute.xlu0 1
  %382 = vperm.xlu0 %381, %v45
  %v383 = vpop.permute.xlu0 %382
  %385 = vset.pattern.permute.xlu0 1
  %386 = vperm.xlu0 %385, %v46
  %v387 = vpop.permute.xlu0 %386
  %389 = vset.pattern.permute.xlu0 1
  %390 = vperm.xlu0 %389, %v47
  %v391 = vpop.permute.xlu0 %390
  %393 = vset.pattern.permute.xlu0 1
  %394 = vperm.xlu0 %393, %v48
  %v395 = vpop.permute.xlu0 %394
  %397 = vset.pattern.permute.xlu0 1
  %398 = vperm.xlu0 %397, %v49
  %v399 = vpop.permute.xlu0 %398
  %401 = vset.pattern.permute.xlu0 1
  %402 = vperm.xlu0 %401, %v50
  %v403 = vpop.permute.xlu0 %402
  %405 = vset.pattern.permute.xlu0 1
  %406 = vperm.xlu0 %405, %v51
  %v407 = vpop.permute.xlu0 %406
  %v409 = vperm.slane %v280, 0
  %v410 = vmul.f32 %v283, %v409
  %v411 = vmul.f32 %v287, %v409
  %v412 = vmul.f32 %v291, %v409
  %v413 = vmul.f32 %v295, %v409
  %v414 = vmul.f32 %v299, %v409
  %v415 = vmul.f32 %v303, %v409
  %v416 = vmul.f32 %v307, %v409
  %v417 = vmul.f32 %v311, %v409
  %v418 = vmul.f32 %v315, %v409
  %v419 = vmul.f32 %v319, %v409
  %v420 = vmul.f32 %v323, %v409
  %v421 = vmul.f32 %v327, %v409
  %v422 = vmul.f32 %v331, %v409
  %v423 = vmul.f32 %v335, %v409
  %v424 = vmul.f32 %v339, %v409
  %v425 = vmul.f32 %v343, %v409
  %v426 = vmul.f32 %v347, %v409
  %v427 = vmul.f32 %v351, %v409
  %v428 = vmul.f32 %v355, %v409
  %v429 = vmul.f32 %v359, %v409
  %v430 = vmul.f32 %v363, %v409
  %v431 = vmul.f32 %v367, %v409
  %v432 = vmul.f32 %v371, %v409
  %v433 = vmul.f32 %v375, %v409
  %v434 = vmul.f32 %v379, %v409
  %v435 = vmul.f32 %v383, %v409
  %v436 = vmul.f32 %v387, %v409
  %v437 = vmul.f32 %v391, %v409
  %v438 = vmul.f32 %v395, %v409
  %v439 = vmul.f32 %v399, %v409
  %v440 = vmul.f32 %v403, %v409
  %v441 = vmul.f32 %v407, %v409
  %v442 = vld [vmem:[%s2 + $0x1] sm:$0x1]
  %v443 = vperm.slane %v442, 0
  %v444 = vadd.f32 %v410, %v443
  %v445 = vadd.f32 %v411, %v443
  %v446 = vadd.f32 %v412, %v443
  %v447 = vadd.f32 %v413, %v443
  %v448 = vadd.f32 %v414, %v443
  %v449 = vadd.f32 %v415, %v443
  %v450 = vadd.f32 %v416, %v443
  %v451 = vadd.f32 %v417, %v443
  %v452 = vadd.f32 %v418, %v443
  %v453 = vadd.f32 %v419, %v443
  %v454 = vadd.f32 %v420, %v443
  %v455 = vadd.f32 %v421, %v443
  %v456 = vadd.f32 %v422, %v443
  %v457 = vadd.f32 %v423, %v443
  %v458 = vadd.f32 %v424, %v443
  %v459 = vadd.f32 %v425, %v443
  %v460 = vadd.f32 %v426, %v443
  %v461 = vadd.f32 %v427, %v443
  %v462 = vadd.f32 %v428, %v443
  %v463 = vadd.f32 %v429, %v443
  %v464 = vadd.f32 %v430, %v443
  %v465 = vadd.f32 %v431, %v443
  %v466 = vadd.f32 %v432, %v443
  %v467 = vadd.f32 %v433, %v443
  %v468 = vadd.f32 %v434, %v443
  %v469 = vadd.f32 %v435, %v443
  %v470 = vadd.f32 %v436, %v443
  %v471 = vadd.f32 %v437, %v443
  %v472 = vadd.f32 %v438, %v443
  %v473 = vadd.f32 %v439, %v443
  %v474 = vadd.f32 %v440, %v443
  %v475 = vadd.f32 %v441, %v443
  %v476 = vld [vmem:[%s1 + $0x2] sm:$0x1]
  %477 = vset.pattern.permute.xlu0 2
  %478 = vperm.xlu0 %477, %v20
  %v479 = vpop.permute.xlu0 %478
  %481 = vset.pattern.permute.xlu0 2
  %482 = vperm.xlu0 %481, %v21
  %v483 = vpop.permute.xlu0 %482
  %485 = vset.pattern.permute.xlu0 2
  %486 = vperm.xlu0 %485, %v22
  %v487 = vpop.permute.xlu0 %486
  %489 = vset.pattern.permute.xlu0 2
  %490 = vperm.xlu0 %489, %v23
  %v491 = vpop.permute.xlu0 %490
  %493 = vset.pattern.permute.xlu0 2
  %494 = vperm.xlu0 %493, %v24
  %v495 = vpop.permute.xlu0 %494
  %497 = vset.pattern.permute.xlu0 2
  %498 = vperm.xlu0 %497, %v25
  %v499 = vpop.permute.xlu0 %498
  %501 = vset.pattern.permute.xlu0 2
  %502 = vperm.xlu0 %501, %v26
  %v503 = vpop.permute.xlu0 %502
  %505 = vset.pattern.permute.xlu0 2
  %506 = vperm.xlu0 %505, %v27
  %v507 = vpop.permute.xlu0 %506
  %509 = vset.pattern.permute.xlu0 2
  %510 = vperm.xlu0 %509, %v28
  %v511 = vpop.permute.xlu0 %510
  %513 = vset.pattern.permute.xlu0 2
  %514 = vperm.xlu0 %513, %v29
  %v515 = vpop.permute.xlu0 %514
  %517 = vset.pattern.permute.xlu0 2
  %518 = vperm.xlu0 %517, %v30
  %v519 = vpop.permute.xlu0 %518
  %521 = vset.pattern.permute.xlu0 2
  %522 = vperm.xlu0 %521, %v31
  %v523 = vpop.permute.xlu0 %522
  %525 = vset.pattern.permute.xlu0 2
  %526 = vperm.xlu0 %525, %v32
  %v527 = vpop.permute.xlu0 %526
  %529 = vset.pattern.permute.xlu0 2
  %530 = vperm.xlu0 %529, %v33
  %v531 = vpop.permute.xlu0 %530
  %533 = vset.pattern.permute.xlu0 2
  %534 = vperm.xlu0 %533, %v34
  %v535 = vpop.permute.xlu0 %534
  %537 = vset.pattern.permute.xlu0 2
  %538 = vperm.xlu0 %537, %v35
  %v539 = vpop.permute.xlu0 %538
  %541 = vset.pattern.permute.xlu0 2
  %542 = vperm.xlu0 %541, %v36
  %v543 = vpop.permute.xlu0 %542
  %545 = vset.pattern.permute.xlu0 2
  %546 = vperm.xlu0 %545, %v37
  %v547 = vpop.permute.xlu0 %546
  %549 = vset.pattern.permute.xlu0 2
  %550 = vperm.xlu0 %549, %v38
  %v551 = vpop.permute.xlu0 %550
  %553 = vset.pattern.permute.xlu0 2
  %554 = vperm.xlu0 %553, %v39
  %v555 = vpop.permute.xlu0 %554
  %557 = vset.pattern.permute.xlu0 2
  %558 = vperm.xlu0 %557, %v40
  %v559 = vpop.permute.xlu0 %558
  %561 = vset.pattern.permute.xlu0 2
  %562 = vperm.xlu0 %561, %v41
  %v563 = vpop.permute.xlu0 %562
  %565 = vset.pattern.permute.xlu0 2
  %566 = vperm.xlu0 %565, %v42
  %v567 = vpop.permute.xlu0 %566
  %569 = vset.pattern.permute.xlu0 2
  %570 = vperm.xlu0 %569, %v43
  %v571 = vpop.permute.xlu0 %570
  %573 = vset.pattern.permute.xlu0 2
  %574 = vperm.xlu0 %573, %v44
  %v575 = vpop.permute.xlu0 %574
  %577 = vset.pattern.permute.xlu0 2
  %578 = vperm.xlu0 %577, %v45
  %v579 = vpop.permute.xlu0 %578
  %581 = vset.pattern.permute.xlu0 2
  %582 = vperm.xlu0 %581, %v46
  %v583 = vpop.permute.xlu0 %582
  %585 = vset.pattern.permute.xlu0 2
  %586 = vperm.xlu0 %585, %v47
  %v587 = vpop.permute.xlu0 %586
  %589 = vset.pattern.permute.xlu0 2
  %590 = vperm.xlu0 %589, %v48
  %v591 = vpop.permute.xlu0 %590
  %593 = vset.pattern.permute.xlu0 2
  %594 = vperm.xlu0 %593, %v49
  %v595 = vpop.permute.xlu0 %594
  %597 = vset.pattern.permute.xlu0 2
  %598 = vperm.xlu0 %597, %v50
  %v599 = vpop.permute.xlu0 %598
  %601 = vset.pattern.permute.xlu0 2
  %602 = vperm.xlu0 %601, %v51
  %v603 = vpop.permute.xlu0 %602
  %v605 = vperm.slane %v476, 0
  %v606 = vmul.f32 %v479, %v605
  %v607 = vmul.f32 %v483, %v605
  %v608 = vmul.f32 %v487, %v605
  %v609 = vmul.f32 %v491, %v605
  %v610 = vmul.f32 %v495, %v605
  %v611 = vmul.f32 %v499, %v605
  %v612 = vmul.f32 %v503, %v605
  %v613 = vmul.f32 %v507, %v605
  %v614 = vmul.f32 %v511, %v605
  %v615 = vmul.f32 %v515, %v605
  %v616 = vmul.f32 %v519, %v605
  %v617 = vmul.f32 %v523, %v605
  %v618 = vmul.f32 %v527, %v605
  %v619 = vmul.f32 %v531, %v605
  %v620 = vmul.f32 %v535, %v605
  %v621 = vmul.f32 %v539, %v605
  %v622 = vmul.f32 %v543, %v605
  %v623 = vmul.f32 %v547, %v605
  %v624 = vmul.f32 %v551, %v605
  %v625 = vmul.f32 %v555, %v605
  %v626 = vmul.f32 %v559, %v605
  %v627 = vmul.f32 %v563, %v605
  %v628 = vmul.f32 %v567, %v605
  %v629 = vmul.f32 %v571, %v605
  %v630 = vmul.f32 %v575, %v605
  %v631 = vmul.f32 %v579, %v605
  %v632 = vmul.f32 %v583, %v605
  %v633 = vmul.f32 %v587, %v605
  %v634 = vmul.f32 %v591, %v605
  %v635 = vmul.f32 %v595, %v605
  %v636 = vmul.f32 %v599, %v605
  %v637 = vmul.f32 %v603, %v605
  %v638 = vld [vmem:[%s2 + $0x2] sm:$0x1]
  %v639 = vperm.slane %v638, 0
  %v640 = vadd.f32 %v606, %v639
  %v641 = vadd.f32 %v607, %v639
  %v642 = vadd.f32 %v608, %v639
  %v643 = vadd.f32 %v609, %v639
  %v644 = vadd.f32 %v610, %v639
  %v645 = vadd.f32 %v611, %v639
  %v646 = vadd.f32 %v612, %v639
  %v647 = vadd.f32 %v613, %v639
  %v648 = vadd.f32 %v614, %v639
  %v649 = vadd.f32 %v615, %v639
  %v650 = vadd.f32 %v616, %v639
  %v651 = vadd.f32 %v617, %v639
  %v652 = vadd.f32 %v618, %v639
  %v653 = vadd.f32 %v619, %v639
  %v654 = vadd.f32 %v620, %v639
  %v655 = vadd.f32 %v621, %v639
  %v656 = vadd.f32 %v622, %v639
  %v657 = vadd.f32 %v623, %v639
  %v658 = vadd.f32 %v624, %v639
  %v659 = vadd.f32 %v625, %v639
  %v660 = vadd.f32 %v626, %v639
  %v661 = vadd.f32 %v627, %v639
  %v662 = vadd.f32 %v628, %v639
  %v663 = vadd.f32 %v629, %v639
  %v664 = vadd.f32 %v630, %v639
  %v665 = vadd.f32 %v631, %v639
  %v666 = vadd.f32 %v632, %v639
  %v667 = vadd.f32 %v633, %v639
  %v668 = vadd.f32 %v634, %v639
  %v669 = vadd.f32 %v635, %v639
  %v670 = vadd.f32 %v636, %v639
  %v671 = vadd.f32 %v637, %v639
  %v672 = vld [vmem:[%s1 + $0x3] sm:$0x1]
  %673 = vset.pattern.permute.xlu0 3
  %674 = vperm.xlu0 %673, %v20
  %v675 = vpop.permute.xlu0 %674
  %677 = vset.pattern.permute.xlu0 3
  %678 = vperm.xlu0 %677, %v21
  %v679 = vpop.permute.xlu0 %678
  %681 = vset.pattern.permute.xlu0 3
  %682 = vperm.xlu0 %681, %v22
  %v683 = vpop.permute.xlu0 %682
  %685 = vset.pattern.permute.xlu0 3
  %686 = vperm.xlu0 %685, %v23
  %v687 = vpop.permute.xlu0 %686
  %689 = vset.pattern.permute.xlu0 3
  %690 = vperm.xlu0 %689, %v24
  %v691 = vpop.permute.xlu0 %690
  %693 = vset.pattern.permute.xlu0 3
  %694 = vperm.xlu0 %693, %v25
  %v695 = vpop.permute.xlu0 %694
  %697 = vset.pattern.permute.xlu0 3
  %698 = vperm.xlu0 %697, %v26
  %v699 = vpop.permute.xlu0 %698
  %701 = vset.pattern.permute.xlu0 3
  %702 = vperm.xlu0 %701, %v27
  %v703 = vpop.permute.xlu0 %702
  %705 = vset.pattern.permute.xlu0 3
  %706 = vperm.xlu0 %705, %v28
  %v707 = vpop.permute.xlu0 %706
  %709 = vset.pattern.permute.xlu0 3
  %710 = vperm.xlu0 %709, %v29
  %v711 = vpop.permute.xlu0 %710
  %713 = vset.pattern.permute.xlu0 3
  %714 = vperm.xlu0 %713, %v30
  %v715 = vpop.permute.xlu0 %714
  %717 = vset.pattern.permute.xlu0 3
  %718 = vperm.xlu0 %717, %v31
  %v719 = vpop.permute.xlu0 %718
  %721 = vset.pattern.permute.xlu0 3
  %722 = vperm.xlu0 %721, %v32
  %v723 = vpop.permute.xlu0 %722
  %725 = vset.pattern.permute.xlu0 3
  %726 = vperm.xlu0 %725, %v33
  %v727 = vpop.permute.xlu0 %726
  %729 = vset.pattern.permute.xlu0 3
  %730 = vperm.xlu0 %729, %v34
  %v731 = vpop.permute.xlu0 %730
  %733 = vset.pattern.permute.xlu0 3
  %734 = vperm.xlu0 %733, %v35
  %v735 = vpop.permute.xlu0 %734
  %737 = vset.pattern.permute.xlu0 3
  %738 = vperm.xlu0 %737, %v36
  %v739 = vpop.permute.xlu0 %738
  %741 = vset.pattern.permute.xlu0 3
  %742 = vperm.xlu0 %741, %v37
  %v743 = vpop.permute.xlu0 %742
  %745 = vset.pattern.permute.xlu0 3
  %746 = vperm.xlu0 %745, %v38
  %v747 = vpop.permute.xlu0 %746
  %749 = vset.pattern.permute.xlu0 3
  %750 = vperm.xlu0 %749, %v39
  %v751 = vpop.permute.xlu0 %750
  %753 = vset.pattern.permute.xlu0 3
  %754 = vperm.xlu0 %753, %v40
  %v755 = vpop.permute.xlu0 %754
  %757 = vset.pattern.permute.xlu0 3
  %758 = vperm.xlu0 %757, %v41
  %v759 = vpop.permute.xlu0 %758
  %761 = vset.pattern.permute.xlu0 3
  %762 = vperm.xlu0 %761, %v42
  %v763 = vpop.permute.xlu0 %762
  %765 = vset.pattern.permute.xlu0 3
  %766 = vperm.xlu0 %765, %v43
  %v767 = vpop.permute.xlu0 %766
  %769 = vset.pattern.permute.xlu0 3
  %770 = vperm.xlu0 %769, %v44
  %v771 = vpop.permute.xlu0 %770
  %773 = vset.pattern.permute.xlu0 3
  %774 = vperm.xlu0 %773, %v45
  %v775 = vpop.permute.xlu0 %774
  %777 = vset.pattern.permute.xlu0 3
  %778 = vperm.xlu0 %777, %v46
  %v779 = vpop.permute.xlu0 %778
  %781 = vset.pattern.permute.xlu0 3
  %782 = vperm.xlu0 %781, %v47
  %v783 = vpop.permute.xlu0 %782
  %785 = vset.pattern.permute.xlu0 3
  %786 = vperm.xlu0 %785, %v48
  %v787 = vpop.permute.xlu0 %786
  %789 = vset.pattern.permute.xlu0 3
  %790 = vperm.xlu0 %789, %v49
  %v791 = vpop.permute.xlu0 %790
  %793 = vset.pattern.permute.xlu0 3
  %794 = vperm.xlu0 %793, %v50
  %v795 = vpop.permute.xlu0 %794
  %797 = vset.pattern.permute.xlu0 3
  %798 = vperm.xlu0 %797, %v51
  %v799 = vpop.permute.xlu0 %798
  %v801 = vperm.slane %v672, 0
  %v802 = vmul.f32 %v675, %v801
  %v803 = vmul.f32 %v679, %v801
  %v804 = vmul.f32 %v683, %v801
  %v805 = vmul.f32 %v687, %v801
  %v806 = vmul.f32 %v691, %v801
  %v807 = vmul.f32 %v695, %v801
  %v808 = vmul.f32 %v699, %v801
  %v809 = vmul.f32 %v703, %v801
  %v810 = vmul.f32 %v707, %v801
  %v811 = vmul.f32 %v711, %v801
  %v812 = vmul.f32 %v715, %v801
  %v813 = vmul.f32 %v719, %v801
  %v814 = vmul.f32 %v723, %v801
  %v815 = vmul.f32 %v727, %v801
  %v816 = vmul.f32 %v731, %v801
  %v817 = vmul.f32 %v735, %v801
  %v818 = vmul.f32 %v739, %v801
  %v819 = vmul.f32 %v743, %v801
  %v820 = vmul.f32 %v747, %v801
  %v821 = vmul.f32 %v751, %v801
  %v822 = vmul.f32 %v755, %v801
  %v823 = vmul.f32 %v759, %v801
  %v824 = vmul.f32 %v763, %v801
  %v825 = vmul.f32 %v767, %v801
  %v826 = vmul.f32 %v771, %v801
  %v827 = vmul.f32 %v775, %v801
  %v828 = vmul.f32 %v779, %v801
  %v829 = vmul.f32 %v783, %v801
  %v830 = vmul.f32 %v787, %v801
  %v831 = vmul.f32 %v791, %v801
  %v832 = vmul.f32 %v795, %v801
  %v833 = vmul.f32 %v799, %v801
  %v834 = vld [vmem:[%s2 + $0x3] sm:$0x1]
  %v835 = vperm.slane %v834, 0
  %v836 = vadd.f32 %v802, %v835
  %v837 = vadd.f32 %v803, %v835
  %v838 = vadd.f32 %v804, %v835
  %v839 = vadd.f32 %v805, %v835
  %v840 = vadd.f32 %v806, %v835
  %v841 = vadd.f32 %v807, %v835
  %v842 = vadd.f32 %v808, %v835
  %v843 = vadd.f32 %v809, %v835
  %v844 = vadd.f32 %v810, %v835
  %v845 = vadd.f32 %v811, %v835
  %v846 = vadd.f32 %v812, %v835
  %v847 = vadd.f32 %v813, %v835
  %v848 = vadd.f32 %v814, %v835
  %v849 = vadd.f32 %v815, %v835
  %v850 = vadd.f32 %v816, %v835
  %v851 = vadd.f32 %v817, %v835
  %v852 = vadd.f32 %v818, %v835
  %v853 = vadd.f32 %v819, %v835
  %v854 = vadd.f32 %v820, %v835
  %v855 = vadd.f32 %v821, %v835
  %v856 = vadd.f32 %v822, %v835
  %v857 = vadd.f32 %v823, %v835
  %v858 = vadd.f32 %v824, %v835
  %v859 = vadd.f32 %v825, %v835
  %v860 = vadd.f32 %v826, %v835
  %v861 = vadd.f32 %v827, %v835
  %v862 = vadd.f32 %v828, %v835
  %v863 = vadd.f32 %v829, %v835
  %v864 = vadd.f32 %v830, %v835
  %v865 = vadd.f32 %v831, %v835
  %v866 = vadd.f32 %v832, %v835
  %v867 = vadd.f32 %v833, %v835
  %v868 = vld [vmem:[%s3] sm:$0xff]
  %v869 = vld [vmem:[%s3 + $0x8] sm:$0xff]
  %v870 = vld [vmem:[%s3 + $0x10] sm:$0xff]
  %v871 = vld [vmem:[%s3 + $0x18] sm:$0xff]
  %v872 = vld [vmem:[%s3 + $0x20] sm:$0xff]
  %v873 = vld [vmem:[%s3 + $0x28] sm:$0xff]
  %v874 = vld [vmem:[%s3 + $0x30] sm:$0xff]
  %v875 = vld [vmem:[%s3 + $0x38] sm:$0xff]
  %v876 = vld [vmem:[%s3 + $0x40] sm:$0xff]
  %v877 = vld [vmem:[%s3 + $0x48] sm:$0xff]
  %v878 = vld [vmem:[%s3 + $0x50] sm:$0xff]
  %v879 = vld [vmem:[%s3 + $0x58] sm:$0xff]
  %v880 = vld [vmem:[%s3 + $0x60] sm:$0xff]
  %v881 = vld [vmem:[%s3 + $0x68] sm:$0xff]
  %v882 = vld [vmem:[%s3 + $0x70] sm:$0xff]
  %v883 = vld [vmem:[%s3 + $0x78] sm:$0xff]
  %v884 = vld [vmem:[%s3 + $0x80] sm:$0xff]
  %v885 = vld [vmem:[%s3 + $0x88] sm:$0xff]
  %v886 = vld [vmem:[%s3 + $0x90] sm:$0xff]
  %v887 = vld [vmem:[%s3 + $0x98] sm:$0xff]
  %v888 = vld [vmem:[%s3 + $0xa0] sm:$0xff]
  %v889 = vld [vmem:[%s3 + $0xa8] sm:$0xff]
  %v890 = vld [vmem:[%s3 + $0xb0] sm:$0xff]
  %v891 = vld [vmem:[%s3 + $0xb8] sm:$0xff]
  %v892 = vld [vmem:[%s3 + $0xc0] sm:$0xff]
  %v893 = vld [vmem:[%s3 + $0xc8] sm:$0xff]
  %v894 = vld [vmem:[%s3 + $0xd0] sm:$0xff]
  %v895 = vld [vmem:[%s3 + $0xd8] sm:$0xff]
  %v896 = vld [vmem:[%s3 + $0xe0] sm:$0xff]
  %v897 = vld [vmem:[%s3 + $0xe8] sm:$0xff]
  %v898 = vld [vmem:[%s3 + $0xf0] sm:$0xff]
  %v899 = vld [vmem:[%s3 + $0xf8] sm:$0xff]
  %vm900 = vcmp.gt.s32.totalorder %v868, 0
  %v901 = vsel %vm900, %v868, 0
  %vm902 = vcmp.gt.s32.totalorder %v869, 0
  %v903 = vsel %vm902, %v869, 0
  %vm904 = vcmp.gt.s32.totalorder %v870, 0
  %v905 = vsel %vm904, %v870, 0
  %vm906 = vcmp.gt.s32.totalorder %v871, 0
  %v907 = vsel %vm906, %v871, 0
  %vm908 = vcmp.gt.s32.totalorder %v872, 0
  %v909 = vsel %vm908, %v872, 0
  %vm910 = vcmp.gt.s32.totalorder %v873, 0
  %v911 = vsel %vm910, %v873, 0
  %vm912 = vcmp.gt.s32.totalorder %v874, 0
  %v913 = vsel %vm912, %v874, 0
  %vm914 = vcmp.gt.s32.totalorder %v875, 0
  %v915 = vsel %vm914, %v875, 0
  %vm916 = vcmp.gt.s32.totalorder %v876, 0
  %v917 = vsel %vm916, %v876, 0
  %vm918 = vcmp.gt.s32.totalorder %v877, 0
  %v919 = vsel %vm918, %v877, 0
  %vm920 = vcmp.gt.s32.totalorder %v878, 0
  %v921 = vsel %vm920, %v878, 0
  %vm922 = vcmp.gt.s32.totalorder %v879, 0
  %v923 = vsel %vm922, %v879, 0
  %vm924 = vcmp.gt.s32.totalorder %v880, 0
  %v925 = vsel %vm924, %v880, 0
  %vm926 = vcmp.gt.s32.totalorder %v881, 0
  %v927 = vsel %vm926, %v881, 0
  %vm928 = vcmp.gt.s32.totalorder %v882, 0
  %v929 = vsel %vm928, %v882, 0
  %vm930 = vcmp.gt.s32.totalorder %v883, 0
  %v931 = vsel %vm930, %v883, 0
  %vm932 = vcmp.gt.s32.totalorder %v884, 0
  %v933 = vsel %vm932, %v884, 0
  %vm934 = vcmp.gt.s32.totalorder %v885, 0
  %v935 = vsel %vm934, %v885, 0
  %vm936 = vcmp.gt.s32.totalorder %v886, 0
  %v937 = vsel %vm936, %v886, 0
  %vm938 = vcmp.gt.s32.totalorder %v887, 0
  %v939 = vsel %vm938, %v887, 0
  %vm940 = vcmp.gt.s32.totalorder %v888, 0
  %v941 = vsel %vm940, %v888, 0
  %vm942 = vcmp.gt.s32.totalorder %v889, 0
  %v943 = vsel %vm942, %v889, 0
  %vm944 = vcmp.gt.s32.totalorder %v890, 0
  %v945 = vsel %vm944, %v890, 0
  %vm946 = vcmp.gt.s32.totalorder %v891, 0
  %v947 = vsel %vm946, %v891, 0
  %vm948 = vcmp.gt.s32.totalorder %v892, 0
  %v949 = vsel %vm948, %v892, 0
  %vm950 = vcmp.gt.s32.totalorder %v893, 0
  %v951 = vsel %vm950, %v893, 0
  %vm952 = vcmp.gt.s32.totalorder %v894, 0
  %v953 = vsel %vm952, %v894, 0
  %vm954 = vcmp.gt.s32.totalorder %v895, 0
  %v955 = vsel %vm954, %v895, 0
  %vm956 = vcmp.gt.s32.totalorder %v896, 0
  %v957 = vsel %vm956, %v896, 0
  %vm958 = vcmp.gt.s32.totalorder %v897, 0
  %v959 = vsel %vm958, %v897, 0
  %vm960 = vcmp.gt.s32.totalorder %v898, 0
  %v961 = vsel %vm960, %v898, 0
  %vm962 = vcmp.gt.s32.totalorder %v899, 0
  %v963 = vsel %vm962, %v899, 0
  %vm964 = vcmp.lt.s32.totalorder %v901, 4
  %v965 = vsel %vm964, %v901, 4
  %vm966 = vcmp.lt.s32.totalorder %v903, 4
  %v967 = vsel %vm966, %v903, 4
  %vm968 = vcmp.lt.s32.totalorder %v905, 4
  %v969 = vsel %vm968, %v905, 4
  %vm970 = vcmp.lt.s32.totalorder %v907, 4
  %v971 = vsel %vm970, %v907, 4
  %vm972 = vcmp.lt.s32.totalorder %v909, 4
  %v973 = vsel %vm972, %v909, 4
  %vm974 = vcmp.lt.s32.totalorder %v911, 4
  %v975 = vsel %vm974, %v911, 4
  %vm976 = vcmp.lt.s32.totalorder %v913, 4
  %v977 = vsel %vm976, %v913, 4
  %vm978 = vcmp.lt.s32.totalorder %v915, 4
  %v979 = vsel %vm978, %v915, 4
  %vm980 = vcmp.lt.s32.totalorder %v917, 4
  %v981 = vsel %vm980, %v917, 4
  %vm982 = vcmp.lt.s32.totalorder %v919, 4
  %v983 = vsel %vm982, %v919, 4
  %vm984 = vcmp.lt.s32.totalorder %v921, 4
  %v985 = vsel %vm984, %v921, 4
  %vm986 = vcmp.lt.s32.totalorder %v923, 4
  %v987 = vsel %vm986, %v923, 4
  %vm988 = vcmp.lt.s32.totalorder %v925, 4
  %v989 = vsel %vm988, %v925, 4
  %vm990 = vcmp.lt.s32.totalorder %v927, 4
  %v991 = vsel %vm990, %v927, 4
  %vm992 = vcmp.lt.s32.totalorder %v929, 4
  %v993 = vsel %vm992, %v929, 4
  %vm994 = vcmp.lt.s32.totalorder %v931, 4
  %v995 = vsel %vm994, %v931, 4
  %vm996 = vcmp.lt.s32.totalorder %v933, 4
  %v997 = vsel %vm996, %v933, 4
  %vm998 = vcmp.lt.s32.totalorder %v935, 4
  %v999 = vsel %vm998, %v935, 4
  %vm1000 = vcmp.lt.s32.totalorder %v937, 4
  %v1001 = vsel %vm1000, %v937, 4
  %vm1002 = vcmp.lt.s32.totalorder %v939, 4
  %v1003 = vsel %vm1002, %v939, 4
  %vm1004 = vcmp.lt.s32.totalorder %v941, 4
  %v1005 = vsel %vm1004, %v941, 4
  %vm1006 = vcmp.lt.s32.totalorder %v943, 4
  %v1007 = vsel %vm1006, %v943, 4
  %vm1008 = vcmp.lt.s32.totalorder %v945, 4
  %v1009 = vsel %vm1008, %v945, 4
  %vm1010 = vcmp.lt.s32.totalorder %v947, 4
  %v1011 = vsel %vm1010, %v947, 4
  %vm1012 = vcmp.lt.s32.totalorder %v949, 4
  %v1013 = vsel %vm1012, %v949, 4
  %vm1014 = vcmp.lt.s32.totalorder %v951, 4
  %v1015 = vsel %vm1014, %v951, 4
  %vm1016 = vcmp.lt.s32.totalorder %v953, 4
  %v1017 = vsel %vm1016, %v953, 4
  %vm1018 = vcmp.lt.s32.totalorder %v955, 4
  %v1019 = vsel %vm1018, %v955, 4
  %vm1020 = vcmp.lt.s32.totalorder %v957, 4
  %v1021 = vsel %vm1020, %v957, 4
  %vm1022 = vcmp.lt.s32.totalorder %v959, 4
  %v1023 = vsel %vm1022, %v959, 4
  %vm1024 = vcmp.lt.s32.totalorder %v961, 4
  %v1025 = vsel %vm1024, %v961, 4
  %vm1026 = vcmp.lt.s32.totalorder %v963, 4
  %v1027 = vsel %vm1026, %v963, 4
  %v1028 = vlaneseq
  %v1029 = vand.u32 %v1028, 127
  %1030 = vset.pattern.permute.xlu0 0
  %1031 = vperm.xlu0 %1030, %v965
  %v1032 = vpop.permute.xlu0 %1031
  %1033 = vset.pattern.permute.xlu0 0
  %1034 = vperm.xlu0 %1033, %v967
  %v1035 = vpop.permute.xlu0 %1034
  %1036 = vset.pattern.permute.xlu0 0
  %1037 = vperm.xlu0 %1036, %v969
  %v1038 = vpop.permute.xlu0 %1037
  %1039 = vset.pattern.permute.xlu0 0
  %1040 = vperm.xlu0 %1039, %v971
  %v1041 = vpop.permute.xlu0 %1040
  %1042 = vset.pattern.permute.xlu0 0
  %1043 = vperm.xlu0 %1042, %v973
  %v1044 = vpop.permute.xlu0 %1043
  %1045 = vset.pattern.permute.xlu0 0
  %1046 = vperm.xlu0 %1045, %v975
  %v1047 = vpop.permute.xlu0 %1046
  %1048 = vset.pattern.permute.xlu0 0
  %1049 = vperm.xlu0 %1048, %v977
  %v1050 = vpop.permute.xlu0 %1049
  %1051 = vset.pattern.permute.xlu0 0
  %1052 = vperm.xlu0 %1051, %v979
  %v1053 = vpop.permute.xlu0 %1052
  %1054 = vset.pattern.permute.xlu0 0
  %1055 = vperm.xlu0 %1054, %v981
  %v1056 = vpop.permute.xlu0 %1055
  %1057 = vset.pattern.permute.xlu0 0
  %1058 = vperm.xlu0 %1057, %v983
  %v1059 = vpop.permute.xlu0 %1058
  %1060 = vset.pattern.permute.xlu0 0
  %1061 = vperm.xlu0 %1060, %v985
  %v1062 = vpop.permute.xlu0 %1061
  %1063 = vset.pattern.permute.xlu0 0
  %1064 = vperm.xlu0 %1063, %v987
  %v1065 = vpop.permute.xlu0 %1064
  %1066 = vset.pattern.permute.xlu0 0
  %1067 = vperm.xlu0 %1066, %v989
  %v1068 = vpop.permute.xlu0 %1067
  %1069 = vset.pattern.permute.xlu0 0
  %1070 = vperm.xlu0 %1069, %v991
  %v1071 = vpop.permute.xlu0 %1070
  %1072 = vset.pattern.permute.xlu0 0
  %1073 = vperm.xlu0 %1072, %v993
  %v1074 = vpop.permute.xlu0 %1073
  %1075 = vset.pattern.permute.xlu0 0
  %1076 = vperm.xlu0 %1075, %v995
  %v1077 = vpop.permute.xlu0 %1076
  %1078 = vset.pattern.permute.xlu0 0
  %1079 = vperm.xlu0 %1078, %v997
  %v1080 = vpop.permute.xlu0 %1079
  %1081 = vset.pattern.permute.xlu0 0
  %1082 = vperm.xlu0 %1081, %v999
  %v1083 = vpop.permute.xlu0 %1082
  %1084 = vset.pattern.permute.xlu0 0
  %1085 = vperm.xlu0 %1084, %v1001
  %v1086 = vpop.permute.xlu0 %1085
  %1087 = vset.pattern.permute.xlu0 0
  %1088 = vperm.xlu0 %1087, %v1003
  %v1089 = vpop.permute.xlu0 %1088
  %1090 = vset.pattern.permute.xlu0 0
  %1091 = vperm.xlu0 %1090, %v1005
  %v1092 = vpop.permute.xlu0 %1091
  %1093 = vset.pattern.permute.xlu0 0
  %1094 = vperm.xlu0 %1093, %v1007
  %v1095 = vpop.permute.xlu0 %1094
  %1096 = vset.pattern.permute.xlu0 0
  %1097 = vperm.xlu0 %1096, %v1009
  %v1098 = vpop.permute.xlu0 %1097
  %1099 = vset.pattern.permute.xlu0 0
  %1100 = vperm.xlu0 %1099, %v1011
  %v1101 = vpop.permute.xlu0 %1100
  %1102 = vset.pattern.permute.xlu0 0
  %1103 = vperm.xlu0 %1102, %v1013
  %v1104 = vpop.permute.xlu0 %1103
  %1105 = vset.pattern.permute.xlu0 0
  %1106 = vperm.xlu0 %1105, %v1015
  %v1107 = vpop.permute.xlu0 %1106
  %1108 = vset.pattern.permute.xlu0 0
  %1109 = vperm.xlu0 %1108, %v1017
  %v1110 = vpop.permute.xlu0 %1109
  %1111 = vset.pattern.permute.xlu0 0
  %1112 = vperm.xlu0 %1111, %v1019
  %v1113 = vpop.permute.xlu0 %1112
  %1114 = vset.pattern.permute.xlu0 0
  %1115 = vperm.xlu0 %1114, %v1021
  %v1116 = vpop.permute.xlu0 %1115
  %1117 = vset.pattern.permute.xlu0 0
  %1118 = vperm.xlu0 %1117, %v1023
  %v1119 = vpop.permute.xlu0 %1118
  %1120 = vset.pattern.permute.xlu0 0
  %1121 = vperm.xlu0 %1120, %v1025
  %v1122 = vpop.permute.xlu0 %1121
  %1123 = vset.pattern.permute.xlu0 0
  %1124 = vperm.xlu0 %1123, %v1027
  %v1125 = vpop.permute.xlu0 %1124
  %vm1126 = vcmp.eq.s32.totalorder %v1032, %v1029
  %vm1127 = vcmp.eq.s32.totalorder %v1035, %v1029
  %vm1128 = vcmp.eq.s32.totalorder %v1038, %v1029
  %vm1129 = vcmp.eq.s32.totalorder %v1041, %v1029
  %vm1130 = vcmp.eq.s32.totalorder %v1044, %v1029
  %vm1131 = vcmp.eq.s32.totalorder %v1047, %v1029
  %vm1132 = vcmp.eq.s32.totalorder %v1050, %v1029
  %vm1133 = vcmp.eq.s32.totalorder %v1053, %v1029
  %vm1134 = vcmp.eq.s32.totalorder %v1056, %v1029
  %vm1135 = vcmp.eq.s32.totalorder %v1059, %v1029
  %vm1136 = vcmp.eq.s32.totalorder %v1062, %v1029
  %vm1137 = vcmp.eq.s32.totalorder %v1065, %v1029
  %vm1138 = vcmp.eq.s32.totalorder %v1068, %v1029
  %vm1139 = vcmp.eq.s32.totalorder %v1071, %v1029
  %vm1140 = vcmp.eq.s32.totalorder %v1074, %v1029
  %vm1141 = vcmp.eq.s32.totalorder %v1077, %v1029
  %vm1142 = vcmp.eq.s32.totalorder %v1080, %v1029
  %vm1143 = vcmp.eq.s32.totalorder %v1083, %v1029
  %vm1144 = vcmp.eq.s32.totalorder %v1086, %v1029
  %vm1145 = vcmp.eq.s32.totalorder %v1089, %v1029
  %vm1146 = vcmp.eq.s32.totalorder %v1092, %v1029
  %vm1147 = vcmp.eq.s32.totalorder %v1095, %v1029
  %vm1148 = vcmp.eq.s32.totalorder %v1098, %v1029
  %vm1149 = vcmp.eq.s32.totalorder %v1101, %v1029
  %vm1150 = vcmp.eq.s32.totalorder %v1104, %v1029
  %vm1151 = vcmp.eq.s32.totalorder %v1107, %v1029
  %vm1152 = vcmp.eq.s32.totalorder %v1110, %v1029
  %vm1153 = vcmp.eq.s32.totalorder %v1113, %v1029
  %vm1154 = vcmp.eq.s32.totalorder %v1116, %v1029
  %vm1155 = vcmp.eq.s32.totalorder %v1119, %v1029
  %vm1156 = vcmp.eq.s32.totalorder %v1122, %v1029
  %vm1157 = vcmp.eq.s32.totalorder %v1125, %v1029
  %v1158 = vsel %vm1126, 1, 0
  %v1159 = vsel %vm1127, 1, 0
  %v1160 = vsel %vm1128, 1, 0
  %v1161 = vsel %vm1129, 1, 0
  %v1162 = vsel %vm1130, 1, 0
  %v1163 = vsel %vm1131, 1, 0
  %v1164 = vsel %vm1132, 1, 0
  %v1165 = vsel %vm1133, 1, 0
  %v1166 = vsel %vm1134, 1, 0
  %v1167 = vsel %vm1135, 1, 0
  %v1168 = vsel %vm1136, 1, 0
  %v1169 = vsel %vm1137, 1, 0
  %v1170 = vsel %vm1138, 1, 0
  %v1171 = vsel %vm1139, 1, 0
  %v1172 = vsel %vm1140, 1, 0
  %v1173 = vsel %vm1141, 1, 0
  %v1174 = vsel %vm1142, 1, 0
  %v1175 = vsel %vm1143, 1, 0
  %v1176 = vsel %vm1144, 1, 0
  %v1177 = vsel %vm1145, 1, 0
  %v1178 = vsel %vm1146, 1, 0
  %v1179 = vsel %vm1147, 1, 0
  %v1180 = vsel %vm1148, 1, 0
  %v1181 = vsel %vm1149, 1, 0
  %v1182 = vsel %vm1150, 1, 0
  %v1183 = vsel %vm1151, 1, 0
  %v1184 = vsel %vm1152, 1, 0
  %v1185 = vsel %vm1153, 1, 0
  %v1186 = vsel %vm1154, 1, 0
  %v1187 = vsel %vm1155, 1, 0
  %v1188 = vsel %vm1156, 1, 0
  %v1189 = vsel %vm1157, 1, 0
  %v1190 = vcvt.s32.f32 %v1158
  %v1191 = vcvt.s32.f32 %v1159
  %v1192 = vcvt.s32.f32 %v1160
  %v1193 = vcvt.s32.f32 %v1161
  %v1194 = vcvt.s32.f32 %v1162
  %v1195 = vcvt.s32.f32 %v1163
  %v1196 = vcvt.s32.f32 %v1164
  %v1197 = vcvt.s32.f32 %v1165
  %v1198 = vcvt.s32.f32 %v1166
  %v1199 = vcvt.s32.f32 %v1167
  %v1200 = vcvt.s32.f32 %v1168
  %v1201 = vcvt.s32.f32 %v1169
  %v1202 = vcvt.s32.f32 %v1170
  %v1203 = vcvt.s32.f32 %v1171
  %v1204 = vcvt.s32.f32 %v1172
  %v1205 = vcvt.s32.f32 %v1173
  %v1206 = vcvt.s32.f32 %v1174
  %v1207 = vcvt.s32.f32 %v1175
  %v1208 = vcvt.s32.f32 %v1176
  %v1209 = vcvt.s32.f32 %v1177
  %v1210 = vcvt.s32.f32 %v1178
  %v1211 = vcvt.s32.f32 %v1179
  %v1212 = vcvt.s32.f32 %v1180
  %v1213 = vcvt.s32.f32 %v1181
  %v1214 = vcvt.s32.f32 %v1182
  %v1215 = vcvt.s32.f32 %v1183
  %v1216 = vcvt.s32.f32 %v1184
  %v1217 = vcvt.s32.f32 %v1185
  %v1218 = vcvt.s32.f32 %v1186
  %v1219 = vcvt.s32.f32 %v1187
  %v1220 = vcvt.s32.f32 %v1188
  %v1221 = vcvt.s32.f32 %v1189
  %v1222 = vld [vmem:[%s4] sm:$0x1f]
  %vm1223 = vcmask 39936
  %v1225 = vsel %vm1223, %v1190, 0
  %v1228 = vsel %vm1223, %v1191, 0
  %v1231 = vsel %vm1223, %v1192, 0
  %v1234 = vsel %vm1223, %v1193, 0
  %v1237 = vsel %vm1223, %v1194, 0
  %v1240 = vsel %vm1223, %v1195, 0
  %v1243 = vsel %vm1223, %v1196, 0
  %v1246 = vsel %vm1223, %v1197, 0
  %v1249 = vsel %vm1223, %v1198, 0
  %v1252 = vsel %vm1223, %v1199, 0
  %v1255 = vsel %vm1223, %v1200, 0
  %v1258 = vsel %vm1223, %v1201, 0
  %v1261 = vsel %vm1223, %v1202, 0
  %v1264 = vsel %vm1223, %v1203, 0
  %v1267 = vsel %vm1223, %v1204, 0
  %v1270 = vsel %vm1223, %v1205, 0
  %v1273 = vsel %vm1223, %v1206, 0
  %v1276 = vsel %vm1223, %v1207, 0
  %v1279 = vsel %vm1223, %v1208, 0
  %v1282 = vsel %vm1223, %v1209, 0
  %v1285 = vsel %vm1223, %v1210, 0
  %v1288 = vsel %vm1223, %v1211, 0
  %v1291 = vsel %vm1223, %v1212, 0
  %v1294 = vsel %vm1223, %v1213, 0
  %v1297 = vsel %vm1223, %v1214, 0
  %v1300 = vsel %vm1223, %v1215, 0
  %v1303 = vsel %vm1223, %v1216, 0
  %v1306 = vsel %vm1223, %v1217, 0
  %v1309 = vsel %vm1223, %v1218, 0
  %v1312 = vsel %vm1223, %v1219, 0
  %v1315 = vsel %vm1223, %v1220, 0
  %v1318 = vsel %vm1223, %v1221, 0
  %vm1320 = vcmask 1044480
  %v1322 = vsel %vm1320, %v1222, 0
  %1324 = vmatpush.msra.mxu0 0.0
  %1325 = vmatpush.msra.mxu0 0.0
  %1326 = vmatpush.msra.mxu0 0.0
  %1327 = vmatpush.msra.mxu0 0.0
  %1328 = vmatpush.msra.mxu0 0.0
  %1329 = vmatpush.msra.mxu0 0.0
  %1330 = vmatpush.msra.mxu0 0.0
  %1331 = vmatpush.msra.mxu0 0.0
  %1332 = vmatpush.msra.mxu0 0.0
  %1333 = vmatpush.msra.mxu0 0.0
  %1334 = vmatpush.msra.mxu0 0.0
  %1335 = vmatpush.msra.mxu0 0.0
  %1336 = vmatpush.msra.mxu0 0.0
  %1337 = vmatpush.msra.mxu0 0.0
  %1338 = vmatpush.msra.mxu0 0.0
  %v1339 = vand.u32 %v1322, 4294901760
  %1340 = vmatpush.msra.mxu0 %v1339
  %v1341 = vand.u32 %v1225, 4294901760
  %v1342 = vsub.f32 %v1225, %v1341
  %v1343 = vand.u32 %v1342, 4294901760
  %v1344 = vsub.f32 %v1342, %v1343
  %v1345 = vand.u32 %v1344, 4294901760
  %1346 = vmatmul.f32.gmra.mxu0 %v1345
  %v1347 = vpop.f32.mrf.mxu0
  %v1348 = vadd.f32 0.0, %v1347
  %v1349 = vand.u32 %v1228, 4294901760
  %v1350 = vsub.f32 %v1228, %v1349
  %v1351 = vand.u32 %v1350, 4294901760
  %v1352 = vsub.f32 %v1350, %v1351
  %v1353 = vand.u32 %v1352, 4294901760
  %1354 = vmatmul.f32.gmra.mxu0 %v1353
  %v1355 = vpop.f32.mrf.mxu0
  %v1356 = vadd.f32 0.0, %v1355
  %v1357 = vand.u32 %v1231, 4294901760
  %v1358 = vsub.f32 %v1231, %v1357
  %v1359 = vand.u32 %v1358, 4294901760
  %v1360 = vsub.f32 %v1358, %v1359
  %v1361 = vand.u32 %v1360, 4294901760
  %1362 = vmatmul.f32.gmra.mxu0 %v1361
  %v1363 = vpop.f32.mrf.mxu0
  %v1364 = vadd.f32 0.0, %v1363
  %v1365 = vand.u32 %v1234, 4294901760
  %v1366 = vsub.f32 %v1234, %v1365
  %v1367 = vand.u32 %v1366, 4294901760
  %v1368 = vsub.f32 %v1366, %v1367
  %v1369 = vand.u32 %v1368, 4294901760
  %1370 = vmatmul.f32.gmra.mxu0 %v1369
  %v1371 = vpop.f32.mrf.mxu0
  %v1372 = vadd.f32 0.0, %v1371
  %v1373 = vand.u32 %v1237, 4294901760
  %v1374 = vsub.f32 %v1237, %v1373
  %v1375 = vand.u32 %v1374, 4294901760
  %v1376 = vsub.f32 %v1374, %v1375
  %v1377 = vand.u32 %v1376, 4294901760
  %1378 = vmatmul.f32.gmra.mxu0 %v1377
  %v1379 = vpop.f32.mrf.mxu0
  %v1380 = vadd.f32 0.0, %v1379
  %v1381 = vand.u32 %v1240, 4294901760
  %v1382 = vsub.f32 %v1240, %v1381
  %v1383 = vand.u32 %v1382, 4294901760
  %v1384 = vsub.f32 %v1382, %v1383
  %v1385 = vand.u32 %v1384, 4294901760
  %1386 = vmatmul.f32.gmra.mxu0 %v1385
  %v1387 = vpop.f32.mrf.mxu0
  %v1388 = vadd.f32 0.0, %v1387
  %v1389 = vand.u32 %v1243, 4294901760
  %v1390 = vsub.f32 %v1243, %v1389
  %v1391 = vand.u32 %v1390, 4294901760
  %v1392 = vsub.f32 %v1390, %v1391
  %v1393 = vand.u32 %v1392, 4294901760
  %1394 = vmatmul.f32.gmra.mxu0 %v1393
  %v1395 = vpop.f32.mrf.mxu0
  %v1396 = vadd.f32 0.0, %v1395
  %v1397 = vand.u32 %v1246, 4294901760
  %v1398 = vsub.f32 %v1246, %v1397
  %v1399 = vand.u32 %v1398, 4294901760
  %v1400 = vsub.f32 %v1398, %v1399
  %v1401 = vand.u32 %v1400, 4294901760
  %1402 = vmatmul.f32.gmra.mxu0 %v1401
  %v1403 = vpop.f32.mrf.mxu0
  %v1404 = vadd.f32 0.0, %v1403
  %v1405 = vand.u32 %v1249, 4294901760
  %v1406 = vsub.f32 %v1249, %v1405
  %v1407 = vand.u32 %v1406, 4294901760
  %v1408 = vsub.f32 %v1406, %v1407
  %v1409 = vand.u32 %v1408, 4294901760
  %1410 = vmatmul.f32.gmra.mxu0 %v1409
  %v1411 = vpop.f32.mrf.mxu0
  %v1412 = vadd.f32 0.0, %v1411
  %v1413 = vand.u32 %v1252, 4294901760
  %v1414 = vsub.f32 %v1252, %v1413
  %v1415 = vand.u32 %v1414, 4294901760
  %v1416 = vsub.f32 %v1414, %v1415
  %v1417 = vand.u32 %v1416, 4294901760
  %1418 = vmatmul.f32.gmra.mxu0 %v1417
  %v1419 = vpop.f32.mrf.mxu0
  %v1420 = vadd.f32 0.0, %v1419
  %v1421 = vand.u32 %v1255, 4294901760
  %v1422 = vsub.f32 %v1255, %v1421
  %v1423 = vand.u32 %v1422, 4294901760
  %v1424 = vsub.f32 %v1422, %v1423
  %v1425 = vand.u32 %v1424, 4294901760
  %1426 = vmatmul.f32.gmra.mxu0 %v1425
  %v1427 = vpop.f32.mrf.mxu0
  %v1428 = vadd.f32 0.0, %v1427
  %v1429 = vand.u32 %v1258, 4294901760
  %v1430 = vsub.f32 %v1258, %v1429
  %v1431 = vand.u32 %v1430, 4294901760
  %v1432 = vsub.f32 %v1430, %v1431
  %v1433 = vand.u32 %v1432, 4294901760
  %1434 = vmatmul.f32.gmra.mxu0 %v1433
  %v1435 = vpop.f32.mrf.mxu0
  %v1436 = vadd.f32 0.0, %v1435
  %v1437 = vand.u32 %v1261, 4294901760
  %v1438 = vsub.f32 %v1261, %v1437
  %v1439 = vand.u32 %v1438, 4294901760
  %v1440 = vsub.f32 %v1438, %v1439
  %v1441 = vand.u32 %v1440, 4294901760
  %1442 = vmatmul.f32.gmra.mxu0 %v1441
  %v1443 = vpop.f32.mrf.mxu0
  %v1444 = vadd.f32 0.0, %v1443
  %v1445 = vand.u32 %v1264, 4294901760
  %v1446 = vsub.f32 %v1264, %v1445
  %v1447 = vand.u32 %v1446, 4294901760
  %v1448 = vsub.f32 %v1446, %v1447
  %v1449 = vand.u32 %v1448, 4294901760
  %1450 = vmatmul.f32.gmra.mxu0 %v1449
  %v1451 = vpop.f32.mrf.mxu0
  %v1452 = vadd.f32 0.0, %v1451
  %v1453 = vand.u32 %v1267, 4294901760
  %v1454 = vsub.f32 %v1267, %v1453
  %v1455 = vand.u32 %v1454, 4294901760
  %v1456 = vsub.f32 %v1454, %v1455
  %v1457 = vand.u32 %v1456, 4294901760
  %1458 = vmatmul.f32.gmra.mxu0 %v1457
  %v1459 = vpop.f32.mrf.mxu0
  %v1460 = vadd.f32 0.0, %v1459
  %v1461 = vand.u32 %v1270, 4294901760
  %v1462 = vsub.f32 %v1270, %v1461
  %v1463 = vand.u32 %v1462, 4294901760
  %v1464 = vsub.f32 %v1462, %v1463
  %v1465 = vand.u32 %v1464, 4294901760
  %1466 = vmatmul.f32.gmra.mxu0 %v1465
  %v1467 = vpop.f32.mrf.mxu0
  %v1468 = vadd.f32 0.0, %v1467
  %v1469 = vand.u32 %v1273, 4294901760
  %v1470 = vsub.f32 %v1273, %v1469
  %v1471 = vand.u32 %v1470, 4294901760
  %v1472 = vsub.f32 %v1470, %v1471
  %v1473 = vand.u32 %v1472, 4294901760
  %1474 = vmatmul.f32.gmra.mxu0 %v1473
  %v1475 = vpop.f32.mrf.mxu0
  %v1476 = vadd.f32 0.0, %v1475
  %v1477 = vand.u32 %v1276, 4294901760
  %v1478 = vsub.f32 %v1276, %v1477
  %v1479 = vand.u32 %v1478, 4294901760
  %v1480 = vsub.f32 %v1478, %v1479
  %v1481 = vand.u32 %v1480, 4294901760
  %1482 = vmatmul.f32.gmra.mxu0 %v1481
  %v1483 = vpop.f32.mrf.mxu0
  %v1484 = vadd.f32 0.0, %v1483
  %v1485 = vand.u32 %v1279, 4294901760
  %v1486 = vsub.f32 %v1279, %v1485
  %v1487 = vand.u32 %v1486, 4294901760
  %v1488 = vsub.f32 %v1486, %v1487
  %v1489 = vand.u32 %v1488, 4294901760
  %1490 = vmatmul.f32.gmra.mxu0 %v1489
  %v1491 = vpop.f32.mrf.mxu0
  %v1492 = vadd.f32 0.0, %v1491
  %v1493 = vand.u32 %v1282, 4294901760
  %v1494 = vsub.f32 %v1282, %v1493
  %v1495 = vand.u32 %v1494, 4294901760
  %v1496 = vsub.f32 %v1494, %v1495
  %v1497 = vand.u32 %v1496, 4294901760
  %1498 = vmatmul.f32.gmra.mxu0 %v1497
  %v1499 = vpop.f32.mrf.mxu0
  %v1500 = vadd.f32 0.0, %v1499
  %v1501 = vand.u32 %v1285, 4294901760
  %v1502 = vsub.f32 %v1285, %v1501
  %v1503 = vand.u32 %v1502, 4294901760
  %v1504 = vsub.f32 %v1502, %v1503
  %v1505 = vand.u32 %v1504, 4294901760
  %1506 = vmatmul.f32.gmra.mxu0 %v1505
  %v1507 = vpop.f32.mrf.mxu0
  %v1508 = vadd.f32 0.0, %v1507
  %v1509 = vand.u32 %v1288, 4294901760
  %v1510 = vsub.f32 %v1288, %v1509
  %v1511 = vand.u32 %v1510, 4294901760
  %v1512 = vsub.f32 %v1510, %v1511
  %v1513 = vand.u32 %v1512, 4294901760
  %1514 = vmatmul.f32.gmra.mxu0 %v1513
  %v1515 = vpop.f32.mrf.mxu0
  %v1516 = vadd.f32 0.0, %v1515
  %v1517 = vand.u32 %v1291, 4294901760
  %v1518 = vsub.f32 %v1291, %v1517
  %v1519 = vand.u32 %v1518, 4294901760
  %v1520 = vsub.f32 %v1518, %v1519
  %v1521 = vand.u32 %v1520, 4294901760
  %1522 = vmatmul.f32.gmra.mxu0 %v1521
  %v1523 = vpop.f32.mrf.mxu0
  %v1524 = vadd.f32 0.0, %v1523
  %v1525 = vand.u32 %v1294, 4294901760
  %v1526 = vsub.f32 %v1294, %v1525
  %v1527 = vand.u32 %v1526, 4294901760
  %v1528 = vsub.f32 %v1526, %v1527
  %v1529 = vand.u32 %v1528, 4294901760
  %1530 = vmatmul.f32.gmra.mxu0 %v1529
  %v1531 = vpop.f32.mrf.mxu0
  %v1532 = vadd.f32 0.0, %v1531
  %v1533 = vand.u32 %v1297, 4294901760
  %v1534 = vsub.f32 %v1297, %v1533
  %v1535 = vand.u32 %v1534, 4294901760
  %v1536 = vsub.f32 %v1534, %v1535
  %v1537 = vand.u32 %v1536, 4294901760
  %1538 = vmatmul.f32.gmra.mxu0 %v1537
  %v1539 = vpop.f32.mrf.mxu0
  %v1540 = vadd.f32 0.0, %v1539
  %v1541 = vand.u32 %v1300, 4294901760
  %v1542 = vsub.f32 %v1300, %v1541
  %v1543 = vand.u32 %v1542, 4294901760
  %v1544 = vsub.f32 %v1542, %v1543
  %v1545 = vand.u32 %v1544, 4294901760
  %1546 = vmatmul.f32.gmra.mxu0 %v1545
  %v1547 = vpop.f32.mrf.mxu0
  %v1548 = vadd.f32 0.0, %v1547
  %v1549 = vand.u32 %v1303, 4294901760
  %v1550 = vsub.f32 %v1303, %v1549
  %v1551 = vand.u32 %v1550, 4294901760
  %v1552 = vsub.f32 %v1550, %v1551
  %v1553 = vand.u32 %v1552, 4294901760
  %1554 = vmatmul.f32.gmra.mxu0 %v1553
  %v1555 = vpop.f32.mrf.mxu0
  %v1556 = vadd.f32 0.0, %v1555
  %v1557 = vand.u32 %v1306, 4294901760
  %v1558 = vsub.f32 %v1306, %v1557
  %v1559 = vand.u32 %v1558, 4294901760
  %v1560 = vsub.f32 %v1558, %v1559
  %v1561 = vand.u32 %v1560, 4294901760
  %1562 = vmatmul.f32.gmra.mxu0 %v1561
  %v1563 = vpop.f32.mrf.mxu0
  %v1564 = vadd.f32 0.0, %v1563
  %v1565 = vand.u32 %v1309, 4294901760
  %v1566 = vsub.f32 %v1309, %v1565
  %v1567 = vand.u32 %v1566, 4294901760
  %v1568 = vsub.f32 %v1566, %v1567
  %v1569 = vand.u32 %v1568, 4294901760
  %1570 = vmatmul.f32.gmra.mxu0 %v1569
  %v1571 = vpop.f32.mrf.mxu0
  %v1572 = vadd.f32 0.0, %v1571
  %v1573 = vand.u32 %v1312, 4294901760
  %v1574 = vsub.f32 %v1312, %v1573
  %v1575 = vand.u32 %v1574, 4294901760
  %v1576 = vsub.f32 %v1574, %v1575
  %v1577 = vand.u32 %v1576, 4294901760
  %1578 = vmatmul.f32.gmra.mxu0 %v1577
  %v1579 = vpop.f32.mrf.mxu0
  %v1580 = vadd.f32 0.0, %v1579
  %v1581 = vand.u32 %v1315, 4294901760
  %v1582 = vsub.f32 %v1315, %v1581
  %v1583 = vand.u32 %v1582, 4294901760
  %v1584 = vsub.f32 %v1582, %v1583
  %v1585 = vand.u32 %v1584, 4294901760
  %1586 = vmatmul.f32.gmra.mxu0 %v1585
  %v1587 = vpop.f32.mrf.mxu0
  %v1588 = vadd.f32 0.0, %v1587
  %v1589 = vand.u32 %v1318, 4294901760
  %v1590 = vsub.f32 %v1318, %v1589
  %v1591 = vand.u32 %v1590, 4294901760
  %v1592 = vsub.f32 %v1590, %v1591
  %v1593 = vand.u32 %v1592, 4294901760
  %1594 = vmatmul.f32.gmra.mxu0 %v1593
  %v1595 = vpop.f32.mrf.mxu0
  %v1596 = vadd.f32 0.0, %v1595
  %1597 = vdwg.mxu0
  %1598 = vmatpush.msra.mxu0 0.0
  %1599 = vmatpush.msra.mxu0 0.0
  %1600 = vmatpush.msra.mxu0 0.0
  %1601 = vmatpush.msra.mxu0 0.0
  %1602 = vmatpush.msra.mxu0 0.0
  %1603 = vmatpush.msra.mxu0 0.0
  %1604 = vmatpush.msra.mxu0 0.0
  %1605 = vmatpush.msra.mxu0 0.0
  %1606 = vmatpush.msra.mxu0 0.0
  %1607 = vmatpush.msra.mxu0 0.0
  %1608 = vmatpush.msra.mxu0 0.0
  %1609 = vmatpush.msra.mxu0 0.0
  %1610 = vmatpush.msra.mxu0 0.0
  %1611 = vmatpush.msra.mxu0 0.0
  %1612 = vmatpush.msra.mxu0 0.0
  %v1613 = vand.u32 %v1322, 4294901760
  %v1614 = vsub.f32 %v1322, %v1613
  %v1615 = vand.u32 %v1614, 4294901760
  %v1616 = vsub.f32 %v1614, %v1615
  %v1617 = vand.u32 %v1616, 4294901760
  %1618 = vmatpush.msra.mxu0 %v1617
  %v1619 = vand.u32 %v1225, 4294901760
  %1620 = vmatmul.f32.gmra.mxu0 %v1619
  %v1621 = vpop.f32.mrf.mxu0
  %v1622 = vadd.f32 %v1348, %v1621
  %v1623 = vand.u32 %v1228, 4294901760
  %1624 = vmatmul.f32.gmra.mxu0 %v1623
  %v1625 = vpop.f32.mrf.mxu0
  %v1626 = vadd.f32 %v1356, %v1625
  %v1627 = vand.u32 %v1231, 4294901760
  %1628 = vmatmul.f32.gmra.mxu0 %v1627
  %v1629 = vpop.f32.mrf.mxu0
  %v1630 = vadd.f32 %v1364, %v1629
  %v1631 = vand.u32 %v1234, 4294901760
  %1632 = vmatmul.f32.gmra.mxu0 %v1631
  %v1633 = vpop.f32.mrf.mxu0
  %v1634 = vadd.f32 %v1372, %v1633
  %v1635 = vand.u32 %v1237, 4294901760
  %1636 = vmatmul.f32.gmra.mxu0 %v1635
  %v1637 = vpop.f32.mrf.mxu0
  %v1638 = vadd.f32 %v1380, %v1637
  %v1639 = vand.u32 %v1240, 4294901760
  %1640 = vmatmul.f32.gmra.mxu0 %v1639
  %v1641 = vpop.f32.mrf.mxu0
  %v1642 = vadd.f32 %v1388, %v1641
  %v1643 = vand.u32 %v1243, 4294901760
  %1644 = vmatmul.f32.gmra.mxu0 %v1643
  %v1645 = vpop.f32.mrf.mxu0
  %v1646 = vadd.f32 %v1396, %v1645
  %v1647 = vand.u32 %v1246, 4294901760
  %1648 = vmatmul.f32.gmra.mxu0 %v1647
  %v1649 = vpop.f32.mrf.mxu0
  %v1650 = vadd.f32 %v1404, %v1649
  %v1651 = vand.u32 %v1249, 4294901760
  %1652 = vmatmul.f32.gmra.mxu0 %v1651
  %v1653 = vpop.f32.mrf.mxu0
  %v1654 = vadd.f32 %v1412, %v1653
  %v1655 = vand.u32 %v1252, 4294901760
  %1656 = vmatmul.f32.gmra.mxu0 %v1655
  %v1657 = vpop.f32.mrf.mxu0
  %v1658 = vadd.f32 %v1420, %v1657
  %v1659 = vand.u32 %v1255, 4294901760
  %1660 = vmatmul.f32.gmra.mxu0 %v1659
  %v1661 = vpop.f32.mrf.mxu0
  %v1662 = vadd.f32 %v1428, %v1661
  %v1663 = vand.u32 %v1258, 4294901760
  %1664 = vmatmul.f32.gmra.mxu0 %v1663
  %v1665 = vpop.f32.mrf.mxu0
  %v1666 = vadd.f32 %v1436, %v1665
  %v1667 = vand.u32 %v1261, 4294901760
  %1668 = vmatmul.f32.gmra.mxu0 %v1667
  %v1669 = vpop.f32.mrf.mxu0
  %v1670 = vadd.f32 %v1444, %v1669
  %v1671 = vand.u32 %v1264, 4294901760
  %1672 = vmatmul.f32.gmra.mxu0 %v1671
  %v1673 = vpop.f32.mrf.mxu0
  %v1674 = vadd.f32 %v1452, %v1673
  %v1675 = vand.u32 %v1267, 4294901760
  %1676 = vmatmul.f32.gmra.mxu0 %v1675
  %v1677 = vpop.f32.mrf.mxu0
  %v1678 = vadd.f32 %v1460, %v1677
  %v1679 = vand.u32 %v1270, 4294901760
  %1680 = vmatmul.f32.gmra.mxu0 %v1679
  %v1681 = vpop.f32.mrf.mxu0
  %v1682 = vadd.f32 %v1468, %v1681
  %v1683 = vand.u32 %v1273, 4294901760
  %1684 = vmatmul.f32.gmra.mxu0 %v1683
  %v1685 = vpop.f32.mrf.mxu0
  %v1686 = vadd.f32 %v1476, %v1685
  %v1687 = vand.u32 %v1276, 4294901760
  %1688 = vmatmul.f32.gmra.mxu0 %v1687
  %v1689 = vpop.f32.mrf.mxu0
  %v1690 = vadd.f32 %v1484, %v1689
  %v1691 = vand.u32 %v1279, 4294901760
  %1692 = vmatmul.f32.gmra.mxu0 %v1691
  %v1693 = vpop.f32.mrf.mxu0
  %v1694 = vadd.f32 %v1492, %v1693
  %v1695 = vand.u32 %v1282, 4294901760
  %1696 = vmatmul.f32.gmra.mxu0 %v1695
  %v1697 = vpop.f32.mrf.mxu0
  %v1698 = vadd.f32 %v1500, %v1697
  %v1699 = vand.u32 %v1285, 4294901760
  %1700 = vmatmul.f32.gmra.mxu0 %v1699
  %v1701 = vpop.f32.mrf.mxu0
  %v1702 = vadd.f32 %v1508, %v1701
  %v1703 = vand.u32 %v1288, 4294901760
  %1704 = vmatmul.f32.gmra.mxu0 %v1703
  %v1705 = vpop.f32.mrf.mxu0
  %v1706 = vadd.f32 %v1516, %v1705
  %v1707 = vand.u32 %v1291, 4294901760
  %1708 = vmatmul.f32.gmra.mxu0 %v1707
  %v1709 = vpop.f32.mrf.mxu0
  %v1710 = vadd.f32 %v1524, %v1709
  %v1711 = vand.u32 %v1294, 4294901760
  %1712 = vmatmul.f32.gmra.mxu0 %v1711
  %v1713 = vpop.f32.mrf.mxu0
  %v1714 = vadd.f32 %v1532, %v1713
  %v1715 = vand.u32 %v1297, 4294901760
  %1716 = vmatmul.f32.gmra.mxu0 %v1715
  %v1717 = vpop.f32.mrf.mxu0
  %v1718 = vadd.f32 %v1540, %v1717
  %v1719 = vand.u32 %v1300, 4294901760
  %1720 = vmatmul.f32.gmra.mxu0 %v1719
  %v1721 = vpop.f32.mrf.mxu0
  %v1722 = vadd.f32 %v1548, %v1721
  %v1723 = vand.u32 %v1303, 4294901760
  %1724 = vmatmul.f32.gmra.mxu0 %v1723
  %v1725 = vpop.f32.mrf.mxu0
  %v1726 = vadd.f32 %v1556, %v1725
  %v1727 = vand.u32 %v1306, 4294901760
  %1728 = vmatmul.f32.gmra.mxu0 %v1727
  %v1729 = vpop.f32.mrf.mxu0
  %v1730 = vadd.f32 %v1564, %v1729
  %v1731 = vand.u32 %v1309, 4294901760
  %1732 = vmatmul.f32.gmra.mxu0 %v1731
  %v1733 = vpop.f32.mrf.mxu0
  %v1734 = vadd.f32 %v1572, %v1733
  %v1735 = vand.u32 %v1312, 4294901760
  %1736 = vmatmul.f32.gmra.mxu0 %v1735
  %v1737 = vpop.f32.mrf.mxu0
  %v1738 = vadd.f32 %v1580, %v1737
  %v1739 = vand.u32 %v1315, 4294901760
  %1740 = vmatmul.f32.gmra.mxu0 %v1739
  %v1741 = vpop.f32.mrf.mxu0
  %v1742 = vadd.f32 %v1588, %v1741
  %v1743 = vand.u32 %v1318, 4294901760
  %1744 = vmatmul.f32.gmra.mxu0 %v1743
  %v1745 = vpop.f32.mrf.mxu0
  %v1746 = vadd.f32 %v1596, %v1745
  %1747 = vdwg.mxu0
  %1748 = vmatpush.msra.mxu0 0.0
  %1749 = vmatpush.msra.mxu0 0.0
  %1750 = vmatpush.msra.mxu0 0.0
  %1751 = vmatpush.msra.mxu0 0.0
  %1752 = vmatpush.msra.mxu0 0.0
  %1753 = vmatpush.msra.mxu0 0.0
  %1754 = vmatpush.msra.mxu0 0.0
  %1755 = vmatpush.msra.mxu0 0.0
  %1756 = vmatpush.msra.mxu0 0.0
  %1757 = vmatpush.msra.mxu0 0.0
  %1758 = vmatpush.msra.mxu0 0.0
  %1759 = vmatpush.msra.mxu0 0.0
  %1760 = vmatpush.msra.mxu0 0.0
  %1761 = vmatpush.msra.mxu0 0.0
  %1762 = vmatpush.msra.mxu0 0.0
  %v1763 = vand.u32 %v1322, 4294901760
  %v1764 = vsub.f32 %v1322, %v1763
  %1765 = vmatpush.msra.mxu0 %v1764
  %v1766 = vand.u32 %v1225, 4294901760
  %v1767 = vsub.f32 %v1225, %v1766
  %1768 = vmatmul.f32.gmra.mxu0 %v1767
  %v1769 = vpop.f32.mrf.mxu0
  %v1770 = vadd.f32 %v1622, %v1769
  %v1771 = vand.u32 %v1228, 4294901760
  %v1772 = vsub.f32 %v1228, %v1771
  %1773 = vmatmul.f32.gmra.mxu0 %v1772
  %v1774 = vpop.f32.mrf.mxu0
  %v1775 = vadd.f32 %v1626, %v1774
  %v1776 = vand.u32 %v1231, 4294901760
  %v1777 = vsub.f32 %v1231, %v1776
  %1778 = vmatmul.f32.gmra.mxu0 %v1777
  %v1779 = vpop.f32.mrf.mxu0
  %v1780 = vadd.f32 %v1630, %v1779
  %v1781 = vand.u32 %v1234, 4294901760
  %v1782 = vsub.f32 %v1234, %v1781
  %1783 = vmatmul.f32.gmra.mxu0 %v1782
  %v1784 = vpop.f32.mrf.mxu0
  %v1785 = vadd.f32 %v1634, %v1784
  %v1786 = vand.u32 %v1237, 4294901760
  %v1787 = vsub.f32 %v1237, %v1786
  %1788 = vmatmul.f32.gmra.mxu0 %v1787
  %v1789 = vpop.f32.mrf.mxu0
  %v1790 = vadd.f32 %v1638, %v1789
  %v1791 = vand.u32 %v1240, 4294901760
  %v1792 = vsub.f32 %v1240, %v1791
  %1793 = vmatmul.f32.gmra.mxu0 %v1792
  %v1794 = vpop.f32.mrf.mxu0
  %v1795 = vadd.f32 %v1642, %v1794
  %v1796 = vand.u32 %v1243, 4294901760
  %v1797 = vsub.f32 %v1243, %v1796
  %1798 = vmatmul.f32.gmra.mxu0 %v1797
  %v1799 = vpop.f32.mrf.mxu0
  %v1800 = vadd.f32 %v1646, %v1799
  %v1801 = vand.u32 %v1246, 4294901760
  %v1802 = vsub.f32 %v1246, %v1801
  %1803 = vmatmul.f32.gmra.mxu0 %v1802
  %v1804 = vpop.f32.mrf.mxu0
  %v1805 = vadd.f32 %v1650, %v1804
  %v1806 = vand.u32 %v1249, 4294901760
  %v1807 = vsub.f32 %v1249, %v1806
  %1808 = vmatmul.f32.gmra.mxu0 %v1807
  %v1809 = vpop.f32.mrf.mxu0
  %v1810 = vadd.f32 %v1654, %v1809
  %v1811 = vand.u32 %v1252, 4294901760
  %v1812 = vsub.f32 %v1252, %v1811
  %1813 = vmatmul.f32.gmra.mxu0 %v1812
  %v1814 = vpop.f32.mrf.mxu0
  %v1815 = vadd.f32 %v1658, %v1814
  %v1816 = vand.u32 %v1255, 4294901760
  %v1817 = vsub.f32 %v1255, %v1816
  %1818 = vmatmul.f32.gmra.mxu0 %v1817
  %v1819 = vpop.f32.mrf.mxu0
  %v1820 = vadd.f32 %v1662, %v1819
  %v1821 = vand.u32 %v1258, 4294901760
  %v1822 = vsub.f32 %v1258, %v1821
  %1823 = vmatmul.f32.gmra.mxu0 %v1822
  %v1824 = vpop.f32.mrf.mxu0
  %v1825 = vadd.f32 %v1666, %v1824
  %v1826 = vand.u32 %v1261, 4294901760
  %v1827 = vsub.f32 %v1261, %v1826
  %1828 = vmatmul.f32.gmra.mxu0 %v1827
  %v1829 = vpop.f32.mrf.mxu0
  %v1830 = vadd.f32 %v1670, %v1829
  %v1831 = vand.u32 %v1264, 4294901760
  %v1832 = vsub.f32 %v1264, %v1831
  %1833 = vmatmul.f32.gmra.mxu0 %v1832
  %v1834 = vpop.f32.mrf.mxu0
  %v1835 = vadd.f32 %v1674, %v1834
  %v1836 = vand.u32 %v1267, 4294901760
  %v1837 = vsub.f32 %v1267, %v1836
  %1838 = vmatmul.f32.gmra.mxu0 %v1837
  %v1839 = vpop.f32.mrf.mxu0
  %v1840 = vadd.f32 %v1678, %v1839
  %v1841 = vand.u32 %v1270, 4294901760
  %v1842 = vsub.f32 %v1270, %v1841
  %1843 = vmatmul.f32.gmra.mxu0 %v1842
  %v1844 = vpop.f32.mrf.mxu0
  %v1845 = vadd.f32 %v1682, %v1844
  %v1846 = vand.u32 %v1273, 4294901760
  %v1847 = vsub.f32 %v1273, %v1846
  %1848 = vmatmul.f32.gmra.mxu0 %v1847
  %v1849 = vpop.f32.mrf.mxu0
  %v1850 = vadd.f32 %v1686, %v1849
  %v1851 = vand.u32 %v1276, 4294901760
  %v1852 = vsub.f32 %v1276, %v1851
  %1853 = vmatmul.f32.gmra.mxu0 %v1852
  %v1854 = vpop.f32.mrf.mxu0
  %v1855 = vadd.f32 %v1690, %v1854
  %v1856 = vand.u32 %v1279, 4294901760
  %v1857 = vsub.f32 %v1279, %v1856
  %1858 = vmatmul.f32.gmra.mxu0 %v1857
  %v1859 = vpop.f32.mrf.mxu0
  %v1860 = vadd.f32 %v1694, %v1859
  %v1861 = vand.u32 %v1282, 4294901760
  %v1862 = vsub.f32 %v1282, %v1861
  %1863 = vmatmul.f32.gmra.mxu0 %v1862
  %v1864 = vpop.f32.mrf.mxu0
  %v1865 = vadd.f32 %v1698, %v1864
  %v1866 = vand.u32 %v1285, 4294901760
  %v1867 = vsub.f32 %v1285, %v1866
  %1868 = vmatmul.f32.gmra.mxu0 %v1867
  %v1869 = vpop.f32.mrf.mxu0
  %v1870 = vadd.f32 %v1702, %v1869
  %v1871 = vand.u32 %v1288, 4294901760
  %v1872 = vsub.f32 %v1288, %v1871
  %1873 = vmatmul.f32.gmra.mxu0 %v1872
  %v1874 = vpop.f32.mrf.mxu0
  %v1875 = vadd.f32 %v1706, %v1874
  %v1876 = vand.u32 %v1291, 4294901760
  %v1877 = vsub.f32 %v1291, %v1876
  %1878 = vmatmul.f32.gmra.mxu0 %v1877
  %v1879 = vpop.f32.mrf.mxu0
  %v1880 = vadd.f32 %v1710, %v1879
  %v1881 = vand.u32 %v1294, 4294901760
  %v1882 = vsub.f32 %v1294, %v1881
  %1883 = vmatmul.f32.gmra.mxu0 %v1882
  %v1884 = vpop.f32.mrf.mxu0
  %v1885 = vadd.f32 %v1714, %v1884
  %v1886 = vand.u32 %v1297, 4294901760
  %v1887 = vsub.f32 %v1297, %v1886
  %1888 = vmatmul.f32.gmra.mxu0 %v1887
  %v1889 = vpop.f32.mrf.mxu0
  %v1890 = vadd.f32 %v1718, %v1889
  %v1891 = vand.u32 %v1300, 4294901760
  %v1892 = vsub.f32 %v1300, %v1891
  %1893 = vmatmul.f32.gmra.mxu0 %v1892
  %v1894 = vpop.f32.mrf.mxu0
  %v1895 = vadd.f32 %v1722, %v1894
  %v1896 = vand.u32 %v1303, 4294901760
  %v1897 = vsub.f32 %v1303, %v1896
  %1898 = vmatmul.f32.gmra.mxu0 %v1897
  %v1899 = vpop.f32.mrf.mxu0
  %v1900 = vadd.f32 %v1726, %v1899
  %v1901 = vand.u32 %v1306, 4294901760
  %v1902 = vsub.f32 %v1306, %v1901
  %1903 = vmatmul.f32.gmra.mxu0 %v1902
  %v1904 = vpop.f32.mrf.mxu0
  %v1905 = vadd.f32 %v1730, %v1904
  %v1906 = vand.u32 %v1309, 4294901760
  %v1907 = vsub.f32 %v1309, %v1906
  %1908 = vmatmul.f32.gmra.mxu0 %v1907
  %v1909 = vpop.f32.mrf.mxu0
  %v1910 = vadd.f32 %v1734, %v1909
  %v1911 = vand.u32 %v1312, 4294901760
  %v1912 = vsub.f32 %v1312, %v1911
  %1913 = vmatmul.f32.gmra.mxu0 %v1912
  %v1914 = vpop.f32.mrf.mxu0
  %v1915 = vadd.f32 %v1738, %v1914
  %v1916 = vand.u32 %v1315, 4294901760
  %v1917 = vsub.f32 %v1315, %v1916
  %1918 = vmatmul.f32.gmra.mxu0 %v1917
  %v1919 = vpop.f32.mrf.mxu0
  %v1920 = vadd.f32 %v1742, %v1919
  %v1921 = vand.u32 %v1318, 4294901760
  %v1922 = vsub.f32 %v1318, %v1921
  %1923 = vmatmul.f32.gmra.mxu0 %v1922
  %v1924 = vpop.f32.mrf.mxu0
  %v1925 = vadd.f32 %v1746, %v1924
  %1926 = vdwg.mxu0
  %1927 = vmatpush.msra.mxu0 0.0
  %1928 = vmatpush.msra.mxu0 0.0
  %1929 = vmatpush.msra.mxu0 0.0
  %1930 = vmatpush.msra.mxu0 0.0
  %1931 = vmatpush.msra.mxu0 0.0
  %1932 = vmatpush.msra.mxu0 0.0
  %1933 = vmatpush.msra.mxu0 0.0
  %1934 = vmatpush.msra.mxu0 0.0
  %1935 = vmatpush.msra.mxu0 0.0
  %1936 = vmatpush.msra.mxu0 0.0
  %1937 = vmatpush.msra.mxu0 0.0
  %1938 = vmatpush.msra.mxu0 0.0
  %1939 = vmatpush.msra.mxu0 0.0
  %1940 = vmatpush.msra.mxu0 0.0
  %1941 = vmatpush.msra.mxu0 0.0
  %v1942 = vand.u32 %v1322, 4294901760
  %1943 = vmatpush.msra.mxu0 %v1942
  %v1944 = vand.u32 %v1225, 4294901760
  %v1945 = vsub.f32 %v1225, %v1944
  %v1946 = vand.u32 %v1945, 4294901760
  %1947 = vmatmul.f32.gmra.mxu0 %v1946
  %v1948 = vpop.f32.mrf.mxu0
  %v1949 = vadd.f32 %v1770, %v1948
  %v1950 = vand.u32 %v1228, 4294901760
  %v1951 = vsub.f32 %v1228, %v1950
  %v1952 = vand.u32 %v1951, 4294901760
  %1953 = vmatmul.f32.gmra.mxu0 %v1952
  %v1954 = vpop.f32.mrf.mxu0
  %v1955 = vadd.f32 %v1775, %v1954
  %v1956 = vand.u32 %v1231, 4294901760
  %v1957 = vsub.f32 %v1231, %v1956
  %v1958 = vand.u32 %v1957, 4294901760
  %1959 = vmatmul.f32.gmra.mxu0 %v1958
  %v1960 = vpop.f32.mrf.mxu0
  %v1961 = vadd.f32 %v1780, %v1960
  %v1962 = vand.u32 %v1234, 4294901760
  %v1963 = vsub.f32 %v1234, %v1962
  %v1964 = vand.u32 %v1963, 4294901760
  %1965 = vmatmul.f32.gmra.mxu0 %v1964
  %v1966 = vpop.f32.mrf.mxu0
  %v1967 = vadd.f32 %v1785, %v1966
  %v1968 = vand.u32 %v1237, 4294901760
  %v1969 = vsub.f32 %v1237, %v1968
  %v1970 = vand.u32 %v1969, 4294901760
  %1971 = vmatmul.f32.gmra.mxu0 %v1970
  %v1972 = vpop.f32.mrf.mxu0
  %v1973 = vadd.f32 %v1790, %v1972
  %v1974 = vand.u32 %v1240, 4294901760
  %v1975 = vsub.f32 %v1240, %v1974
  %v1976 = vand.u32 %v1975, 4294901760
  %1977 = vmatmul.f32.gmra.mxu0 %v1976
  %v1978 = vpop.f32.mrf.mxu0
  %v1979 = vadd.f32 %v1795, %v1978
  %v1980 = vand.u32 %v1243, 4294901760
  %v1981 = vsub.f32 %v1243, %v1980
  %v1982 = vand.u32 %v1981, 4294901760
  %1983 = vmatmul.f32.gmra.mxu0 %v1982
  %v1984 = vpop.f32.mrf.mxu0
  %v1985 = vadd.f32 %v1800, %v1984
  %v1986 = vand.u32 %v1246, 4294901760
  %v1987 = vsub.f32 %v1246, %v1986
  %v1988 = vand.u32 %v1987, 4294901760
  %1989 = vmatmul.f32.gmra.mxu0 %v1988
  %v1990 = vpop.f32.mrf.mxu0
  %v1991 = vadd.f32 %v1805, %v1990
  %v1992 = vand.u32 %v1249, 4294901760
  %v1993 = vsub.f32 %v1249, %v1992
  %v1994 = vand.u32 %v1993, 4294901760
  %1995 = vmatmul.f32.gmra.mxu0 %v1994
  %v1996 = vpop.f32.mrf.mxu0
  %v1997 = vadd.f32 %v1810, %v1996
  %v1998 = vand.u32 %v1252, 4294901760
  %v1999 = vsub.f32 %v1252, %v1998
  %v2000 = vand.u32 %v1999, 4294901760
  %2001 = vmatmul.f32.gmra.mxu0 %v2000
  %v2002 = vpop.f32.mrf.mxu0
  %v2003 = vadd.f32 %v1815, %v2002
  %v2004 = vand.u32 %v1255, 4294901760
  %v2005 = vsub.f32 %v1255, %v2004
  %v2006 = vand.u32 %v2005, 4294901760
  %2007 = vmatmul.f32.gmra.mxu0 %v2006
  %v2008 = vpop.f32.mrf.mxu0
  %v2009 = vadd.f32 %v1820, %v2008
  %v2010 = vand.u32 %v1258, 4294901760
  %v2011 = vsub.f32 %v1258, %v2010
  %v2012 = vand.u32 %v2011, 4294901760
  %2013 = vmatmul.f32.gmra.mxu0 %v2012
  %v2014 = vpop.f32.mrf.mxu0
  %v2015 = vadd.f32 %v1825, %v2014
  %v2016 = vand.u32 %v1261, 4294901760
  %v2017 = vsub.f32 %v1261, %v2016
  %v2018 = vand.u32 %v2017, 4294901760
  %2019 = vmatmul.f32.gmra.mxu0 %v2018
  %v2020 = vpop.f32.mrf.mxu0
  %v2021 = vadd.f32 %v1830, %v2020
  %v2022 = vand.u32 %v1264, 4294901760
  %v2023 = vsub.f32 %v1264, %v2022
  %v2024 = vand.u32 %v2023, 4294901760
  %2025 = vmatmul.f32.gmra.mxu0 %v2024
  %v2026 = vpop.f32.mrf.mxu0
  %v2027 = vadd.f32 %v1835, %v2026
  %v2028 = vand.u32 %v1267, 4294901760
  %v2029 = vsub.f32 %v1267, %v2028
  %v2030 = vand.u32 %v2029, 4294901760
  %2031 = vmatmul.f32.gmra.mxu0 %v2030
  %v2032 = vpop.f32.mrf.mxu0
  %v2033 = vadd.f32 %v1840, %v2032
  %v2034 = vand.u32 %v1270, 4294901760
  %v2035 = vsub.f32 %v1270, %v2034
  %v2036 = vand.u32 %v2035, 4294901760
  %2037 = vmatmul.f32.gmra.mxu0 %v2036
  %v2038 = vpop.f32.mrf.mxu0
  %v2039 = vadd.f32 %v1845, %v2038
  %v2040 = vand.u32 %v1273, 4294901760
  %v2041 = vsub.f32 %v1273, %v2040
  %v2042 = vand.u32 %v2041, 4294901760
  %2043 = vmatmul.f32.gmra.mxu0 %v2042
  %v2044 = vpop.f32.mrf.mxu0
  %v2045 = vadd.f32 %v1850, %v2044
  %v2046 = vand.u32 %v1276, 4294901760
  %v2047 = vsub.f32 %v1276, %v2046
  %v2048 = vand.u32 %v2047, 4294901760
  %2049 = vmatmul.f32.gmra.mxu0 %v2048
  %v2050 = vpop.f32.mrf.mxu0
  %v2051 = vadd.f32 %v1855, %v2050
  %v2052 = vand.u32 %v1279, 4294901760
  %v2053 = vsub.f32 %v1279, %v2052
  %v2054 = vand.u32 %v2053, 4294901760
  %2055 = vmatmul.f32.gmra.mxu0 %v2054
  %v2056 = vpop.f32.mrf.mxu0
  %v2057 = vadd.f32 %v1860, %v2056
  %v2058 = vand.u32 %v1282, 4294901760
  %v2059 = vsub.f32 %v1282, %v2058
  %v2060 = vand.u32 %v2059, 4294901760
  %2061 = vmatmul.f32.gmra.mxu0 %v2060
  %v2062 = vpop.f32.mrf.mxu0
  %v2063 = vadd.f32 %v1865, %v2062
  %v2064 = vand.u32 %v1285, 4294901760
  %v2065 = vsub.f32 %v1285, %v2064
  %v2066 = vand.u32 %v2065, 4294901760
  %2067 = vmatmul.f32.gmra.mxu0 %v2066
  %v2068 = vpop.f32.mrf.mxu0
  %v2069 = vadd.f32 %v1870, %v2068
  %v2070 = vand.u32 %v1288, 4294901760
  %v2071 = vsub.f32 %v1288, %v2070
  %v2072 = vand.u32 %v2071, 4294901760
  %2073 = vmatmul.f32.gmra.mxu0 %v2072
  %v2074 = vpop.f32.mrf.mxu0
  %v2075 = vadd.f32 %v1875, %v2074
  %v2076 = vand.u32 %v1291, 4294901760
  %v2077 = vsub.f32 %v1291, %v2076
  %v2078 = vand.u32 %v2077, 4294901760
  %2079 = vmatmul.f32.gmra.mxu0 %v2078
  %v2080 = vpop.f32.mrf.mxu0
  %v2081 = vadd.f32 %v1880, %v2080
  %v2082 = vand.u32 %v1294, 4294901760
  %v2083 = vsub.f32 %v1294, %v2082
  %v2084 = vand.u32 %v2083, 4294901760
  %2085 = vmatmul.f32.gmra.mxu0 %v2084
  %v2086 = vpop.f32.mrf.mxu0
  %v2087 = vadd.f32 %v1885, %v2086
  %v2088 = vand.u32 %v1297, 4294901760
  %v2089 = vsub.f32 %v1297, %v2088
  %v2090 = vand.u32 %v2089, 4294901760
  %2091 = vmatmul.f32.gmra.mxu0 %v2090
  %v2092 = vpop.f32.mrf.mxu0
  %v2093 = vadd.f32 %v1890, %v2092
  %v2094 = vand.u32 %v1300, 4294901760
  %v2095 = vsub.f32 %v1300, %v2094
  %v2096 = vand.u32 %v2095, 4294901760
  %2097 = vmatmul.f32.gmra.mxu0 %v2096
  %v2098 = vpop.f32.mrf.mxu0
  %v2099 = vadd.f32 %v1895, %v2098
  %v2100 = vand.u32 %v1303, 4294901760
  %v2101 = vsub.f32 %v1303, %v2100
  %v2102 = vand.u32 %v2101, 4294901760
  %2103 = vmatmul.f32.gmra.mxu0 %v2102
  %v2104 = vpop.f32.mrf.mxu0
  %v2105 = vadd.f32 %v1900, %v2104
  %v2106 = vand.u32 %v1306, 4294901760
  %v2107 = vsub.f32 %v1306, %v2106
  %v2108 = vand.u32 %v2107, 4294901760
  %2109 = vmatmul.f32.gmra.mxu0 %v2108
  %v2110 = vpop.f32.mrf.mxu0
  %v2111 = vadd.f32 %v1905, %v2110
  %v2112 = vand.u32 %v1309, 4294901760
  %v2113 = vsub.f32 %v1309, %v2112
  %v2114 = vand.u32 %v2113, 4294901760
  %2115 = vmatmul.f32.gmra.mxu0 %v2114
  %v2116 = vpop.f32.mrf.mxu0
  %v2117 = vadd.f32 %v1910, %v2116
  %v2118 = vand.u32 %v1312, 4294901760
  %v2119 = vsub.f32 %v1312, %v2118
  %v2120 = vand.u32 %v2119, 4294901760
  %2121 = vmatmul.f32.gmra.mxu0 %v2120
  %v2122 = vpop.f32.mrf.mxu0
  %v2123 = vadd.f32 %v1915, %v2122
  %v2124 = vand.u32 %v1315, 4294901760
  %v2125 = vsub.f32 %v1315, %v2124
  %v2126 = vand.u32 %v2125, 4294901760
  %2127 = vmatmul.f32.gmra.mxu0 %v2126
  %v2128 = vpop.f32.mrf.mxu0
  %v2129 = vadd.f32 %v1920, %v2128
  %v2130 = vand.u32 %v1318, 4294901760
  %v2131 = vsub.f32 %v1318, %v2130
  %v2132 = vand.u32 %v2131, 4294901760
  %2133 = vmatmul.f32.gmra.mxu0 %v2132
  %v2134 = vpop.f32.mrf.mxu0
  %v2135 = vadd.f32 %v1925, %v2134
  %2136 = vdwg.mxu0
  %2137 = vmatpush.msra.mxu0 0.0
  %2138 = vmatpush.msra.mxu0 0.0
  %2139 = vmatpush.msra.mxu0 0.0
  %2140 = vmatpush.msra.mxu0 0.0
  %2141 = vmatpush.msra.mxu0 0.0
  %2142 = vmatpush.msra.mxu0 0.0
  %2143 = vmatpush.msra.mxu0 0.0
  %2144 = vmatpush.msra.mxu0 0.0
  %2145 = vmatpush.msra.mxu0 0.0
  %2146 = vmatpush.msra.mxu0 0.0
  %2147 = vmatpush.msra.mxu0 0.0
  %2148 = vmatpush.msra.mxu0 0.0
  %2149 = vmatpush.msra.mxu0 0.0
  %2150 = vmatpush.msra.mxu0 0.0
  %2151 = vmatpush.msra.mxu0 0.0
  %v2152 = vand.u32 %v1322, 4294901760
  %v2153 = vsub.f32 %v1322, %v2152
  %v2154 = vand.u32 %v2153, 4294901760
  %2155 = vmatpush.msra.mxu0 %v2154
  %v2156 = vand.u32 %v1225, 4294901760
  %2157 = vmatmul.f32.gmra.mxu0 %v2156
  %v2158 = vpop.f32.mrf.mxu0
  %v2159 = vadd.f32 %v1949, %v2158
  %v2160 = vand.u32 %v1228, 4294901760
  %2161 = vmatmul.f32.gmra.mxu0 %v2160
  %v2162 = vpop.f32.mrf.mxu0
  %v2163 = vadd.f32 %v1955, %v2162
  %v2164 = vand.u32 %v1231, 4294901760
  %2165 = vmatmul.f32.gmra.mxu0 %v2164
  %v2166 = vpop.f32.mrf.mxu0
  %v2167 = vadd.f32 %v1961, %v2166
  %v2168 = vand.u32 %v1234, 4294901760
  %2169 = vmatmul.f32.gmra.mxu0 %v2168
  %v2170 = vpop.f32.mrf.mxu0
  %v2171 = vadd.f32 %v1967, %v2170
  %v2172 = vand.u32 %v1237, 4294901760
  %2173 = vmatmul.f32.gmra.mxu0 %v2172
  %v2174 = vpop.f32.mrf.mxu0
  %v2175 = vadd.f32 %v1973, %v2174
  %v2176 = vand.u32 %v1240, 4294901760
  %2177 = vmatmul.f32.gmra.mxu0 %v2176
  %v2178 = vpop.f32.mrf.mxu0
  %v2179 = vadd.f32 %v1979, %v2178
  %v2180 = vand.u32 %v1243, 4294901760
  %2181 = vmatmul.f32.gmra.mxu0 %v2180
  %v2182 = vpop.f32.mrf.mxu0
  %v2183 = vadd.f32 %v1985, %v2182
  %v2184 = vand.u32 %v1246, 4294901760
  %2185 = vmatmul.f32.gmra.mxu0 %v2184
  %v2186 = vpop.f32.mrf.mxu0
  %v2187 = vadd.f32 %v1991, %v2186
  %v2188 = vand.u32 %v1249, 4294901760
  %2189 = vmatmul.f32.gmra.mxu0 %v2188
  %v2190 = vpop.f32.mrf.mxu0
  %v2191 = vadd.f32 %v1997, %v2190
  %v2192 = vand.u32 %v1252, 4294901760
  %2193 = vmatmul.f32.gmra.mxu0 %v2192
  %v2194 = vpop.f32.mrf.mxu0
  %v2195 = vadd.f32 %v2003, %v2194
  %v2196 = vand.u32 %v1255, 4294901760
  %2197 = vmatmul.f32.gmra.mxu0 %v2196
  %v2198 = vpop.f32.mrf.mxu0
  %v2199 = vadd.f32 %v2009, %v2198
  %v2200 = vand.u32 %v1258, 4294901760
  %2201 = vmatmul.f32.gmra.mxu0 %v2200
  %v2202 = vpop.f32.mrf.mxu0
  %v2203 = vadd.f32 %v2015, %v2202
  %v2204 = vand.u32 %v1261, 4294901760
  %2205 = vmatmul.f32.gmra.mxu0 %v2204
  %v2206 = vpop.f32.mrf.mxu0
  %v2207 = vadd.f32 %v2021, %v2206
  %v2208 = vand.u32 %v1264, 4294901760
  %2209 = vmatmul.f32.gmra.mxu0 %v2208
  %v2210 = vpop.f32.mrf.mxu0
  %v2211 = vadd.f32 %v2027, %v2210
  %v2212 = vand.u32 %v1267, 4294901760
  %2213 = vmatmul.f32.gmra.mxu0 %v2212
  %v2214 = vpop.f32.mrf.mxu0
  %v2215 = vadd.f32 %v2033, %v2214
  %v2216 = vand.u32 %v1270, 4294901760
  %2217 = vmatmul.f32.gmra.mxu0 %v2216
  %v2218 = vpop.f32.mrf.mxu0
  %v2219 = vadd.f32 %v2039, %v2218
  %v2220 = vand.u32 %v1273, 4294901760
  %2221 = vmatmul.f32.gmra.mxu0 %v2220
  %v2222 = vpop.f32.mrf.mxu0
  %v2223 = vadd.f32 %v2045, %v2222
  %v2224 = vand.u32 %v1276, 4294901760
  %2225 = vmatmul.f32.gmra.mxu0 %v2224
  %v2226 = vpop.f32.mrf.mxu0
  %v2227 = vadd.f32 %v2051, %v2226
  %v2228 = vand.u32 %v1279, 4294901760
  %2229 = vmatmul.f32.gmra.mxu0 %v2228
  %v2230 = vpop.f32.mrf.mxu0
  %v2231 = vadd.f32 %v2057, %v2230
  %v2232 = vand.u32 %v1282, 4294901760
  %2233 = vmatmul.f32.gmra.mxu0 %v2232
  %v2234 = vpop.f32.mrf.mxu0
  %v2235 = vadd.f32 %v2063, %v2234
  %v2236 = vand.u32 %v1285, 4294901760
  %2237 = vmatmul.f32.gmra.mxu0 %v2236
  %v2238 = vpop.f32.mrf.mxu0
  %v2239 = vadd.f32 %v2069, %v2238
  %v2240 = vand.u32 %v1288, 4294901760
  %2241 = vmatmul.f32.gmra.mxu0 %v2240
  %v2242 = vpop.f32.mrf.mxu0
  %v2243 = vadd.f32 %v2075, %v2242
  %v2244 = vand.u32 %v1291, 4294901760
  %2245 = vmatmul.f32.gmra.mxu0 %v2244
  %v2246 = vpop.f32.mrf.mxu0
  %v2247 = vadd.f32 %v2081, %v2246
  %v2248 = vand.u32 %v1294, 4294901760
  %2249 = vmatmul.f32.gmra.mxu0 %v2248
  %v2250 = vpop.f32.mrf.mxu0
  %v2251 = vadd.f32 %v2087, %v2250
  %v2252 = vand.u32 %v1297, 4294901760
  %2253 = vmatmul.f32.gmra.mxu0 %v2252
  %v2254 = vpop.f32.mrf.mxu0
  %v2255 = vadd.f32 %v2093, %v2254
  %v2256 = vand.u32 %v1300, 4294901760
  %2257 = vmatmul.f32.gmra.mxu0 %v2256
  %v2258 = vpop.f32.mrf.mxu0
  %v2259 = vadd.f32 %v2099, %v2258
  %v2260 = vand.u32 %v1303, 4294901760
  %2261 = vmatmul.f32.gmra.mxu0 %v2260
  %v2262 = vpop.f32.mrf.mxu0
  %v2263 = vadd.f32 %v2105, %v2262
  %v2264 = vand.u32 %v1306, 4294901760
  %2265 = vmatmul.f32.gmra.mxu0 %v2264
  %v2266 = vpop.f32.mrf.mxu0
  %v2267 = vadd.f32 %v2111, %v2266
  %v2268 = vand.u32 %v1309, 4294901760
  %2269 = vmatmul.f32.gmra.mxu0 %v2268
  %v2270 = vpop.f32.mrf.mxu0
  %v2271 = vadd.f32 %v2117, %v2270
  %v2272 = vand.u32 %v1312, 4294901760
  %2273 = vmatmul.f32.gmra.mxu0 %v2272
  %v2274 = vpop.f32.mrf.mxu0
  %v2275 = vadd.f32 %v2123, %v2274
  %v2276 = vand.u32 %v1315, 4294901760
  %2277 = vmatmul.f32.gmra.mxu0 %v2276
  %v2278 = vpop.f32.mrf.mxu0
  %v2279 = vadd.f32 %v2129, %v2278
  %v2280 = vand.u32 %v1318, 4294901760
  %2281 = vmatmul.f32.gmra.mxu0 %v2280
  %v2282 = vpop.f32.mrf.mxu0
  %v2283 = vadd.f32 %v2135, %v2282
  %2284 = vdwg.mxu0
  %2285 = vmatpush.msra.mxu0 0.0
  %2286 = vmatpush.msra.mxu0 0.0
  %2287 = vmatpush.msra.mxu0 0.0
  %2288 = vmatpush.msra.mxu0 0.0
  %2289 = vmatpush.msra.mxu0 0.0
  %2290 = vmatpush.msra.mxu0 0.0
  %2291 = vmatpush.msra.mxu0 0.0
  %2292 = vmatpush.msra.mxu0 0.0
  %2293 = vmatpush.msra.mxu0 0.0
  %2294 = vmatpush.msra.mxu0 0.0
  %2295 = vmatpush.msra.mxu0 0.0
  %2296 = vmatpush.msra.mxu0 0.0
  %2297 = vmatpush.msra.mxu0 0.0
  %2298 = vmatpush.msra.mxu0 0.0
  %2299 = vmatpush.msra.mxu0 0.0
  %v2300 = vand.u32 %v1322, 4294901760
  %2301 = vmatpush.msra.mxu0 %v2300
  %v2302 = vand.u32 %v1225, 4294901760
  %2303 = vmatmul.f32.gmra.mxu0 %v2302
  %v2304 = vpop.f32.mrf.mxu0
  %v2305 = vadd.f32 %v2159, %v2304
  %v2306 = vand.u32 %v1228, 4294901760
  %2307 = vmatmul.f32.gmra.mxu0 %v2306
  %v2308 = vpop.f32.mrf.mxu0
  %v2309 = vadd.f32 %v2163, %v2308
  %v2310 = vand.u32 %v1231, 4294901760
  %2311 = vmatmul.f32.gmra.mxu0 %v2310
  %v2312 = vpop.f32.mrf.mxu0
  %v2313 = vadd.f32 %v2167, %v2312
  %v2314 = vand.u32 %v1234, 4294901760
  %2315 = vmatmul.f32.gmra.mxu0 %v2314
  %v2316 = vpop.f32.mrf.mxu0
  %v2317 = vadd.f32 %v2171, %v2316
  %v2318 = vand.u32 %v1237, 4294901760
  %2319 = vmatmul.f32.gmra.mxu0 %v2318
  %v2320 = vpop.f32.mrf.mxu0
  %v2321 = vadd.f32 %v2175, %v2320
  %v2322 = vand.u32 %v1240, 4294901760
  %2323 = vmatmul.f32.gmra.mxu0 %v2322
  %v2324 = vpop.f32.mrf.mxu0
  %v2325 = vadd.f32 %v2179, %v2324
  %v2326 = vand.u32 %v1243, 4294901760
  %2327 = vmatmul.f32.gmra.mxu0 %v2326
  %v2328 = vpop.f32.mrf.mxu0
  %v2329 = vadd.f32 %v2183, %v2328
  %v2330 = vand.u32 %v1246, 4294901760
  %2331 = vmatmul.f32.gmra.mxu0 %v2330
  %v2332 = vpop.f32.mrf.mxu0
  %v2333 = vadd.f32 %v2187, %v2332
  %v2334 = vand.u32 %v1249, 4294901760
  %2335 = vmatmul.f32.gmra.mxu0 %v2334
  %v2336 = vpop.f32.mrf.mxu0
  %v2337 = vadd.f32 %v2191, %v2336
  %v2338 = vand.u32 %v1252, 4294901760
  %2339 = vmatmul.f32.gmra.mxu0 %v2338
  %v2340 = vpop.f32.mrf.mxu0
  %v2341 = vadd.f32 %v2195, %v2340
  %v2342 = vand.u32 %v1255, 4294901760
  %2343 = vmatmul.f32.gmra.mxu0 %v2342
  %v2344 = vpop.f32.mrf.mxu0
  %v2345 = vadd.f32 %v2199, %v2344
  %v2346 = vand.u32 %v1258, 4294901760
  %2347 = vmatmul.f32.gmra.mxu0 %v2346
  %v2348 = vpop.f32.mrf.mxu0
  %v2349 = vadd.f32 %v2203, %v2348
  %v2350 = vand.u32 %v1261, 4294901760
  %2351 = vmatmul.f32.gmra.mxu0 %v2350
  %v2352 = vpop.f32.mrf.mxu0
  %v2353 = vadd.f32 %v2207, %v2352
  %v2354 = vand.u32 %v1264, 4294901760
  %2355 = vmatmul.f32.gmra.mxu0 %v2354
  %v2356 = vpop.f32.mrf.mxu0
  %v2357 = vadd.f32 %v2211, %v2356
  %v2358 = vand.u32 %v1267, 4294901760
  %2359 = vmatmul.f32.gmra.mxu0 %v2358
  %v2360 = vpop.f32.mrf.mxu0
  %v2361 = vadd.f32 %v2215, %v2360
  %v2362 = vand.u32 %v1270, 4294901760
  %2363 = vmatmul.f32.gmra.mxu0 %v2362
  %v2364 = vpop.f32.mrf.mxu0
  %v2365 = vadd.f32 %v2219, %v2364
  %v2366 = vand.u32 %v1273, 4294901760
  %2367 = vmatmul.f32.gmra.mxu0 %v2366
  %v2368 = vpop.f32.mrf.mxu0
  %v2369 = vadd.f32 %v2223, %v2368
  %v2370 = vand.u32 %v1276, 4294901760
  %2371 = vmatmul.f32.gmra.mxu0 %v2370
  %v2372 = vpop.f32.mrf.mxu0
  %v2373 = vadd.f32 %v2227, %v2372
  %v2374 = vand.u32 %v1279, 4294901760
  %2375 = vmatmul.f32.gmra.mxu0 %v2374
  %v2376 = vpop.f32.mrf.mxu0
  %v2377 = vadd.f32 %v2231, %v2376
  %v2378 = vand.u32 %v1282, 4294901760
  %2379 = vmatmul.f32.gmra.mxu0 %v2378
  %v2380 = vpop.f32.mrf.mxu0
  %v2381 = vadd.f32 %v2235, %v2380
  %v2382 = vand.u32 %v1285, 4294901760
  %2383 = vmatmul.f32.gmra.mxu0 %v2382
  %v2384 = vpop.f32.mrf.mxu0
  %v2385 = vadd.f32 %v2239, %v2384
  %v2386 = vand.u32 %v1288, 4294901760
  %2387 = vmatmul.f32.gmra.mxu0 %v2386
  %v2388 = vpop.f32.mrf.mxu0
  %v2389 = vadd.f32 %v2243, %v2388
  %v2390 = vand.u32 %v1291, 4294901760
  %2391 = vmatmul.f32.gmra.mxu0 %v2390
  %v2392 = vpop.f32.mrf.mxu0
  %v2393 = vadd.f32 %v2247, %v2392
  %v2394 = vand.u32 %v1294, 4294901760
  %2395 = vmatmul.f32.gmra.mxu0 %v2394
  %v2396 = vpop.f32.mrf.mxu0
  %v2397 = vadd.f32 %v2251, %v2396
  %v2398 = vand.u32 %v1297, 4294901760
  %2399 = vmatmul.f32.gmra.mxu0 %v2398
  %v2400 = vpop.f32.mrf.mxu0
  %v2401 = vadd.f32 %v2255, %v2400
  %v2402 = vand.u32 %v1300, 4294901760
  %2403 = vmatmul.f32.gmra.mxu0 %v2402
  %v2404 = vpop.f32.mrf.mxu0
  %v2405 = vadd.f32 %v2259, %v2404
  %v2406 = vand.u32 %v1303, 4294901760
  %2407 = vmatmul.f32.gmra.mxu0 %v2406
  %v2408 = vpop.f32.mrf.mxu0
  %v2409 = vadd.f32 %v2263, %v2408
  %v2410 = vand.u32 %v1306, 4294901760
  %2411 = vmatmul.f32.gmra.mxu0 %v2410
  %v2412 = vpop.f32.mrf.mxu0
  %v2413 = vadd.f32 %v2267, %v2412
  %v2414 = vand.u32 %v1309, 4294901760
  %2415 = vmatmul.f32.gmra.mxu0 %v2414
  %v2416 = vpop.f32.mrf.mxu0
  %v2417 = vadd.f32 %v2271, %v2416
  %v2418 = vand.u32 %v1312, 4294901760
  %2419 = vmatmul.f32.gmra.mxu0 %v2418
  %v2420 = vpop.f32.mrf.mxu0
  %v2421 = vadd.f32 %v2275, %v2420
  %v2422 = vand.u32 %v1315, 4294901760
  %2423 = vmatmul.f32.gmra.mxu0 %v2422
  %v2424 = vpop.f32.mrf.mxu0
  %v2425 = vadd.f32 %v2279, %v2424
  %v2426 = vand.u32 %v1318, 4294901760
  %2427 = vmatmul.f32.gmra.mxu0 %v2426
  %v2428 = vpop.f32.mrf.mxu0
  %v2429 = vadd.f32 %v2283, %v2428
  %2430 = vdwg.mxu0
  %2431 = vset.pattern.permute.xlu0 1
  %2432 = vperm.xlu0 %2431, %v965
  %v2433 = vpop.permute.xlu0 %2432
  %2434 = vset.pattern.permute.xlu0 1
  %2435 = vperm.xlu0 %2434, %v967
  %v2436 = vpop.permute.xlu0 %2435
  %2437 = vset.pattern.permute.xlu0 1
  %2438 = vperm.xlu0 %2437, %v969
  %v2439 = vpop.permute.xlu0 %2438
  %2440 = vset.pattern.permute.xlu0 1
  %2441 = vperm.xlu0 %2440, %v971
  %v2442 = vpop.permute.xlu0 %2441
  %2443 = vset.pattern.permute.xlu0 1
  %2444 = vperm.xlu0 %2443, %v973
  %v2445 = vpop.permute.xlu0 %2444
  %2446 = vset.pattern.permute.xlu0 1
  %2447 = vperm.xlu0 %2446, %v975
  %v2448 = vpop.permute.xlu0 %2447
  %2449 = vset.pattern.permute.xlu0 1
  %2450 = vperm.xlu0 %2449, %v977
  %v2451 = vpop.permute.xlu0 %2450
  %2452 = vset.pattern.permute.xlu0 1
  %2453 = vperm.xlu0 %2452, %v979
  %v2454 = vpop.permute.xlu0 %2453
  %2455 = vset.pattern.permute.xlu0 1
  %2456 = vperm.xlu0 %2455, %v981
  %v2457 = vpop.permute.xlu0 %2456
  %2458 = vset.pattern.permute.xlu0 1
  %2459 = vperm.xlu0 %2458, %v983
  %v2460 = vpop.permute.xlu0 %2459
  %2461 = vset.pattern.permute.xlu0 1
  %2462 = vperm.xlu0 %2461, %v985
  %v2463 = vpop.permute.xlu0 %2462
  %2464 = vset.pattern.permute.xlu0 1
  %2465 = vperm.xlu0 %2464, %v987
  %v2466 = vpop.permute.xlu0 %2465
  %2467 = vset.pattern.permute.xlu0 1
  %2468 = vperm.xlu0 %2467, %v989
  %v2469 = vpop.permute.xlu0 %2468
  %2470 = vset.pattern.permute.xlu0 1
  %2471 = vperm.xlu0 %2470, %v991
  %v2472 = vpop.permute.xlu0 %2471
  %2473 = vset.pattern.permute.xlu0 1
  %2474 = vperm.xlu0 %2473, %v993
  %v2475 = vpop.permute.xlu0 %2474
  %2476 = vset.pattern.permute.xlu0 1
  %2477 = vperm.xlu0 %2476, %v995
  %v2478 = vpop.permute.xlu0 %2477
  %2479 = vset.pattern.permute.xlu0 1
  %2480 = vperm.xlu0 %2479, %v997
  %v2481 = vpop.permute.xlu0 %2480
  %2482 = vset.pattern.permute.xlu0 1
  %2483 = vperm.xlu0 %2482, %v999
  %v2484 = vpop.permute.xlu0 %2483
  %2485 = vset.pattern.permute.xlu0 1
  %2486 = vperm.xlu0 %2485, %v1001
  %v2487 = vpop.permute.xlu0 %2486
  %2488 = vset.pattern.permute.xlu0 1
  %2489 = vperm.xlu0 %2488, %v1003
  %v2490 = vpop.permute.xlu0 %2489
  %2491 = vset.pattern.permute.xlu0 1
  %2492 = vperm.xlu0 %2491, %v1005
  %v2493 = vpop.permute.xlu0 %2492
  %2494 = vset.pattern.permute.xlu0 1
  %2495 = vperm.xlu0 %2494, %v1007
  %v2496 = vpop.permute.xlu0 %2495
  %2497 = vset.pattern.permute.xlu0 1
  %2498 = vperm.xlu0 %2497, %v1009
  %v2499 = vpop.permute.xlu0 %2498
  %2500 = vset.pattern.permute.xlu0 1
  %2501 = vperm.xlu0 %2500, %v1011
  %v2502 = vpop.permute.xlu0 %2501
  %2503 = vset.pattern.permute.xlu0 1
  %2504 = vperm.xlu0 %2503, %v1013
  %v2505 = vpop.permute.xlu0 %2504
  %2506 = vset.pattern.permute.xlu0 1
  %2507 = vperm.xlu0 %2506, %v1015
  %v2508 = vpop.permute.xlu0 %2507
  %2509 = vset.pattern.permute.xlu0 1
  %2510 = vperm.xlu0 %2509, %v1017
  %v2511 = vpop.permute.xlu0 %2510
  %2512 = vset.pattern.permute.xlu0 1
  %2513 = vperm.xlu0 %2512, %v1019
  %v2514 = vpop.permute.xlu0 %2513
  %2515 = vset.pattern.permute.xlu0 1
  %2516 = vperm.xlu0 %2515, %v1021
  %v2517 = vpop.permute.xlu0 %2516
  %2518 = vset.pattern.permute.xlu0 1
  %2519 = vperm.xlu0 %2518, %v1023
  %v2520 = vpop.permute.xlu0 %2519
  %2521 = vset.pattern.permute.xlu0 1
  %2522 = vperm.xlu0 %2521, %v1025
  %v2523 = vpop.permute.xlu0 %2522
  %2524 = vset.pattern.permute.xlu0 1
  %2525 = vperm.xlu0 %2524, %v1027
  %v2526 = vpop.permute.xlu0 %2525
  %vm2527 = vcmp.eq.s32.totalorder %v2433, %v1029
  %vm2528 = vcmp.eq.s32.totalorder %v2436, %v1029
  %vm2529 = vcmp.eq.s32.totalorder %v2439, %v1029
  %vm2530 = vcmp.eq.s32.totalorder %v2442, %v1029
  %vm2531 = vcmp.eq.s32.totalorder %v2445, %v1029
  %vm2532 = vcmp.eq.s32.totalorder %v2448, %v1029
  %vm2533 = vcmp.eq.s32.totalorder %v2451, %v1029
  %vm2534 = vcmp.eq.s32.totalorder %v2454, %v1029
  %vm2535 = vcmp.eq.s32.totalorder %v2457, %v1029
  %vm2536 = vcmp.eq.s32.totalorder %v2460, %v1029
  %vm2537 = vcmp.eq.s32.totalorder %v2463, %v1029
  %vm2538 = vcmp.eq.s32.totalorder %v2466, %v1029
  %vm2539 = vcmp.eq.s32.totalorder %v2469, %v1029
  %vm2540 = vcmp.eq.s32.totalorder %v2472, %v1029
  %vm2541 = vcmp.eq.s32.totalorder %v2475, %v1029
  %vm2542 = vcmp.eq.s32.totalorder %v2478, %v1029
  %vm2543 = vcmp.eq.s32.totalorder %v2481, %v1029
  %vm2544 = vcmp.eq.s32.totalorder %v2484, %v1029
  %vm2545 = vcmp.eq.s32.totalorder %v2487, %v1029
  %vm2546 = vcmp.eq.s32.totalorder %v2490, %v1029
  %vm2547 = vcmp.eq.s32.totalorder %v2493, %v1029
  %vm2548 = vcmp.eq.s32.totalorder %v2496, %v1029
  %vm2549 = vcmp.eq.s32.totalorder %v2499, %v1029
  %vm2550 = vcmp.eq.s32.totalorder %v2502, %v1029
  %vm2551 = vcmp.eq.s32.totalorder %v2505, %v1029
  %vm2552 = vcmp.eq.s32.totalorder %v2508, %v1029
  %vm2553 = vcmp.eq.s32.totalorder %v2511, %v1029
  %vm2554 = vcmp.eq.s32.totalorder %v2514, %v1029
  %vm2555 = vcmp.eq.s32.totalorder %v2517, %v1029
  %vm2556 = vcmp.eq.s32.totalorder %v2520, %v1029
  %vm2557 = vcmp.eq.s32.totalorder %v2523, %v1029
  %vm2558 = vcmp.eq.s32.totalorder %v2526, %v1029
  %v2559 = vsel %vm2527, 1, 0
  %v2560 = vsel %vm2528, 1, 0
  %v2561 = vsel %vm2529, 1, 0
  %v2562 = vsel %vm2530, 1, 0
  %v2563 = vsel %vm2531, 1, 0
  %v2564 = vsel %vm2532, 1, 0
  %v2565 = vsel %vm2533, 1, 0
  %v2566 = vsel %vm2534, 1, 0
  %v2567 = vsel %vm2535, 1, 0
  %v2568 = vsel %vm2536, 1, 0
  %v2569 = vsel %vm2537, 1, 0
  %v2570 = vsel %vm2538, 1, 0
  %v2571 = vsel %vm2539, 1, 0
  %v2572 = vsel %vm2540, 1, 0
  %v2573 = vsel %vm2541, 1, 0
  %v2574 = vsel %vm2542, 1, 0
  %v2575 = vsel %vm2543, 1, 0
  %v2576 = vsel %vm2544, 1, 0
  %v2577 = vsel %vm2545, 1, 0
  %v2578 = vsel %vm2546, 1, 0
  %v2579 = vsel %vm2547, 1, 0
  %v2580 = vsel %vm2548, 1, 0
  %v2581 = vsel %vm2549, 1, 0
  %v2582 = vsel %vm2550, 1, 0
  %v2583 = vsel %vm2551, 1, 0
  %v2584 = vsel %vm2552, 1, 0
  %v2585 = vsel %vm2553, 1, 0
  %v2586 = vsel %vm2554, 1, 0
  %v2587 = vsel %vm2555, 1, 0
  %v2588 = vsel %vm2556, 1, 0
  %v2589 = vsel %vm2557, 1, 0
  %v2590 = vsel %vm2558, 1, 0
  %v2591 = vcvt.s32.f32 %v2559
  %v2592 = vcvt.s32.f32 %v2560
  %v2593 = vcvt.s32.f32 %v2561
  %v2594 = vcvt.s32.f32 %v2562
  %v2595 = vcvt.s32.f32 %v2563
  %v2596 = vcvt.s32.f32 %v2564
  %v2597 = vcvt.s32.f32 %v2565
  %v2598 = vcvt.s32.f32 %v2566
  %v2599 = vcvt.s32.f32 %v2567
  %v2600 = vcvt.s32.f32 %v2568
  %v2601 = vcvt.s32.f32 %v2569
  %v2602 = vcvt.s32.f32 %v2570
  %v2603 = vcvt.s32.f32 %v2571
  %v2604 = vcvt.s32.f32 %v2572
  %v2605 = vcvt.s32.f32 %v2573
  %v2606 = vcvt.s32.f32 %v2574
  %v2607 = vcvt.s32.f32 %v2575
  %v2608 = vcvt.s32.f32 %v2576
  %v2609 = vcvt.s32.f32 %v2577
  %v2610 = vcvt.s32.f32 %v2578
  %v2611 = vcvt.s32.f32 %v2579
  %v2612 = vcvt.s32.f32 %v2580
  %v2613 = vcvt.s32.f32 %v2581
  %v2614 = vcvt.s32.f32 %v2582
  %v2615 = vcvt.s32.f32 %v2583
  %v2616 = vcvt.s32.f32 %v2584
  %v2617 = vcvt.s32.f32 %v2585
  %v2618 = vcvt.s32.f32 %v2586
  %v2619 = vcvt.s32.f32 %v2587
  %v2620 = vcvt.s32.f32 %v2588
  %v2621 = vcvt.s32.f32 %v2589
  %v2622 = vcvt.s32.f32 %v2590
  %s2623 = scalar_lea.vmem %s4, 8
  %v2624 = vld [vmem:[%s2623] sm:$0x1f]
  %v2626 = vsel %vm1223, %v2591, 0
  %v2629 = vsel %vm1223, %v2592, 0
  %v2632 = vsel %vm1223, %v2593, 0
  %v2635 = vsel %vm1223, %v2594, 0
  %v2638 = vsel %vm1223, %v2595, 0
  %v2641 = vsel %vm1223, %v2596, 0
  %v2644 = vsel %vm1223, %v2597, 0
  %v2647 = vsel %vm1223, %v2598, 0
  %v2650 = vsel %vm1223, %v2599, 0
  %v2653 = vsel %vm1223, %v2600, 0
  %v2656 = vsel %vm1223, %v2601, 0
  %v2659 = vsel %vm1223, %v2602, 0
  %v2662 = vsel %vm1223, %v2603, 0
  %v2665 = vsel %vm1223, %v2604, 0
  %v2668 = vsel %vm1223, %v2605, 0
  %v2671 = vsel %vm1223, %v2606, 0
  %v2674 = vsel %vm1223, %v2607, 0
  %v2677 = vsel %vm1223, %v2608, 0
  %v2680 = vsel %vm1223, %v2609, 0
  %v2683 = vsel %vm1223, %v2610, 0
  %v2686 = vsel %vm1223, %v2611, 0
  %v2689 = vsel %vm1223, %v2612, 0
  %v2692 = vsel %vm1223, %v2613, 0
  %v2695 = vsel %vm1223, %v2614, 0
  %v2698 = vsel %vm1223, %v2615, 0
  %v2701 = vsel %vm1223, %v2616, 0
  %v2704 = vsel %vm1223, %v2617, 0
  %v2707 = vsel %vm1223, %v2618, 0
  %v2710 = vsel %vm1223, %v2619, 0
  %v2713 = vsel %vm1223, %v2620, 0
  %v2716 = vsel %vm1223, %v2621, 0
  %v2719 = vsel %vm1223, %v2622, 0
  %v2722 = vsel %vm1320, %v2624, 0
  %2724 = vmatpush.msra.mxu0 0.0
  %2725 = vmatpush.msra.mxu0 0.0
  %2726 = vmatpush.msra.mxu0 0.0
  %2727 = vmatpush.msra.mxu0 0.0
  %2728 = vmatpush.msra.mxu0 0.0
  %2729 = vmatpush.msra.mxu0 0.0
  %2730 = vmatpush.msra.mxu0 0.0
  %2731 = vmatpush.msra.mxu0 0.0
  %2732 = vmatpush.msra.mxu0 0.0
  %2733 = vmatpush.msra.mxu0 0.0
  %2734 = vmatpush.msra.mxu0 0.0
  %2735 = vmatpush.msra.mxu0 0.0
  %2736 = vmatpush.msra.mxu0 0.0
  %2737 = vmatpush.msra.mxu0 0.0
  %2738 = vmatpush.msra.mxu0 0.0
  %v2739 = vand.u32 %v2722, 4294901760
  %2740 = vmatpush.msra.mxu0 %v2739
  %v2741 = vand.u32 %v2626, 4294901760
  %v2742 = vsub.f32 %v2626, %v2741
  %v2743 = vand.u32 %v2742, 4294901760
  %v2744 = vsub.f32 %v2742, %v2743
  %v2745 = vand.u32 %v2744, 4294901760
  %2746 = vmatmul.f32.gmra.mxu0 %v2745
  %v2747 = vpop.f32.mrf.mxu0
  %v2748 = vadd.f32 0.0, %v2747
  %v2749 = vand.u32 %v2629, 4294901760
  %v2750 = vsub.f32 %v2629, %v2749
  %v2751 = vand.u32 %v2750, 4294901760
  %v2752 = vsub.f32 %v2750, %v2751
  %v2753 = vand.u32 %v2752, 4294901760
  %2754 = vmatmul.f32.gmra.mxu0 %v2753
  %v2755 = vpop.f32.mrf.mxu0
  %v2756 = vadd.f32 0.0, %v2755
  %v2757 = vand.u32 %v2632, 4294901760
  %v2758 = vsub.f32 %v2632, %v2757
  %v2759 = vand.u32 %v2758, 4294901760
  %v2760 = vsub.f32 %v2758, %v2759
  %v2761 = vand.u32 %v2760, 4294901760
  %2762 = vmatmul.f32.gmra.mxu0 %v2761
  %v2763 = vpop.f32.mrf.mxu0
  %v2764 = vadd.f32 0.0, %v2763
  %v2765 = vand.u32 %v2635, 4294901760
  %v2766 = vsub.f32 %v2635, %v2765
  %v2767 = vand.u32 %v2766, 4294901760
  %v2768 = vsub.f32 %v2766, %v2767
  %v2769 = vand.u32 %v2768, 4294901760
  %2770 = vmatmul.f32.gmra.mxu0 %v2769
  %v2771 = vpop.f32.mrf.mxu0
  %v2772 = vadd.f32 0.0, %v2771
  %v2773 = vand.u32 %v2638, 4294901760
  %v2774 = vsub.f32 %v2638, %v2773
  %v2775 = vand.u32 %v2774, 4294901760
  %v2776 = vsub.f32 %v2774, %v2775
  %v2777 = vand.u32 %v2776, 4294901760
  %2778 = vmatmul.f32.gmra.mxu0 %v2777
  %v2779 = vpop.f32.mrf.mxu0
  %v2780 = vadd.f32 0.0, %v2779
  %v2781 = vand.u32 %v2641, 4294901760
  %v2782 = vsub.f32 %v2641, %v2781
  %v2783 = vand.u32 %v2782, 4294901760
  %v2784 = vsub.f32 %v2782, %v2783
  %v2785 = vand.u32 %v2784, 4294901760
  %2786 = vmatmul.f32.gmra.mxu0 %v2785
  %v2787 = vpop.f32.mrf.mxu0
  %v2788 = vadd.f32 0.0, %v2787
  %v2789 = vand.u32 %v2644, 4294901760
  %v2790 = vsub.f32 %v2644, %v2789
  %v2791 = vand.u32 %v2790, 4294901760
  %v2792 = vsub.f32 %v2790, %v2791
  %v2793 = vand.u32 %v2792, 4294901760
  %2794 = vmatmul.f32.gmra.mxu0 %v2793
  %v2795 = vpop.f32.mrf.mxu0
  %v2796 = vadd.f32 0.0, %v2795
  %v2797 = vand.u32 %v2647, 4294901760
  %v2798 = vsub.f32 %v2647, %v2797
  %v2799 = vand.u32 %v2798, 4294901760
  %v2800 = vsub.f32 %v2798, %v2799
  %v2801 = vand.u32 %v2800, 4294901760
  %2802 = vmatmul.f32.gmra.mxu0 %v2801
  %v2803 = vpop.f32.mrf.mxu0
  %v2804 = vadd.f32 0.0, %v2803
  %v2805 = vand.u32 %v2650, 4294901760
  %v2806 = vsub.f32 %v2650, %v2805
  %v2807 = vand.u32 %v2806, 4294901760
  %v2808 = vsub.f32 %v2806, %v2807
  %v2809 = vand.u32 %v2808, 4294901760
  %2810 = vmatmul.f32.gmra.mxu0 %v2809
  %v2811 = vpop.f32.mrf.mxu0
  %v2812 = vadd.f32 0.0, %v2811
  %v2813 = vand.u32 %v2653, 4294901760
  %v2814 = vsub.f32 %v2653, %v2813
  %v2815 = vand.u32 %v2814, 4294901760
  %v2816 = vsub.f32 %v2814, %v2815
  %v2817 = vand.u32 %v2816, 4294901760
  %2818 = vmatmul.f32.gmra.mxu0 %v2817
  %v2819 = vpop.f32.mrf.mxu0
  %v2820 = vadd.f32 0.0, %v2819
  %v2821 = vand.u32 %v2656, 4294901760
  %v2822 = vsub.f32 %v2656, %v2821
  %v2823 = vand.u32 %v2822, 4294901760
  %v2824 = vsub.f32 %v2822, %v2823
  %v2825 = vand.u32 %v2824, 4294901760
  %2826 = vmatmul.f32.gmra.mxu0 %v2825
  %v2827 = vpop.f32.mrf.mxu0
  %v2828 = vadd.f32 0.0, %v2827
  %v2829 = vand.u32 %v2659, 4294901760
  %v2830 = vsub.f32 %v2659, %v2829
  %v2831 = vand.u32 %v2830, 4294901760
  %v2832 = vsub.f32 %v2830, %v2831
  %v2833 = vand.u32 %v2832, 4294901760
  %2834 = vmatmul.f32.gmra.mxu0 %v2833
  %v2835 = vpop.f32.mrf.mxu0
  %v2836 = vadd.f32 0.0, %v2835
  %v2837 = vand.u32 %v2662, 4294901760
  %v2838 = vsub.f32 %v2662, %v2837
  %v2839 = vand.u32 %v2838, 4294901760
  %v2840 = vsub.f32 %v2838, %v2839
  %v2841 = vand.u32 %v2840, 4294901760
  %2842 = vmatmul.f32.gmra.mxu0 %v2841
  %v2843 = vpop.f32.mrf.mxu0
  %v2844 = vadd.f32 0.0, %v2843
  %v2845 = vand.u32 %v2665, 4294901760
  %v2846 = vsub.f32 %v2665, %v2845
  %v2847 = vand.u32 %v2846, 4294901760
  %v2848 = vsub.f32 %v2846, %v2847
  %v2849 = vand.u32 %v2848, 4294901760
  %2850 = vmatmul.f32.gmra.mxu0 %v2849
  %v2851 = vpop.f32.mrf.mxu0
  %v2852 = vadd.f32 0.0, %v2851
  %v2853 = vand.u32 %v2668, 4294901760
  %v2854 = vsub.f32 %v2668, %v2853
  %v2855 = vand.u32 %v2854, 4294901760
  %v2856 = vsub.f32 %v2854, %v2855
  %v2857 = vand.u32 %v2856, 4294901760
  %2858 = vmatmul.f32.gmra.mxu0 %v2857
  %v2859 = vpop.f32.mrf.mxu0
  %v2860 = vadd.f32 0.0, %v2859
  %v2861 = vand.u32 %v2671, 4294901760
  %v2862 = vsub.f32 %v2671, %v2861
  %v2863 = vand.u32 %v2862, 4294901760
  %v2864 = vsub.f32 %v2862, %v2863
  %v2865 = vand.u32 %v2864, 4294901760
  %2866 = vmatmul.f32.gmra.mxu0 %v2865
  %v2867 = vpop.f32.mrf.mxu0
  %v2868 = vadd.f32 0.0, %v2867
  %v2869 = vand.u32 %v2674, 4294901760
  %v2870 = vsub.f32 %v2674, %v2869
  %v2871 = vand.u32 %v2870, 4294901760
  %v2872 = vsub.f32 %v2870, %v2871
  %v2873 = vand.u32 %v2872, 4294901760
  %2874 = vmatmul.f32.gmra.mxu0 %v2873
  %v2875 = vpop.f32.mrf.mxu0
  %v2876 = vadd.f32 0.0, %v2875
  %v2877 = vand.u32 %v2677, 4294901760
  %v2878 = vsub.f32 %v2677, %v2877
  %v2879 = vand.u32 %v2878, 4294901760
  %v2880 = vsub.f32 %v2878, %v2879
  %v2881 = vand.u32 %v2880, 4294901760
  %2882 = vmatmul.f32.gmra.mxu0 %v2881
  %v2883 = vpop.f32.mrf.mxu0
  %v2884 = vadd.f32 0.0, %v2883
  %v2885 = vand.u32 %v2680, 4294901760
  %v2886 = vsub.f32 %v2680, %v2885
  %v2887 = vand.u32 %v2886, 4294901760
  %v2888 = vsub.f32 %v2886, %v2887
  %v2889 = vand.u32 %v2888, 4294901760
  %2890 = vmatmul.f32.gmra.mxu0 %v2889
  %v2891 = vpop.f32.mrf.mxu0
  %v2892 = vadd.f32 0.0, %v2891
  %v2893 = vand.u32 %v2683, 4294901760
  %v2894 = vsub.f32 %v2683, %v2893
  %v2895 = vand.u32 %v2894, 4294901760
  %v2896 = vsub.f32 %v2894, %v2895
  %v2897 = vand.u32 %v2896, 4294901760
  %2898 = vmatmul.f32.gmra.mxu0 %v2897
  %v2899 = vpop.f32.mrf.mxu0
  %v2900 = vadd.f32 0.0, %v2899
  %v2901 = vand.u32 %v2686, 4294901760
  %v2902 = vsub.f32 %v2686, %v2901
  %v2903 = vand.u32 %v2902, 4294901760
  %v2904 = vsub.f32 %v2902, %v2903
  %v2905 = vand.u32 %v2904, 4294901760
  %2906 = vmatmul.f32.gmra.mxu0 %v2905
  %v2907 = vpop.f32.mrf.mxu0
  %v2908 = vadd.f32 0.0, %v2907
  %v2909 = vand.u32 %v2689, 4294901760
  %v2910 = vsub.f32 %v2689, %v2909
  %v2911 = vand.u32 %v2910, 4294901760
  %v2912 = vsub.f32 %v2910, %v2911
  %v2913 = vand.u32 %v2912, 4294901760
  %2914 = vmatmul.f32.gmra.mxu0 %v2913
  %v2915 = vpop.f32.mrf.mxu0
  %v2916 = vadd.f32 0.0, %v2915
  %v2917 = vand.u32 %v2692, 4294901760
  %v2918 = vsub.f32 %v2692, %v2917
  %v2919 = vand.u32 %v2918, 4294901760
  %v2920 = vsub.f32 %v2918, %v2919
  %v2921 = vand.u32 %v2920, 4294901760
  %2922 = vmatmul.f32.gmra.mxu0 %v2921
  %v2923 = vpop.f32.mrf.mxu0
  %v2924 = vadd.f32 0.0, %v2923
  %v2925 = vand.u32 %v2695, 4294901760
  %v2926 = vsub.f32 %v2695, %v2925
  %v2927 = vand.u32 %v2926, 4294901760
  %v2928 = vsub.f32 %v2926, %v2927
  %v2929 = vand.u32 %v2928, 4294901760
  %2930 = vmatmul.f32.gmra.mxu0 %v2929
  %v2931 = vpop.f32.mrf.mxu0
  %v2932 = vadd.f32 0.0, %v2931
  %v2933 = vand.u32 %v2698, 4294901760
  %v2934 = vsub.f32 %v2698, %v2933
  %v2935 = vand.u32 %v2934, 4294901760
  %v2936 = vsub.f32 %v2934, %v2935
  %v2937 = vand.u32 %v2936, 4294901760
  %2938 = vmatmul.f32.gmra.mxu0 %v2937
  %v2939 = vpop.f32.mrf.mxu0
  %v2940 = vadd.f32 0.0, %v2939
  %v2941 = vand.u32 %v2701, 4294901760
  %v2942 = vsub.f32 %v2701, %v2941
  %v2943 = vand.u32 %v2942, 4294901760
  %v2944 = vsub.f32 %v2942, %v2943
  %v2945 = vand.u32 %v2944, 4294901760
  %2946 = vmatmul.f32.gmra.mxu0 %v2945
  %v2947 = vpop.f32.mrf.mxu0
  %v2948 = vadd.f32 0.0, %v2947
  %v2949 = vand.u32 %v2704, 4294901760
  %v2950 = vsub.f32 %v2704, %v2949
  %v2951 = vand.u32 %v2950, 4294901760
  %v2952 = vsub.f32 %v2950, %v2951
  %v2953 = vand.u32 %v2952, 4294901760
  %2954 = vmatmul.f32.gmra.mxu0 %v2953
  %v2955 = vpop.f32.mrf.mxu0
  %v2956 = vadd.f32 0.0, %v2955
  %v2957 = vand.u32 %v2707, 4294901760
  %v2958 = vsub.f32 %v2707, %v2957
  %v2959 = vand.u32 %v2958, 4294901760
  %v2960 = vsub.f32 %v2958, %v2959
  %v2961 = vand.u32 %v2960, 4294901760
  %2962 = vmatmul.f32.gmra.mxu0 %v2961
  %v2963 = vpop.f32.mrf.mxu0
  %v2964 = vadd.f32 0.0, %v2963
  %v2965 = vand.u32 %v2710, 4294901760
  %v2966 = vsub.f32 %v2710, %v2965
  %v2967 = vand.u32 %v2966, 4294901760
  %v2968 = vsub.f32 %v2966, %v2967
  %v2969 = vand.u32 %v2968, 4294901760
  %2970 = vmatmul.f32.gmra.mxu0 %v2969
  %v2971 = vpop.f32.mrf.mxu0
  %v2972 = vadd.f32 0.0, %v2971
  %v2973 = vand.u32 %v2713, 4294901760
  %v2974 = vsub.f32 %v2713, %v2973
  %v2975 = vand.u32 %v2974, 4294901760
  %v2976 = vsub.f32 %v2974, %v2975
  %v2977 = vand.u32 %v2976, 4294901760
  %2978 = vmatmul.f32.gmra.mxu0 %v2977
  %v2979 = vpop.f32.mrf.mxu0
  %v2980 = vadd.f32 0.0, %v2979
  %v2981 = vand.u32 %v2716, 4294901760
  %v2982 = vsub.f32 %v2716, %v2981
  %v2983 = vand.u32 %v2982, 4294901760
  %v2984 = vsub.f32 %v2982, %v2983
  %v2985 = vand.u32 %v2984, 4294901760
  %2986 = vmatmul.f32.gmra.mxu0 %v2985
  %v2987 = vpop.f32.mrf.mxu0
  %v2988 = vadd.f32 0.0, %v2987
  %v2989 = vand.u32 %v2719, 4294901760
  %v2990 = vsub.f32 %v2719, %v2989
  %v2991 = vand.u32 %v2990, 4294901760
  %v2992 = vsub.f32 %v2990, %v2991
  %v2993 = vand.u32 %v2992, 4294901760
  %2994 = vmatmul.f32.gmra.mxu0 %v2993
  %v2995 = vpop.f32.mrf.mxu0
  %v2996 = vadd.f32 0.0, %v2995
  %2997 = vdwg.mxu0
  %2998 = vmatpush.msra.mxu0 0.0
  %2999 = vmatpush.msra.mxu0 0.0
  %3000 = vmatpush.msra.mxu0 0.0
  %3001 = vmatpush.msra.mxu0 0.0
  %3002 = vmatpush.msra.mxu0 0.0
  %3003 = vmatpush.msra.mxu0 0.0
  %3004 = vmatpush.msra.mxu0 0.0
  %3005 = vmatpush.msra.mxu0 0.0
  %3006 = vmatpush.msra.mxu0 0.0
  %3007 = vmatpush.msra.mxu0 0.0
  %3008 = vmatpush.msra.mxu0 0.0
  %3009 = vmatpush.msra.mxu0 0.0
  %3010 = vmatpush.msra.mxu0 0.0
  %3011 = vmatpush.msra.mxu0 0.0
  %3012 = vmatpush.msra.mxu0 0.0
  %v3013 = vand.u32 %v2722, 4294901760
  %v3014 = vsub.f32 %v2722, %v3013
  %v3015 = vand.u32 %v3014, 4294901760
  %v3016 = vsub.f32 %v3014, %v3015
  %v3017 = vand.u32 %v3016, 4294901760
  %3018 = vmatpush.msra.mxu0 %v3017
  %v3019 = vand.u32 %v2626, 4294901760
  %3020 = vmatmul.f32.gmra.mxu0 %v3019
  %v3021 = vpop.f32.mrf.mxu0
  %v3022 = vadd.f32 %v2748, %v3021
  %v3023 = vand.u32 %v2629, 4294901760
  %3024 = vmatmul.f32.gmra.mxu0 %v3023
  %v3025 = vpop.f32.mrf.mxu0
  %v3026 = vadd.f32 %v2756, %v3025
  %v3027 = vand.u32 %v2632, 4294901760
  %3028 = vmatmul.f32.gmra.mxu0 %v3027
  %v3029 = vpop.f32.mrf.mxu0
  %v3030 = vadd.f32 %v2764, %v3029
  %v3031 = vand.u32 %v2635, 4294901760
  %3032 = vmatmul.f32.gmra.mxu0 %v3031
  %v3033 = vpop.f32.mrf.mxu0
  %v3034 = vadd.f32 %v2772, %v3033
  %v3035 = vand.u32 %v2638, 4294901760
  %3036 = vmatmul.f32.gmra.mxu0 %v3035
  %v3037 = vpop.f32.mrf.mxu0
  %v3038 = vadd.f32 %v2780, %v3037
  %v3039 = vand.u32 %v2641, 4294901760
  %3040 = vmatmul.f32.gmra.mxu0 %v3039
  %v3041 = vpop.f32.mrf.mxu0
  %v3042 = vadd.f32 %v2788, %v3041
  %v3043 = vand.u32 %v2644, 4294901760
  %3044 = vmatmul.f32.gmra.mxu0 %v3043
  %v3045 = vpop.f32.mrf.mxu0
  %v3046 = vadd.f32 %v2796, %v3045
  %v3047 = vand.u32 %v2647, 4294901760
  %3048 = vmatmul.f32.gmra.mxu0 %v3047
  %v3049 = vpop.f32.mrf.mxu0
  %v3050 = vadd.f32 %v2804, %v3049
  %v3051 = vand.u32 %v2650, 4294901760
  %3052 = vmatmul.f32.gmra.mxu0 %v3051
  %v3053 = vpop.f32.mrf.mxu0
  %v3054 = vadd.f32 %v2812, %v3053
  %v3055 = vand.u32 %v2653, 4294901760
  %3056 = vmatmul.f32.gmra.mxu0 %v3055
  %v3057 = vpop.f32.mrf.mxu0
  %v3058 = vadd.f32 %v2820, %v3057
  %v3059 = vand.u32 %v2656, 4294901760
  %3060 = vmatmul.f32.gmra.mxu0 %v3059
  %v3061 = vpop.f32.mrf.mxu0
  %v3062 = vadd.f32 %v2828, %v3061
  %v3063 = vand.u32 %v2659, 4294901760
  %3064 = vmatmul.f32.gmra.mxu0 %v3063
  %v3065 = vpop.f32.mrf.mxu0
  %v3066 = vadd.f32 %v2836, %v3065
  %v3067 = vand.u32 %v2662, 4294901760
  %3068 = vmatmul.f32.gmra.mxu0 %v3067
  %v3069 = vpop.f32.mrf.mxu0
  %v3070 = vadd.f32 %v2844, %v3069
  %v3071 = vand.u32 %v2665, 4294901760
  %3072 = vmatmul.f32.gmra.mxu0 %v3071
  %v3073 = vpop.f32.mrf.mxu0
  %v3074 = vadd.f32 %v2852, %v3073
  %v3075 = vand.u32 %v2668, 4294901760
  %3076 = vmatmul.f32.gmra.mxu0 %v3075
  %v3077 = vpop.f32.mrf.mxu0
  %v3078 = vadd.f32 %v2860, %v3077
  %v3079 = vand.u32 %v2671, 4294901760
  %3080 = vmatmul.f32.gmra.mxu0 %v3079
  %v3081 = vpop.f32.mrf.mxu0
  %v3082 = vadd.f32 %v2868, %v3081
  %v3083 = vand.u32 %v2674, 4294901760
  %3084 = vmatmul.f32.gmra.mxu0 %v3083
  %v3085 = vpop.f32.mrf.mxu0
  %v3086 = vadd.f32 %v2876, %v3085
  %v3087 = vand.u32 %v2677, 4294901760
  %3088 = vmatmul.f32.gmra.mxu0 %v3087
  %v3089 = vpop.f32.mrf.mxu0
  %v3090 = vadd.f32 %v2884, %v3089
  %v3091 = vand.u32 %v2680, 4294901760
  %3092 = vmatmul.f32.gmra.mxu0 %v3091
  %v3093 = vpop.f32.mrf.mxu0
  %v3094 = vadd.f32 %v2892, %v3093
  %v3095 = vand.u32 %v2683, 4294901760
  %3096 = vmatmul.f32.gmra.mxu0 %v3095
  %v3097 = vpop.f32.mrf.mxu0
  %v3098 = vadd.f32 %v2900, %v3097
  %v3099 = vand.u32 %v2686, 4294901760
  %3100 = vmatmul.f32.gmra.mxu0 %v3099
  %v3101 = vpop.f32.mrf.mxu0
  %v3102 = vadd.f32 %v2908, %v3101
  %v3103 = vand.u32 %v2689, 4294901760
  %3104 = vmatmul.f32.gmra.mxu0 %v3103
  %v3105 = vpop.f32.mrf.mxu0
  %v3106 = vadd.f32 %v2916, %v3105
  %v3107 = vand.u32 %v2692, 4294901760
  %3108 = vmatmul.f32.gmra.mxu0 %v3107
  %v3109 = vpop.f32.mrf.mxu0
  %v3110 = vadd.f32 %v2924, %v3109
  %v3111 = vand.u32 %v2695, 4294901760
  %3112 = vmatmul.f32.gmra.mxu0 %v3111
  %v3113 = vpop.f32.mrf.mxu0
  %v3114 = vadd.f32 %v2932, %v3113
  %v3115 = vand.u32 %v2698, 4294901760
  %3116 = vmatmul.f32.gmra.mxu0 %v3115
  %v3117 = vpop.f32.mrf.mxu0
  %v3118 = vadd.f32 %v2940, %v3117
  %v3119 = vand.u32 %v2701, 4294901760
  %3120 = vmatmul.f32.gmra.mxu0 %v3119
  %v3121 = vpop.f32.mrf.mxu0
  %v3122 = vadd.f32 %v2948, %v3121
  %v3123 = vand.u32 %v2704, 4294901760
  %3124 = vmatmul.f32.gmra.mxu0 %v3123
  %v3125 = vpop.f32.mrf.mxu0
  %v3126 = vadd.f32 %v2956, %v3125
  %v3127 = vand.u32 %v2707, 4294901760
  %3128 = vmatmul.f32.gmra.mxu0 %v3127
  %v3129 = vpop.f32.mrf.mxu0
  %v3130 = vadd.f32 %v2964, %v3129
  %v3131 = vand.u32 %v2710, 4294901760
  %3132 = vmatmul.f32.gmra.mxu0 %v3131
  %v3133 = vpop.f32.mrf.mxu0
  %v3134 = vadd.f32 %v2972, %v3133
  %v3135 = vand.u32 %v2713, 4294901760
  %3136 = vmatmul.f32.gmra.mxu0 %v3135
  %v3137 = vpop.f32.mrf.mxu0
  %v3138 = vadd.f32 %v2980, %v3137
  %v3139 = vand.u32 %v2716, 4294901760
  %3140 = vmatmul.f32.gmra.mxu0 %v3139
  %v3141 = vpop.f32.mrf.mxu0
  %v3142 = vadd.f32 %v2988, %v3141
  %v3143 = vand.u32 %v2719, 4294901760
  %3144 = vmatmul.f32.gmra.mxu0 %v3143
  %v3145 = vpop.f32.mrf.mxu0
  %v3146 = vadd.f32 %v2996, %v3145
  %3147 = vdwg.mxu0
  %3148 = vmatpush.msra.mxu0 0.0
  %3149 = vmatpush.msra.mxu0 0.0
  %3150 = vmatpush.msra.mxu0 0.0
  %3151 = vmatpush.msra.mxu0 0.0
  %3152 = vmatpush.msra.mxu0 0.0
  %3153 = vmatpush.msra.mxu0 0.0
  %3154 = vmatpush.msra.mxu0 0.0
  %3155 = vmatpush.msra.mxu0 0.0
  %3156 = vmatpush.msra.mxu0 0.0
  %3157 = vmatpush.msra.mxu0 0.0
  %3158 = vmatpush.msra.mxu0 0.0
  %3159 = vmatpush.msra.mxu0 0.0
  %3160 = vmatpush.msra.mxu0 0.0
  %3161 = vmatpush.msra.mxu0 0.0
  %3162 = vmatpush.msra.mxu0 0.0
  %v3163 = vand.u32 %v2722, 4294901760
  %v3164 = vsub.f32 %v2722, %v3163
  %3165 = vmatpush.msra.mxu0 %v3164
  %v3166 = vand.u32 %v2626, 4294901760
  %v3167 = vsub.f32 %v2626, %v3166
  %3168 = vmatmul.f32.gmra.mxu0 %v3167
  %v3169 = vpop.f32.mrf.mxu0
  %v3170 = vadd.f32 %v3022, %v3169
  %v3171 = vand.u32 %v2629, 4294901760
  %v3172 = vsub.f32 %v2629, %v3171
  %3173 = vmatmul.f32.gmra.mxu0 %v3172
  %v3174 = vpop.f32.mrf.mxu0
  %v3175 = vadd.f32 %v3026, %v3174
  %v3176 = vand.u32 %v2632, 4294901760
  %v3177 = vsub.f32 %v2632, %v3176
  %3178 = vmatmul.f32.gmra.mxu0 %v3177
  %v3179 = vpop.f32.mrf.mxu0
  %v3180 = vadd.f32 %v3030, %v3179
  %v3181 = vand.u32 %v2635, 4294901760
  %v3182 = vsub.f32 %v2635, %v3181
  %3183 = vmatmul.f32.gmra.mxu0 %v3182
  %v3184 = vpop.f32.mrf.mxu0
  %v3185 = vadd.f32 %v3034, %v3184
  %v3186 = vand.u32 %v2638, 4294901760
  %v3187 = vsub.f32 %v2638, %v3186
  %3188 = vmatmul.f32.gmra.mxu0 %v3187
  %v3189 = vpop.f32.mrf.mxu0
  %v3190 = vadd.f32 %v3038, %v3189
  %v3191 = vand.u32 %v2641, 4294901760
  %v3192 = vsub.f32 %v2641, %v3191
  %3193 = vmatmul.f32.gmra.mxu0 %v3192
  %v3194 = vpop.f32.mrf.mxu0
  %v3195 = vadd.f32 %v3042, %v3194
  %v3196 = vand.u32 %v2644, 4294901760
  %v3197 = vsub.f32 %v2644, %v3196
  %3198 = vmatmul.f32.gmra.mxu0 %v3197
  %v3199 = vpop.f32.mrf.mxu0
  %v3200 = vadd.f32 %v3046, %v3199
  %v3201 = vand.u32 %v2647, 4294901760
  %v3202 = vsub.f32 %v2647, %v3201
  %3203 = vmatmul.f32.gmra.mxu0 %v3202
  %v3204 = vpop.f32.mrf.mxu0
  %v3205 = vadd.f32 %v3050, %v3204
  %v3206 = vand.u32 %v2650, 4294901760
  %v3207 = vsub.f32 %v2650, %v3206
  %3208 = vmatmul.f32.gmra.mxu0 %v3207
  %v3209 = vpop.f32.mrf.mxu0
  %v3210 = vadd.f32 %v3054, %v3209
  %v3211 = vand.u32 %v2653, 4294901760
  %v3212 = vsub.f32 %v2653, %v3211
  %3213 = vmatmul.f32.gmra.mxu0 %v3212
  %v3214 = vpop.f32.mrf.mxu0
  %v3215 = vadd.f32 %v3058, %v3214
  %v3216 = vand.u32 %v2656, 4294901760
  %v3217 = vsub.f32 %v2656, %v3216
  %3218 = vmatmul.f32.gmra.mxu0 %v3217
  %v3219 = vpop.f32.mrf.mxu0
  %v3220 = vadd.f32 %v3062, %v3219
  %v3221 = vand.u32 %v2659, 4294901760
  %v3222 = vsub.f32 %v2659, %v3221
  %3223 = vmatmul.f32.gmra.mxu0 %v3222
  %v3224 = vpop.f32.mrf.mxu0
  %v3225 = vadd.f32 %v3066, %v3224
  %v3226 = vand.u32 %v2662, 4294901760
  %v3227 = vsub.f32 %v2662, %v3226
  %3228 = vmatmul.f32.gmra.mxu0 %v3227
  %v3229 = vpop.f32.mrf.mxu0
  %v3230 = vadd.f32 %v3070, %v3229
  %v3231 = vand.u32 %v2665, 4294901760
  %v3232 = vsub.f32 %v2665, %v3231
  %3233 = vmatmul.f32.gmra.mxu0 %v3232
  %v3234 = vpop.f32.mrf.mxu0
  %v3235 = vadd.f32 %v3074, %v3234
  %v3236 = vand.u32 %v2668, 4294901760
  %v3237 = vsub.f32 %v2668, %v3236
  %3238 = vmatmul.f32.gmra.mxu0 %v3237
  %v3239 = vpop.f32.mrf.mxu0
  %v3240 = vadd.f32 %v3078, %v3239
  %v3241 = vand.u32 %v2671, 4294901760
  %v3242 = vsub.f32 %v2671, %v3241
  %3243 = vmatmul.f32.gmra.mxu0 %v3242
  %v3244 = vpop.f32.mrf.mxu0
  %v3245 = vadd.f32 %v3082, %v3244
  %v3246 = vand.u32 %v2674, 4294901760
  %v3247 = vsub.f32 %v2674, %v3246
  %3248 = vmatmul.f32.gmra.mxu0 %v3247
  %v3249 = vpop.f32.mrf.mxu0
  %v3250 = vadd.f32 %v3086, %v3249
  %v3251 = vand.u32 %v2677, 4294901760
  %v3252 = vsub.f32 %v2677, %v3251
  %3253 = vmatmul.f32.gmra.mxu0 %v3252
  %v3254 = vpop.f32.mrf.mxu0
  %v3255 = vadd.f32 %v3090, %v3254
  %v3256 = vand.u32 %v2680, 4294901760
  %v3257 = vsub.f32 %v2680, %v3256
  %3258 = vmatmul.f32.gmra.mxu0 %v3257
  %v3259 = vpop.f32.mrf.mxu0
  %v3260 = vadd.f32 %v3094, %v3259
  %v3261 = vand.u32 %v2683, 4294901760
  %v3262 = vsub.f32 %v2683, %v3261
  %3263 = vmatmul.f32.gmra.mxu0 %v3262
  %v3264 = vpop.f32.mrf.mxu0
  %v3265 = vadd.f32 %v3098, %v3264
  %v3266 = vand.u32 %v2686, 4294901760
  %v3267 = vsub.f32 %v2686, %v3266
  %3268 = vmatmul.f32.gmra.mxu0 %v3267
  %v3269 = vpop.f32.mrf.mxu0
  %v3270 = vadd.f32 %v3102, %v3269
  %v3271 = vand.u32 %v2689, 4294901760
  %v3272 = vsub.f32 %v2689, %v3271
  %3273 = vmatmul.f32.gmra.mxu0 %v3272
  %v3274 = vpop.f32.mrf.mxu0
  %v3275 = vadd.f32 %v3106, %v3274
  %v3276 = vand.u32 %v2692, 4294901760
  %v3277 = vsub.f32 %v2692, %v3276
  %3278 = vmatmul.f32.gmra.mxu0 %v3277
  %v3279 = vpop.f32.mrf.mxu0
  %v3280 = vadd.f32 %v3110, %v3279
  %v3281 = vand.u32 %v2695, 4294901760
  %v3282 = vsub.f32 %v2695, %v3281
  %3283 = vmatmul.f32.gmra.mxu0 %v3282
  %v3284 = vpop.f32.mrf.mxu0
  %v3285 = vadd.f32 %v3114, %v3284
  %v3286 = vand.u32 %v2698, 4294901760
  %v3287 = vsub.f32 %v2698, %v3286
  %3288 = vmatmul.f32.gmra.mxu0 %v3287
  %v3289 = vpop.f32.mrf.mxu0
  %v3290 = vadd.f32 %v3118, %v3289
  %v3291 = vand.u32 %v2701, 4294901760
  %v3292 = vsub.f32 %v2701, %v3291
  %3293 = vmatmul.f32.gmra.mxu0 %v3292
  %v3294 = vpop.f32.mrf.mxu0
  %v3295 = vadd.f32 %v3122, %v3294
  %v3296 = vand.u32 %v2704, 4294901760
  %v3297 = vsub.f32 %v2704, %v3296
  %3298 = vmatmul.f32.gmra.mxu0 %v3297
  %v3299 = vpop.f32.mrf.mxu0
  %v3300 = vadd.f32 %v3126, %v3299
  %v3301 = vand.u32 %v2707, 4294901760
  %v3302 = vsub.f32 %v2707, %v3301
  %3303 = vmatmul.f32.gmra.mxu0 %v3302
  %v3304 = vpop.f32.mrf.mxu0
  %v3305 = vadd.f32 %v3130, %v3304
  %v3306 = vand.u32 %v2710, 4294901760
  %v3307 = vsub.f32 %v2710, %v3306
  %3308 = vmatmul.f32.gmra.mxu0 %v3307
  %v3309 = vpop.f32.mrf.mxu0
  %v3310 = vadd.f32 %v3134, %v3309
  %v3311 = vand.u32 %v2713, 4294901760
  %v3312 = vsub.f32 %v2713, %v3311
  %3313 = vmatmul.f32.gmra.mxu0 %v3312
  %v3314 = vpop.f32.mrf.mxu0
  %v3315 = vadd.f32 %v3138, %v3314
  %v3316 = vand.u32 %v2716, 4294901760
  %v3317 = vsub.f32 %v2716, %v3316
  %3318 = vmatmul.f32.gmra.mxu0 %v3317
  %v3319 = vpop.f32.mrf.mxu0
  %v3320 = vadd.f32 %v3142, %v3319
  %v3321 = vand.u32 %v2719, 4294901760
  %v3322 = vsub.f32 %v2719, %v3321
  %3323 = vmatmul.f32.gmra.mxu0 %v3322
  %v3324 = vpop.f32.mrf.mxu0
  %v3325 = vadd.f32 %v3146, %v3324
  %3326 = vdwg.mxu0
  %3327 = vmatpush.msra.mxu0 0.0
  %3328 = vmatpush.msra.mxu0 0.0
  %3329 = vmatpush.msra.mxu0 0.0
  %3330 = vmatpush.msra.mxu0 0.0
  %3331 = vmatpush.msra.mxu0 0.0
  %3332 = vmatpush.msra.mxu0 0.0
  %3333 = vmatpush.msra.mxu0 0.0
  %3334 = vmatpush.msra.mxu0 0.0
  %3335 = vmatpush.msra.mxu0 0.0
  %3336 = vmatpush.msra.mxu0 0.0
  %3337 = vmatpush.msra.mxu0 0.0
  %3338 = vmatpush.msra.mxu0 0.0
  %3339 = vmatpush.msra.mxu0 0.0
  %3340 = vmatpush.msra.mxu0 0.0
  %3341 = vmatpush.msra.mxu0 0.0
  %v3342 = vand.u32 %v2722, 4294901760
  %3343 = vmatpush.msra.mxu0 %v3342
  %v3344 = vand.u32 %v2626, 4294901760
  %v3345 = vsub.f32 %v2626, %v3344
  %v3346 = vand.u32 %v3345, 4294901760
  %3347 = vmatmul.f32.gmra.mxu0 %v3346
  %v3348 = vpop.f32.mrf.mxu0
  %v3349 = vadd.f32 %v3170, %v3348
  %v3350 = vand.u32 %v2629, 4294901760
  %v3351 = vsub.f32 %v2629, %v3350
  %v3352 = vand.u32 %v3351, 4294901760
  %3353 = vmatmul.f32.gmra.mxu0 %v3352
  %v3354 = vpop.f32.mrf.mxu0
  %v3355 = vadd.f32 %v3175, %v3354
  %v3356 = vand.u32 %v2632, 4294901760
  %v3357 = vsub.f32 %v2632, %v3356
  %v3358 = vand.u32 %v3357, 4294901760
  %3359 = vmatmul.f32.gmra.mxu0 %v3358
  %v3360 = vpop.f32.mrf.mxu0
  %v3361 = vadd.f32 %v3180, %v3360
  %v3362 = vand.u32 %v2635, 4294901760
  %v3363 = vsub.f32 %v2635, %v3362
  %v3364 = vand.u32 %v3363, 4294901760
  %3365 = vmatmul.f32.gmra.mxu0 %v3364
  %v3366 = vpop.f32.mrf.mxu0
  %v3367 = vadd.f32 %v3185, %v3366
  %v3368 = vand.u32 %v2638, 4294901760
  %v3369 = vsub.f32 %v2638, %v3368
  %v3370 = vand.u32 %v3369, 4294901760
  %3371 = vmatmul.f32.gmra.mxu0 %v3370
  %v3372 = vpop.f32.mrf.mxu0
  %v3373 = vadd.f32 %v3190, %v3372
  %v3374 = vand.u32 %v2641, 4294901760
  %v3375 = vsub.f32 %v2641, %v3374
  %v3376 = vand.u32 %v3375, 4294901760
  %3377 = vmatmul.f32.gmra.mxu0 %v3376
  %v3378 = vpop.f32.mrf.mxu0
  %v3379 = vadd.f32 %v3195, %v3378
  %v3380 = vand.u32 %v2644, 4294901760
  %v3381 = vsub.f32 %v2644, %v3380
  %v3382 = vand.u32 %v3381, 4294901760
  %3383 = vmatmul.f32.gmra.mxu0 %v3382
  %v3384 = vpop.f32.mrf.mxu0
  %v3385 = vadd.f32 %v3200, %v3384
  %v3386 = vand.u32 %v2647, 4294901760
  %v3387 = vsub.f32 %v2647, %v3386
  %v3388 = vand.u32 %v3387, 4294901760
  %3389 = vmatmul.f32.gmra.mxu0 %v3388
  %v3390 = vpop.f32.mrf.mxu0
  %v3391 = vadd.f32 %v3205, %v3390
  %v3392 = vand.u32 %v2650, 4294901760
  %v3393 = vsub.f32 %v2650, %v3392
  %v3394 = vand.u32 %v3393, 4294901760
  %3395 = vmatmul.f32.gmra.mxu0 %v3394
  %v3396 = vpop.f32.mrf.mxu0
  %v3397 = vadd.f32 %v3210, %v3396
  %v3398 = vand.u32 %v2653, 4294901760
  %v3399 = vsub.f32 %v2653, %v3398
  %v3400 = vand.u32 %v3399, 4294901760
  %3401 = vmatmul.f32.gmra.mxu0 %v3400
  %v3402 = vpop.f32.mrf.mxu0
  %v3403 = vadd.f32 %v3215, %v3402
  %v3404 = vand.u32 %v2656, 4294901760
  %v3405 = vsub.f32 %v2656, %v3404
  %v3406 = vand.u32 %v3405, 4294901760
  %3407 = vmatmul.f32.gmra.mxu0 %v3406
  %v3408 = vpop.f32.mrf.mxu0
  %v3409 = vadd.f32 %v3220, %v3408
  %v3410 = vand.u32 %v2659, 4294901760
  %v3411 = vsub.f32 %v2659, %v3410
  %v3412 = vand.u32 %v3411, 4294901760
  %3413 = vmatmul.f32.gmra.mxu0 %v3412
  %v3414 = vpop.f32.mrf.mxu0
  %v3415 = vadd.f32 %v3225, %v3414
  %v3416 = vand.u32 %v2662, 4294901760
  %v3417 = vsub.f32 %v2662, %v3416
  %v3418 = vand.u32 %v3417, 4294901760
  %3419 = vmatmul.f32.gmra.mxu0 %v3418
  %v3420 = vpop.f32.mrf.mxu0
  %v3421 = vadd.f32 %v3230, %v3420
  %v3422 = vand.u32 %v2665, 4294901760
  %v3423 = vsub.f32 %v2665, %v3422
  %v3424 = vand.u32 %v3423, 4294901760
  %3425 = vmatmul.f32.gmra.mxu0 %v3424
  %v3426 = vpop.f32.mrf.mxu0
  %v3427 = vadd.f32 %v3235, %v3426
  %v3428 = vand.u32 %v2668, 4294901760
  %v3429 = vsub.f32 %v2668, %v3428
  %v3430 = vand.u32 %v3429, 4294901760
  %3431 = vmatmul.f32.gmra.mxu0 %v3430
  %v3432 = vpop.f32.mrf.mxu0
  %v3433 = vadd.f32 %v3240, %v3432
  %v3434 = vand.u32 %v2671, 4294901760
  %v3435 = vsub.f32 %v2671, %v3434
  %v3436 = vand.u32 %v3435, 4294901760
  %3437 = vmatmul.f32.gmra.mxu0 %v3436
  %v3438 = vpop.f32.mrf.mxu0
  %v3439 = vadd.f32 %v3245, %v3438
  %v3440 = vand.u32 %v2674, 4294901760
  %v3441 = vsub.f32 %v2674, %v3440
  %v3442 = vand.u32 %v3441, 4294901760
  %3443 = vmatmul.f32.gmra.mxu0 %v3442
  %v3444 = vpop.f32.mrf.mxu0
  %v3445 = vadd.f32 %v3250, %v3444
  %v3446 = vand.u32 %v2677, 4294901760
  %v3447 = vsub.f32 %v2677, %v3446
  %v3448 = vand.u32 %v3447, 4294901760
  %3449 = vmatmul.f32.gmra.mxu0 %v3448
  %v3450 = vpop.f32.mrf.mxu0
  %v3451 = vadd.f32 %v3255, %v3450
  %v3452 = vand.u32 %v2680, 4294901760
  %v3453 = vsub.f32 %v2680, %v3452
  %v3454 = vand.u32 %v3453, 4294901760
  %3455 = vmatmul.f32.gmra.mxu0 %v3454
  %v3456 = vpop.f32.mrf.mxu0
  %v3457 = vadd.f32 %v3260, %v3456
  %v3458 = vand.u32 %v2683, 4294901760
  %v3459 = vsub.f32 %v2683, %v3458
  %v3460 = vand.u32 %v3459, 4294901760
  %3461 = vmatmul.f32.gmra.mxu0 %v3460
  %v3462 = vpop.f32.mrf.mxu0
  %v3463 = vadd.f32 %v3265, %v3462
  %v3464 = vand.u32 %v2686, 4294901760
  %v3465 = vsub.f32 %v2686, %v3464
  %v3466 = vand.u32 %v3465, 4294901760
  %3467 = vmatmul.f32.gmra.mxu0 %v3466
  %v3468 = vpop.f32.mrf.mxu0
  %v3469 = vadd.f32 %v3270, %v3468
  %v3470 = vand.u32 %v2689, 4294901760
  %v3471 = vsub.f32 %v2689, %v3470
  %v3472 = vand.u32 %v3471, 4294901760
  %3473 = vmatmul.f32.gmra.mxu0 %v3472
  %v3474 = vpop.f32.mrf.mxu0
  %v3475 = vadd.f32 %v3275, %v3474
  %v3476 = vand.u32 %v2692, 4294901760
  %v3477 = vsub.f32 %v2692, %v3476
  %v3478 = vand.u32 %v3477, 4294901760
  %3479 = vmatmul.f32.gmra.mxu0 %v3478
  %v3480 = vpop.f32.mrf.mxu0
  %v3481 = vadd.f32 %v3280, %v3480
  %v3482 = vand.u32 %v2695, 4294901760
  %v3483 = vsub.f32 %v2695, %v3482
  %v3484 = vand.u32 %v3483, 4294901760
  %3485 = vmatmul.f32.gmra.mxu0 %v3484
  %v3486 = vpop.f32.mrf.mxu0
  %v3487 = vadd.f32 %v3285, %v3486
  %v3488 = vand.u32 %v2698, 4294901760
  %v3489 = vsub.f32 %v2698, %v3488
  %v3490 = vand.u32 %v3489, 4294901760
  %3491 = vmatmul.f32.gmra.mxu0 %v3490
  %v3492 = vpop.f32.mrf.mxu0
  %v3493 = vadd.f32 %v3290, %v3492
  %v3494 = vand.u32 %v2701, 4294901760
  %v3495 = vsub.f32 %v2701, %v3494
  %v3496 = vand.u32 %v3495, 4294901760
  %3497 = vmatmul.f32.gmra.mxu0 %v3496
  %v3498 = vpop.f32.mrf.mxu0
  %v3499 = vadd.f32 %v3295, %v3498
  %v3500 = vand.u32 %v2704, 4294901760
  %v3501 = vsub.f32 %v2704, %v3500
  %v3502 = vand.u32 %v3501, 4294901760
  %3503 = vmatmul.f32.gmra.mxu0 %v3502
  %v3504 = vpop.f32.mrf.mxu0
  %v3505 = vadd.f32 %v3300, %v3504
  %v3506 = vand.u32 %v2707, 4294901760
  %v3507 = vsub.f32 %v2707, %v3506
  %v3508 = vand.u32 %v3507, 4294901760
  %3509 = vmatmul.f32.gmra.mxu0 %v3508
  %v3510 = vpop.f32.mrf.mxu0
  %v3511 = vadd.f32 %v3305, %v3510
  %v3512 = vand.u32 %v2710, 4294901760
  %v3513 = vsub.f32 %v2710, %v3512
  %v3514 = vand.u32 %v3513, 4294901760
  %3515 = vmatmul.f32.gmra.mxu0 %v3514
  %v3516 = vpop.f32.mrf.mxu0
  %v3517 = vadd.f32 %v3310, %v3516
  %v3518 = vand.u32 %v2713, 4294901760
  %v3519 = vsub.f32 %v2713, %v3518
  %v3520 = vand.u32 %v3519, 4294901760
  %3521 = vmatmul.f32.gmra.mxu0 %v3520
  %v3522 = vpop.f32.mrf.mxu0
  %v3523 = vadd.f32 %v3315, %v3522
  %v3524 = vand.u32 %v2716, 4294901760
  %v3525 = vsub.f32 %v2716, %v3524
  %v3526 = vand.u32 %v3525, 4294901760
  %3527 = vmatmul.f32.gmra.mxu0 %v3526
  %v3528 = vpop.f32.mrf.mxu0
  %v3529 = vadd.f32 %v3320, %v3528
  %v3530 = vand.u32 %v2719, 4294901760
  %v3531 = vsub.f32 %v2719, %v3530
  %v3532 = vand.u32 %v3531, 4294901760
  %3533 = vmatmul.f32.gmra.mxu0 %v3532
  %v3534 = vpop.f32.mrf.mxu0
  %v3535 = vadd.f32 %v3325, %v3534
  %3536 = vdwg.mxu0
  %3537 = vmatpush.msra.mxu0 0.0
  %3538 = vmatpush.msra.mxu0 0.0
  %3539 = vmatpush.msra.mxu0 0.0
  %3540 = vmatpush.msra.mxu0 0.0
  %3541 = vmatpush.msra.mxu0 0.0
  %3542 = vmatpush.msra.mxu0 0.0
  %3543 = vmatpush.msra.mxu0 0.0
  %3544 = vmatpush.msra.mxu0 0.0
  %3545 = vmatpush.msra.mxu0 0.0
  %3546 = vmatpush.msra.mxu0 0.0
  %3547 = vmatpush.msra.mxu0 0.0
  %3548 = vmatpush.msra.mxu0 0.0
  %3549 = vmatpush.msra.mxu0 0.0
  %3550 = vmatpush.msra.mxu0 0.0
  %3551 = vmatpush.msra.mxu0 0.0
  %v3552 = vand.u32 %v2722, 4294901760
  %v3553 = vsub.f32 %v2722, %v3552
  %v3554 = vand.u32 %v3553, 4294901760
  %3555 = vmatpush.msra.mxu0 %v3554
  %v3556 = vand.u32 %v2626, 4294901760
  %3557 = vmatmul.f32.gmra.mxu0 %v3556
  %v3558 = vpop.f32.mrf.mxu0
  %v3559 = vadd.f32 %v3349, %v3558
  %v3560 = vand.u32 %v2629, 4294901760
  %3561 = vmatmul.f32.gmra.mxu0 %v3560
  %v3562 = vpop.f32.mrf.mxu0
  %v3563 = vadd.f32 %v3355, %v3562
  %v3564 = vand.u32 %v2632, 4294901760
  %3565 = vmatmul.f32.gmra.mxu0 %v3564
  %v3566 = vpop.f32.mrf.mxu0
  %v3567 = vadd.f32 %v3361, %v3566
  %v3568 = vand.u32 %v2635, 4294901760
  %3569 = vmatmul.f32.gmra.mxu0 %v3568
  %v3570 = vpop.f32.mrf.mxu0
  %v3571 = vadd.f32 %v3367, %v3570
  %v3572 = vand.u32 %v2638, 4294901760
  %3573 = vmatmul.f32.gmra.mxu0 %v3572
  %v3574 = vpop.f32.mrf.mxu0
  %v3575 = vadd.f32 %v3373, %v3574
  %v3576 = vand.u32 %v2641, 4294901760
  %3577 = vmatmul.f32.gmra.mxu0 %v3576
  %v3578 = vpop.f32.mrf.mxu0
  %v3579 = vadd.f32 %v3379, %v3578
  %v3580 = vand.u32 %v2644, 4294901760
  %3581 = vmatmul.f32.gmra.mxu0 %v3580
  %v3582 = vpop.f32.mrf.mxu0
  %v3583 = vadd.f32 %v3385, %v3582
  %v3584 = vand.u32 %v2647, 4294901760
  %3585 = vmatmul.f32.gmra.mxu0 %v3584
  %v3586 = vpop.f32.mrf.mxu0
  %v3587 = vadd.f32 %v3391, %v3586
  %v3588 = vand.u32 %v2650, 4294901760
  %3589 = vmatmul.f32.gmra.mxu0 %v3588
  %v3590 = vpop.f32.mrf.mxu0
  %v3591 = vadd.f32 %v3397, %v3590
  %v3592 = vand.u32 %v2653, 4294901760
  %3593 = vmatmul.f32.gmra.mxu0 %v3592
  %v3594 = vpop.f32.mrf.mxu0
  %v3595 = vadd.f32 %v3403, %v3594
  %v3596 = vand.u32 %v2656, 4294901760
  %3597 = vmatmul.f32.gmra.mxu0 %v3596
  %v3598 = vpop.f32.mrf.mxu0
  %v3599 = vadd.f32 %v3409, %v3598
  %v3600 = vand.u32 %v2659, 4294901760
  %3601 = vmatmul.f32.gmra.mxu0 %v3600
  %v3602 = vpop.f32.mrf.mxu0
  %v3603 = vadd.f32 %v3415, %v3602
  %v3604 = vand.u32 %v2662, 4294901760
  %3605 = vmatmul.f32.gmra.mxu0 %v3604
  %v3606 = vpop.f32.mrf.mxu0
  %v3607 = vadd.f32 %v3421, %v3606
  %v3608 = vand.u32 %v2665, 4294901760
  %3609 = vmatmul.f32.gmra.mxu0 %v3608
  %v3610 = vpop.f32.mrf.mxu0
  %v3611 = vadd.f32 %v3427, %v3610
  %v3612 = vand.u32 %v2668, 4294901760
  %3613 = vmatmul.f32.gmra.mxu0 %v3612
  %v3614 = vpop.f32.mrf.mxu0
  %v3615 = vadd.f32 %v3433, %v3614
  %v3616 = vand.u32 %v2671, 4294901760
  %3617 = vmatmul.f32.gmra.mxu0 %v3616
  %v3618 = vpop.f32.mrf.mxu0
  %v3619 = vadd.f32 %v3439, %v3618
  %v3620 = vand.u32 %v2674, 4294901760
  %3621 = vmatmul.f32.gmra.mxu0 %v3620
  %v3622 = vpop.f32.mrf.mxu0
  %v3623 = vadd.f32 %v3445, %v3622
  %v3624 = vand.u32 %v2677, 4294901760
  %3625 = vmatmul.f32.gmra.mxu0 %v3624
  %v3626 = vpop.f32.mrf.mxu0
  %v3627 = vadd.f32 %v3451, %v3626
  %v3628 = vand.u32 %v2680, 4294901760
  %3629 = vmatmul.f32.gmra.mxu0 %v3628
  %v3630 = vpop.f32.mrf.mxu0
  %v3631 = vadd.f32 %v3457, %v3630
  %v3632 = vand.u32 %v2683, 4294901760
  %3633 = vmatmul.f32.gmra.mxu0 %v3632
  %v3634 = vpop.f32.mrf.mxu0
  %v3635 = vadd.f32 %v3463, %v3634
  %v3636 = vand.u32 %v2686, 4294901760
  %3637 = vmatmul.f32.gmra.mxu0 %v3636
  %v3638 = vpop.f32.mrf.mxu0
  %v3639 = vadd.f32 %v3469, %v3638
  %v3640 = vand.u32 %v2689, 4294901760
  %3641 = vmatmul.f32.gmra.mxu0 %v3640
  %v3642 = vpop.f32.mrf.mxu0
  %v3643 = vadd.f32 %v3475, %v3642
  %v3644 = vand.u32 %v2692, 4294901760
  %3645 = vmatmul.f32.gmra.mxu0 %v3644
  %v3646 = vpop.f32.mrf.mxu0
  %v3647 = vadd.f32 %v3481, %v3646
  %v3648 = vand.u32 %v2695, 4294901760
  %3649 = vmatmul.f32.gmra.mxu0 %v3648
  %v3650 = vpop.f32.mrf.mxu0
  %v3651 = vadd.f32 %v3487, %v3650
  %v3652 = vand.u32 %v2698, 4294901760
  %3653 = vmatmul.f32.gmra.mxu0 %v3652
  %v3654 = vpop.f32.mrf.mxu0
  %v3655 = vadd.f32 %v3493, %v3654
  %v3656 = vand.u32 %v2701, 4294901760
  %3657 = vmatmul.f32.gmra.mxu0 %v3656
  %v3658 = vpop.f32.mrf.mxu0
  %v3659 = vadd.f32 %v3499, %v3658
  %v3660 = vand.u32 %v2704, 4294901760
  %3661 = vmatmul.f32.gmra.mxu0 %v3660
  %v3662 = vpop.f32.mrf.mxu0
  %v3663 = vadd.f32 %v3505, %v3662
  %v3664 = vand.u32 %v2707, 4294901760
  %3665 = vmatmul.f32.gmra.mxu0 %v3664
  %v3666 = vpop.f32.mrf.mxu0
  %v3667 = vadd.f32 %v3511, %v3666
  %v3668 = vand.u32 %v2710, 4294901760
  %3669 = vmatmul.f32.gmra.mxu0 %v3668
  %v3670 = vpop.f32.mrf.mxu0
  %v3671 = vadd.f32 %v3517, %v3670
  %v3672 = vand.u32 %v2713, 4294901760
  %3673 = vmatmul.f32.gmra.mxu0 %v3672
  %v3674 = vpop.f32.mrf.mxu0
  %v3675 = vadd.f32 %v3523, %v3674
  %v3676 = vand.u32 %v2716, 4294901760
  %3677 = vmatmul.f32.gmra.mxu0 %v3676
  %v3678 = vpop.f32.mrf.mxu0
  %v3679 = vadd.f32 %v3529, %v3678
  %v3680 = vand.u32 %v2719, 4294901760
  %3681 = vmatmul.f32.gmra.mxu0 %v3680
  %v3682 = vpop.f32.mrf.mxu0
  %v3683 = vadd.f32 %v3535, %v3682
  %3684 = vdwg.mxu0
  %3685 = vmatpush.msra.mxu0 0.0
  %3686 = vmatpush.msra.mxu0 0.0
  %3687 = vmatpush.msra.mxu0 0.0
  %3688 = vmatpush.msra.mxu0 0.0
  %3689 = vmatpush.msra.mxu0 0.0
  %3690 = vmatpush.msra.mxu0 0.0
  %3691 = vmatpush.msra.mxu0 0.0
  %3692 = vmatpush.msra.mxu0 0.0
  %3693 = vmatpush.msra.mxu0 0.0
  %3694 = vmatpush.msra.mxu0 0.0
  %3695 = vmatpush.msra.mxu0 0.0
  %3696 = vmatpush.msra.mxu0 0.0
  %3697 = vmatpush.msra.mxu0 0.0
  %3698 = vmatpush.msra.mxu0 0.0
  %3699 = vmatpush.msra.mxu0 0.0
  %v3700 = vand.u32 %v2722, 4294901760
  %3701 = vmatpush.msra.mxu0 %v3700
  %v3702 = vand.u32 %v2626, 4294901760
  %3703 = vmatmul.f32.gmra.mxu0 %v3702
  %v3704 = vpop.f32.mrf.mxu0
  %v3705 = vadd.f32 %v3559, %v3704
  %v3706 = vand.u32 %v2629, 4294901760
  %3707 = vmatmul.f32.gmra.mxu0 %v3706
  %v3708 = vpop.f32.mrf.mxu0
  %v3709 = vadd.f32 %v3563, %v3708
  %v3710 = vand.u32 %v2632, 4294901760
  %3711 = vmatmul.f32.gmra.mxu0 %v3710
  %v3712 = vpop.f32.mrf.mxu0
  %v3713 = vadd.f32 %v3567, %v3712
  %v3714 = vand.u32 %v2635, 4294901760
  %3715 = vmatmul.f32.gmra.mxu0 %v3714
  %v3716 = vpop.f32.mrf.mxu0
  %v3717 = vadd.f32 %v3571, %v3716
  %v3718 = vand.u32 %v2638, 4294901760
  %3719 = vmatmul.f32.gmra.mxu0 %v3718
  %v3720 = vpop.f32.mrf.mxu0
  %v3721 = vadd.f32 %v3575, %v3720
  %v3722 = vand.u32 %v2641, 4294901760
  %3723 = vmatmul.f32.gmra.mxu0 %v3722
  %v3724 = vpop.f32.mrf.mxu0
  %v3725 = vadd.f32 %v3579, %v3724
  %v3726 = vand.u32 %v2644, 4294901760
  %3727 = vmatmul.f32.gmra.mxu0 %v3726
  %v3728 = vpop.f32.mrf.mxu0
  %v3729 = vadd.f32 %v3583, %v3728
  %v3730 = vand.u32 %v2647, 4294901760
  %3731 = vmatmul.f32.gmra.mxu0 %v3730
  %v3732 = vpop.f32.mrf.mxu0
  %v3733 = vadd.f32 %v3587, %v3732
  %v3734 = vand.u32 %v2650, 4294901760
  %3735 = vmatmul.f32.gmra.mxu0 %v3734
  %v3736 = vpop.f32.mrf.mxu0
  %v3737 = vadd.f32 %v3591, %v3736
  %v3738 = vand.u32 %v2653, 4294901760
  %3739 = vmatmul.f32.gmra.mxu0 %v3738
  %v3740 = vpop.f32.mrf.mxu0
  %v3741 = vadd.f32 %v3595, %v3740
  %v3742 = vand.u32 %v2656, 4294901760
  %3743 = vmatmul.f32.gmra.mxu0 %v3742
  %v3744 = vpop.f32.mrf.mxu0
  %v3745 = vadd.f32 %v3599, %v3744
  %v3746 = vand.u32 %v2659, 4294901760
  %3747 = vmatmul.f32.gmra.mxu0 %v3746
  %v3748 = vpop.f32.mrf.mxu0
  %v3749 = vadd.f32 %v3603, %v3748
  %v3750 = vand.u32 %v2662, 4294901760
  %3751 = vmatmul.f32.gmra.mxu0 %v3750
  %v3752 = vpop.f32.mrf.mxu0
  %v3753 = vadd.f32 %v3607, %v3752
  %v3754 = vand.u32 %v2665, 4294901760
  %3755 = vmatmul.f32.gmra.mxu0 %v3754
  %v3756 = vpop.f32.mrf.mxu0
  %v3757 = vadd.f32 %v3611, %v3756
  %v3758 = vand.u32 %v2668, 4294901760
  %3759 = vmatmul.f32.gmra.mxu0 %v3758
  %v3760 = vpop.f32.mrf.mxu0
  %v3761 = vadd.f32 %v3615, %v3760
  %v3762 = vand.u32 %v2671, 4294901760
  %3763 = vmatmul.f32.gmra.mxu0 %v3762
  %v3764 = vpop.f32.mrf.mxu0
  %v3765 = vadd.f32 %v3619, %v3764
  %v3766 = vand.u32 %v2674, 4294901760
  %3767 = vmatmul.f32.gmra.mxu0 %v3766
  %v3768 = vpop.f32.mrf.mxu0
  %v3769 = vadd.f32 %v3623, %v3768
  %v3770 = vand.u32 %v2677, 4294901760
  %3771 = vmatmul.f32.gmra.mxu0 %v3770
  %v3772 = vpop.f32.mrf.mxu0
  %v3773 = vadd.f32 %v3627, %v3772
  %v3774 = vand.u32 %v2680, 4294901760
  %3775 = vmatmul.f32.gmra.mxu0 %v3774
  %v3776 = vpop.f32.mrf.mxu0
  %v3777 = vadd.f32 %v3631, %v3776
  %v3778 = vand.u32 %v2683, 4294901760
  %3779 = vmatmul.f32.gmra.mxu0 %v3778
  %v3780 = vpop.f32.mrf.mxu0
  %v3781 = vadd.f32 %v3635, %v3780
  %v3782 = vand.u32 %v2686, 4294901760
  %3783 = vmatmul.f32.gmra.mxu0 %v3782
  %v3784 = vpop.f32.mrf.mxu0
  %v3785 = vadd.f32 %v3639, %v3784
  %v3786 = vand.u32 %v2689, 4294901760
  %3787 = vmatmul.f32.gmra.mxu0 %v3786
  %v3788 = vpop.f32.mrf.mxu0
  %v3789 = vadd.f32 %v3643, %v3788
  %v3790 = vand.u32 %v2692, 4294901760
  %3791 = vmatmul.f32.gmra.mxu0 %v3790
  %v3792 = vpop.f32.mrf.mxu0
  %v3793 = vadd.f32 %v3647, %v3792
  %v3794 = vand.u32 %v2695, 4294901760
  %3795 = vmatmul.f32.gmra.mxu0 %v3794
  %v3796 = vpop.f32.mrf.mxu0
  %v3797 = vadd.f32 %v3651, %v3796
  %v3798 = vand.u32 %v2698, 4294901760
  %3799 = vmatmul.f32.gmra.mxu0 %v3798
  %v3800 = vpop.f32.mrf.mxu0
  %v3801 = vadd.f32 %v3655, %v3800
  %v3802 = vand.u32 %v2701, 4294901760
  %3803 = vmatmul.f32.gmra.mxu0 %v3802
  %v3804 = vpop.f32.mrf.mxu0
  %v3805 = vadd.f32 %v3659, %v3804
  %v3806 = vand.u32 %v2704, 4294901760
  %3807 = vmatmul.f32.gmra.mxu0 %v3806
  %v3808 = vpop.f32.mrf.mxu0
  %v3809 = vadd.f32 %v3663, %v3808
  %v3810 = vand.u32 %v2707, 4294901760
  %3811 = vmatmul.f32.gmra.mxu0 %v3810
  %v3812 = vpop.f32.mrf.mxu0
  %v3813 = vadd.f32 %v3667, %v3812
  %v3814 = vand.u32 %v2710, 4294901760
  %3815 = vmatmul.f32.gmra.mxu0 %v3814
  %v3816 = vpop.f32.mrf.mxu0
  %v3817 = vadd.f32 %v3671, %v3816
  %v3818 = vand.u32 %v2713, 4294901760
  %3819 = vmatmul.f32.gmra.mxu0 %v3818
  %v3820 = vpop.f32.mrf.mxu0
  %v3821 = vadd.f32 %v3675, %v3820
  %v3822 = vand.u32 %v2716, 4294901760
  %3823 = vmatmul.f32.gmra.mxu0 %v3822
  %v3824 = vpop.f32.mrf.mxu0
  %v3825 = vadd.f32 %v3679, %v3824
  %v3826 = vand.u32 %v2719, 4294901760
  %3827 = vmatmul.f32.gmra.mxu0 %v3826
  %v3828 = vpop.f32.mrf.mxu0
  %v3829 = vadd.f32 %v3683, %v3828
  %3830 = vdwg.mxu0
  %3831 = vset.pattern.permute.xlu0 2
  %3832 = vperm.xlu0 %3831, %v965
  %v3833 = vpop.permute.xlu0 %3832
  %3834 = vset.pattern.permute.xlu0 2
  %3835 = vperm.xlu0 %3834, %v967
  %v3836 = vpop.permute.xlu0 %3835
  %3837 = vset.pattern.permute.xlu0 2
  %3838 = vperm.xlu0 %3837, %v969
  %v3839 = vpop.permute.xlu0 %3838
  %3840 = vset.pattern.permute.xlu0 2
  %3841 = vperm.xlu0 %3840, %v971
  %v3842 = vpop.permute.xlu0 %3841
  %3843 = vset.pattern.permute.xlu0 2
  %3844 = vperm.xlu0 %3843, %v973
  %v3845 = vpop.permute.xlu0 %3844
  %3846 = vset.pattern.permute.xlu0 2
  %3847 = vperm.xlu0 %3846, %v975
  %v3848 = vpop.permute.xlu0 %3847
  %3849 = vset.pattern.permute.xlu0 2
  %3850 = vperm.xlu0 %3849, %v977
  %v3851 = vpop.permute.xlu0 %3850
  %3852 = vset.pattern.permute.xlu0 2
  %3853 = vperm.xlu0 %3852, %v979
  %v3854 = vpop.permute.xlu0 %3853
  %3855 = vset.pattern.permute.xlu0 2
  %3856 = vperm.xlu0 %3855, %v981
  %v3857 = vpop.permute.xlu0 %3856
  %3858 = vset.pattern.permute.xlu0 2
  %3859 = vperm.xlu0 %3858, %v983
  %v3860 = vpop.permute.xlu0 %3859
  %3861 = vset.pattern.permute.xlu0 2
  %3862 = vperm.xlu0 %3861, %v985
  %v3863 = vpop.permute.xlu0 %3862
  %3864 = vset.pattern.permute.xlu0 2
  %3865 = vperm.xlu0 %3864, %v987
  %v3866 = vpop.permute.xlu0 %3865
  %3867 = vset.pattern.permute.xlu0 2
  %3868 = vperm.xlu0 %3867, %v989
  %v3869 = vpop.permute.xlu0 %3868
  %3870 = vset.pattern.permute.xlu0 2
  %3871 = vperm.xlu0 %3870, %v991
  %v3872 = vpop.permute.xlu0 %3871
  %3873 = vset.pattern.permute.xlu0 2
  %3874 = vperm.xlu0 %3873, %v993
  %v3875 = vpop.permute.xlu0 %3874
  %3876 = vset.pattern.permute.xlu0 2
  %3877 = vperm.xlu0 %3876, %v995
  %v3878 = vpop.permute.xlu0 %3877
  %3879 = vset.pattern.permute.xlu0 2
  %3880 = vperm.xlu0 %3879, %v997
  %v3881 = vpop.permute.xlu0 %3880
  %3882 = vset.pattern.permute.xlu0 2
  %3883 = vperm.xlu0 %3882, %v999
  %v3884 = vpop.permute.xlu0 %3883
  %3885 = vset.pattern.permute.xlu0 2
  %3886 = vperm.xlu0 %3885, %v1001
  %v3887 = vpop.permute.xlu0 %3886
  %3888 = vset.pattern.permute.xlu0 2
  %3889 = vperm.xlu0 %3888, %v1003
  %v3890 = vpop.permute.xlu0 %3889
  %3891 = vset.pattern.permute.xlu0 2
  %3892 = vperm.xlu0 %3891, %v1005
  %v3893 = vpop.permute.xlu0 %3892
  %3894 = vset.pattern.permute.xlu0 2
  %3895 = vperm.xlu0 %3894, %v1007
  %v3896 = vpop.permute.xlu0 %3895
  %3897 = vset.pattern.permute.xlu0 2
  %3898 = vperm.xlu0 %3897, %v1009
  %v3899 = vpop.permute.xlu0 %3898
  %3900 = vset.pattern.permute.xlu0 2
  %3901 = vperm.xlu0 %3900, %v1011
  %v3902 = vpop.permute.xlu0 %3901
  %3903 = vset.pattern.permute.xlu0 2
  %3904 = vperm.xlu0 %3903, %v1013
  %v3905 = vpop.permute.xlu0 %3904
  %3906 = vset.pattern.permute.xlu0 2
  %3907 = vperm.xlu0 %3906, %v1015
  %v3908 = vpop.permute.xlu0 %3907
  %3909 = vset.pattern.permute.xlu0 2
  %3910 = vperm.xlu0 %3909, %v1017
  %v3911 = vpop.permute.xlu0 %3910
  %3912 = vset.pattern.permute.xlu0 2
  %3913 = vperm.xlu0 %3912, %v1019
  %v3914 = vpop.permute.xlu0 %3913
  %3915 = vset.pattern.permute.xlu0 2
  %3916 = vperm.xlu0 %3915, %v1021
  %v3917 = vpop.permute.xlu0 %3916
  %3918 = vset.pattern.permute.xlu0 2
  %3919 = vperm.xlu0 %3918, %v1023
  %v3920 = vpop.permute.xlu0 %3919
  %3921 = vset.pattern.permute.xlu0 2
  %3922 = vperm.xlu0 %3921, %v1025
  %v3923 = vpop.permute.xlu0 %3922
  %3924 = vset.pattern.permute.xlu0 2
  %3925 = vperm.xlu0 %3924, %v1027
  %v3926 = vpop.permute.xlu0 %3925
  %vm3927 = vcmp.eq.s32.totalorder %v3833, %v1029
  %vm3928 = vcmp.eq.s32.totalorder %v3836, %v1029
  %vm3929 = vcmp.eq.s32.totalorder %v3839, %v1029
  %vm3930 = vcmp.eq.s32.totalorder %v3842, %v1029
  %vm3931 = vcmp.eq.s32.totalorder %v3845, %v1029
  %vm3932 = vcmp.eq.s32.totalorder %v3848, %v1029
  %vm3933 = vcmp.eq.s32.totalorder %v3851, %v1029
  %vm3934 = vcmp.eq.s32.totalorder %v3854, %v1029
  %vm3935 = vcmp.eq.s32.totalorder %v3857, %v1029
  %vm3936 = vcmp.eq.s32.totalorder %v3860, %v1029
  %vm3937 = vcmp.eq.s32.totalorder %v3863, %v1029
  %vm3938 = vcmp.eq.s32.totalorder %v3866, %v1029
  %vm3939 = vcmp.eq.s32.totalorder %v3869, %v1029
  %vm3940 = vcmp.eq.s32.totalorder %v3872, %v1029
  %vm3941 = vcmp.eq.s32.totalorder %v3875, %v1029
  %vm3942 = vcmp.eq.s32.totalorder %v3878, %v1029
  %vm3943 = vcmp.eq.s32.totalorder %v3881, %v1029
  %vm3944 = vcmp.eq.s32.totalorder %v3884, %v1029
  %vm3945 = vcmp.eq.s32.totalorder %v3887, %v1029
  %vm3946 = vcmp.eq.s32.totalorder %v3890, %v1029
  %vm3947 = vcmp.eq.s32.totalorder %v3893, %v1029
  %vm3948 = vcmp.eq.s32.totalorder %v3896, %v1029
  %vm3949 = vcmp.eq.s32.totalorder %v3899, %v1029
  %vm3950 = vcmp.eq.s32.totalorder %v3902, %v1029
  %vm3951 = vcmp.eq.s32.totalorder %v3905, %v1029
  %vm3952 = vcmp.eq.s32.totalorder %v3908, %v1029
  %vm3953 = vcmp.eq.s32.totalorder %v3911, %v1029
  %vm3954 = vcmp.eq.s32.totalorder %v3914, %v1029
  %vm3955 = vcmp.eq.s32.totalorder %v3917, %v1029
  %vm3956 = vcmp.eq.s32.totalorder %v3920, %v1029
  %vm3957 = vcmp.eq.s32.totalorder %v3923, %v1029
  %vm3958 = vcmp.eq.s32.totalorder %v3926, %v1029
  %v3959 = vsel %vm3927, 1, 0
  %v3960 = vsel %vm3928, 1, 0
  %v3961 = vsel %vm3929, 1, 0
  %v3962 = vsel %vm3930, 1, 0
  %v3963 = vsel %vm3931, 1, 0
  %v3964 = vsel %vm3932, 1, 0
  %v3965 = vsel %vm3933, 1, 0
  %v3966 = vsel %vm3934, 1, 0
  %v3967 = vsel %vm3935, 1, 0
  %v3968 = vsel %vm3936, 1, 0
  %v3969 = vsel %vm3937, 1, 0
  %v3970 = vsel %vm3938, 1, 0
  %v3971 = vsel %vm3939, 1, 0
  %v3972 = vsel %vm3940, 1, 0
  %v3973 = vsel %vm3941, 1, 0
  %v3974 = vsel %vm3942, 1, 0
  %v3975 = vsel %vm3943, 1, 0
  %v3976 = vsel %vm3944, 1, 0
  %v3977 = vsel %vm3945, 1, 0
  %v3978 = vsel %vm3946, 1, 0
  %v3979 = vsel %vm3947, 1, 0
  %v3980 = vsel %vm3948, 1, 0
  %v3981 = vsel %vm3949, 1, 0
  %v3982 = vsel %vm3950, 1, 0
  %v3983 = vsel %vm3951, 1, 0
  %v3984 = vsel %vm3952, 1, 0
  %v3985 = vsel %vm3953, 1, 0
  %v3986 = vsel %vm3954, 1, 0
  %v3987 = vsel %vm3955, 1, 0
  %v3988 = vsel %vm3956, 1, 0
  %v3989 = vsel %vm3957, 1, 0
  %v3990 = vsel %vm3958, 1, 0
  %v3991 = vcvt.s32.f32 %v3959
  %v3992 = vcvt.s32.f32 %v3960
  %v3993 = vcvt.s32.f32 %v3961
  %v3994 = vcvt.s32.f32 %v3962
  %v3995 = vcvt.s32.f32 %v3963
  %v3996 = vcvt.s32.f32 %v3964
  %v3997 = vcvt.s32.f32 %v3965
  %v3998 = vcvt.s32.f32 %v3966
  %v3999 = vcvt.s32.f32 %v3967
  %v4000 = vcvt.s32.f32 %v3968
  %v4001 = vcvt.s32.f32 %v3969
  %v4002 = vcvt.s32.f32 %v3970
  %v4003 = vcvt.s32.f32 %v3971
  %v4004 = vcvt.s32.f32 %v3972
  %v4005 = vcvt.s32.f32 %v3973
  %v4006 = vcvt.s32.f32 %v3974
  %v4007 = vcvt.s32.f32 %v3975
  %v4008 = vcvt.s32.f32 %v3976
  %v4009 = vcvt.s32.f32 %v3977
  %v4010 = vcvt.s32.f32 %v3978
  %v4011 = vcvt.s32.f32 %v3979
  %v4012 = vcvt.s32.f32 %v3980
  %v4013 = vcvt.s32.f32 %v3981
  %v4014 = vcvt.s32.f32 %v3982
  %v4015 = vcvt.s32.f32 %v3983
  %v4016 = vcvt.s32.f32 %v3984
  %v4017 = vcvt.s32.f32 %v3985
  %v4018 = vcvt.s32.f32 %v3986
  %v4019 = vcvt.s32.f32 %v3987
  %v4020 = vcvt.s32.f32 %v3988
  %v4021 = vcvt.s32.f32 %v3989
  %v4022 = vcvt.s32.f32 %v3990
  %s4023 = scalar_lea.vmem %s4, 16
  %v4024 = vld [vmem:[%s4023] sm:$0x1f]
  %v4026 = vsel %vm1223, %v3991, 0
  %v4029 = vsel %vm1223, %v3992, 0
  %v4032 = vsel %vm1223, %v3993, 0
  %v4035 = vsel %vm1223, %v3994, 0
  %v4038 = vsel %vm1223, %v3995, 0
  %v4041 = vsel %vm1223, %v3996, 0
  %v4044 = vsel %vm1223, %v3997, 0
  %v4047 = vsel %vm1223, %v3998, 0
  %v4050 = vsel %vm1223, %v3999, 0
  %v4053 = vsel %vm1223, %v4000, 0
  %v4056 = vsel %vm1223, %v4001, 0
  %v4059 = vsel %vm1223, %v4002, 0
  %v4062 = vsel %vm1223, %v4003, 0
  %v4065 = vsel %vm1223, %v4004, 0
  %v4068 = vsel %vm1223, %v4005, 0
  %v4071 = vsel %vm1223, %v4006, 0
  %v4074 = vsel %vm1223, %v4007, 0
  %v4077 = vsel %vm1223, %v4008, 0
  %v4080 = vsel %vm1223, %v4009, 0
  %v4083 = vsel %vm1223, %v4010, 0
  %v4086 = vsel %vm1223, %v4011, 0
  %v4089 = vsel %vm1223, %v4012, 0
  %v4092 = vsel %vm1223, %v4013, 0
  %v4095 = vsel %vm1223, %v4014, 0
  %v4098 = vsel %vm1223, %v4015, 0
  %v4101 = vsel %vm1223, %v4016, 0
  %v4104 = vsel %vm1223, %v4017, 0
  %v4107 = vsel %vm1223, %v4018, 0
  %v4110 = vsel %vm1223, %v4019, 0
  %v4113 = vsel %vm1223, %v4020, 0
  %v4116 = vsel %vm1223, %v4021, 0
  %v4119 = vsel %vm1223, %v4022, 0
  %v4122 = vsel %vm1320, %v4024, 0
  %4124 = vmatpush.msra.mxu0 0.0
  %4125 = vmatpush.msra.mxu0 0.0
  %4126 = vmatpush.msra.mxu0 0.0
  %4127 = vmatpush.msra.mxu0 0.0
  %4128 = vmatpush.msra.mxu0 0.0
  %4129 = vmatpush.msra.mxu0 0.0
  %4130 = vmatpush.msra.mxu0 0.0
  %4131 = vmatpush.msra.mxu0 0.0
  %4132 = vmatpush.msra.mxu0 0.0
  %4133 = vmatpush.msra.mxu0 0.0
  %4134 = vmatpush.msra.mxu0 0.0
  %4135 = vmatpush.msra.mxu0 0.0
  %4136 = vmatpush.msra.mxu0 0.0
  %4137 = vmatpush.msra.mxu0 0.0
  %4138 = vmatpush.msra.mxu0 0.0
  %v4139 = vand.u32 %v4122, 4294901760
  %4140 = vmatpush.msra.mxu0 %v4139
  %v4141 = vand.u32 %v4026, 4294901760
  %v4142 = vsub.f32 %v4026, %v4141
  %v4143 = vand.u32 %v4142, 4294901760
  %v4144 = vsub.f32 %v4142, %v4143
  %v4145 = vand.u32 %v4144, 4294901760
  %4146 = vmatmul.f32.gmra.mxu0 %v4145
  %v4147 = vpop.f32.mrf.mxu0
  %v4148 = vadd.f32 0.0, %v4147
  %v4149 = vand.u32 %v4029, 4294901760
  %v4150 = vsub.f32 %v4029, %v4149
  %v4151 = vand.u32 %v4150, 4294901760
  %v4152 = vsub.f32 %v4150, %v4151
  %v4153 = vand.u32 %v4152, 4294901760
  %4154 = vmatmul.f32.gmra.mxu0 %v4153
  %v4155 = vpop.f32.mrf.mxu0
  %v4156 = vadd.f32 0.0, %v4155
  %v4157 = vand.u32 %v4032, 4294901760
  %v4158 = vsub.f32 %v4032, %v4157
  %v4159 = vand.u32 %v4158, 4294901760
  %v4160 = vsub.f32 %v4158, %v4159
  %v4161 = vand.u32 %v4160, 4294901760
  %4162 = vmatmul.f32.gmra.mxu0 %v4161
  %v4163 = vpop.f32.mrf.mxu0
  %v4164 = vadd.f32 0.0, %v4163
  %v4165 = vand.u32 %v4035, 4294901760
  %v4166 = vsub.f32 %v4035, %v4165
  %v4167 = vand.u32 %v4166, 4294901760
  %v4168 = vsub.f32 %v4166, %v4167
  %v4169 = vand.u32 %v4168, 4294901760
  %4170 = vmatmul.f32.gmra.mxu0 %v4169
  %v4171 = vpop.f32.mrf.mxu0
  %v4172 = vadd.f32 0.0, %v4171
  %v4173 = vand.u32 %v4038, 4294901760
  %v4174 = vsub.f32 %v4038, %v4173
  %v4175 = vand.u32 %v4174, 4294901760
  %v4176 = vsub.f32 %v4174, %v4175
  %v4177 = vand.u32 %v4176, 4294901760
  %4178 = vmatmul.f32.gmra.mxu0 %v4177
  %v4179 = vpop.f32.mrf.mxu0
  %v4180 = vadd.f32 0.0, %v4179
  %v4181 = vand.u32 %v4041, 4294901760
  %v4182 = vsub.f32 %v4041, %v4181
  %v4183 = vand.u32 %v4182, 4294901760
  %v4184 = vsub.f32 %v4182, %v4183
  %v4185 = vand.u32 %v4184, 4294901760
  %4186 = vmatmul.f32.gmra.mxu0 %v4185
  %v4187 = vpop.f32.mrf.mxu0
  %v4188 = vadd.f32 0.0, %v4187
  %v4189 = vand.u32 %v4044, 4294901760
  %v4190 = vsub.f32 %v4044, %v4189
  %v4191 = vand.u32 %v4190, 4294901760
  %v4192 = vsub.f32 %v4190, %v4191
  %v4193 = vand.u32 %v4192, 4294901760
  %4194 = vmatmul.f32.gmra.mxu0 %v4193
  %v4195 = vpop.f32.mrf.mxu0
  %v4196 = vadd.f32 0.0, %v4195
  %v4197 = vand.u32 %v4047, 4294901760
  %v4198 = vsub.f32 %v4047, %v4197
  %v4199 = vand.u32 %v4198, 4294901760
  %v4200 = vsub.f32 %v4198, %v4199
  %v4201 = vand.u32 %v4200, 4294901760
  %4202 = vmatmul.f32.gmra.mxu0 %v4201
  %v4203 = vpop.f32.mrf.mxu0
  %v4204 = vadd.f32 0.0, %v4203
  %v4205 = vand.u32 %v4050, 4294901760
  %v4206 = vsub.f32 %v4050, %v4205
  %v4207 = vand.u32 %v4206, 4294901760
  %v4208 = vsub.f32 %v4206, %v4207
  %v4209 = vand.u32 %v4208, 4294901760
  %4210 = vmatmul.f32.gmra.mxu0 %v4209
  %v4211 = vpop.f32.mrf.mxu0
  %v4212 = vadd.f32 0.0, %v4211
  %v4213 = vand.u32 %v4053, 4294901760
  %v4214 = vsub.f32 %v4053, %v4213
  %v4215 = vand.u32 %v4214, 4294901760
  %v4216 = vsub.f32 %v4214, %v4215
  %v4217 = vand.u32 %v4216, 4294901760
  %4218 = vmatmul.f32.gmra.mxu0 %v4217
  %v4219 = vpop.f32.mrf.mxu0
  %v4220 = vadd.f32 0.0, %v4219
  %v4221 = vand.u32 %v4056, 4294901760
  %v4222 = vsub.f32 %v4056, %v4221
  %v4223 = vand.u32 %v4222, 4294901760
  %v4224 = vsub.f32 %v4222, %v4223
  %v4225 = vand.u32 %v4224, 4294901760
  %4226 = vmatmul.f32.gmra.mxu0 %v4225
  %v4227 = vpop.f32.mrf.mxu0
  %v4228 = vadd.f32 0.0, %v4227
  %v4229 = vand.u32 %v4059, 4294901760
  %v4230 = vsub.f32 %v4059, %v4229
  %v4231 = vand.u32 %v4230, 4294901760
  %v4232 = vsub.f32 %v4230, %v4231
  %v4233 = vand.u32 %v4232, 4294901760
  %4234 = vmatmul.f32.gmra.mxu0 %v4233
  %v4235 = vpop.f32.mrf.mxu0
  %v4236 = vadd.f32 0.0, %v4235
  %v4237 = vand.u32 %v4062, 4294901760
  %v4238 = vsub.f32 %v4062, %v4237
  %v4239 = vand.u32 %v4238, 4294901760
  %v4240 = vsub.f32 %v4238, %v4239
  %v4241 = vand.u32 %v4240, 4294901760
  %4242 = vmatmul.f32.gmra.mxu0 %v4241
  %v4243 = vpop.f32.mrf.mxu0
  %v4244 = vadd.f32 0.0, %v4243
  %v4245 = vand.u32 %v4065, 4294901760
  %v4246 = vsub.f32 %v4065, %v4245
  %v4247 = vand.u32 %v4246, 4294901760
  %v4248 = vsub.f32 %v4246, %v4247
  %v4249 = vand.u32 %v4248, 4294901760
  %4250 = vmatmul.f32.gmra.mxu0 %v4249
  %v4251 = vpop.f32.mrf.mxu0
  %v4252 = vadd.f32 0.0, %v4251
  %v4253 = vand.u32 %v4068, 4294901760
  %v4254 = vsub.f32 %v4068, %v4253
  %v4255 = vand.u32 %v4254, 4294901760
  %v4256 = vsub.f32 %v4254, %v4255
  %v4257 = vand.u32 %v4256, 4294901760
  %4258 = vmatmul.f32.gmra.mxu0 %v4257
  %v4259 = vpop.f32.mrf.mxu0
  %v4260 = vadd.f32 0.0, %v4259
  %v4261 = vand.u32 %v4071, 4294901760
  %v4262 = vsub.f32 %v4071, %v4261
  %v4263 = vand.u32 %v4262, 4294901760
  %v4264 = vsub.f32 %v4262, %v4263
  %v4265 = vand.u32 %v4264, 4294901760
  %4266 = vmatmul.f32.gmra.mxu0 %v4265
  %v4267 = vpop.f32.mrf.mxu0
  %v4268 = vadd.f32 0.0, %v4267
  %v4269 = vand.u32 %v4074, 4294901760
  %v4270 = vsub.f32 %v4074, %v4269
  %v4271 = vand.u32 %v4270, 4294901760
  %v4272 = vsub.f32 %v4270, %v4271
  %v4273 = vand.u32 %v4272, 4294901760
  %4274 = vmatmul.f32.gmra.mxu0 %v4273
  %v4275 = vpop.f32.mrf.mxu0
  %v4276 = vadd.f32 0.0, %v4275
  %v4277 = vand.u32 %v4077, 4294901760
  %v4278 = vsub.f32 %v4077, %v4277
  %v4279 = vand.u32 %v4278, 4294901760
  %v4280 = vsub.f32 %v4278, %v4279
  %v4281 = vand.u32 %v4280, 4294901760
  %4282 = vmatmul.f32.gmra.mxu0 %v4281
  %v4283 = vpop.f32.mrf.mxu0
  %v4284 = vadd.f32 0.0, %v4283
  %v4285 = vand.u32 %v4080, 4294901760
  %v4286 = vsub.f32 %v4080, %v4285
  %v4287 = vand.u32 %v4286, 4294901760
  %v4288 = vsub.f32 %v4286, %v4287
  %v4289 = vand.u32 %v4288, 4294901760
  %4290 = vmatmul.f32.gmra.mxu0 %v4289
  %v4291 = vpop.f32.mrf.mxu0
  %v4292 = vadd.f32 0.0, %v4291
  %v4293 = vand.u32 %v4083, 4294901760
  %v4294 = vsub.f32 %v4083, %v4293
  %v4295 = vand.u32 %v4294, 4294901760
  %v4296 = vsub.f32 %v4294, %v4295
  %v4297 = vand.u32 %v4296, 4294901760
  %4298 = vmatmul.f32.gmra.mxu0 %v4297
  %v4299 = vpop.f32.mrf.mxu0
  %v4300 = vadd.f32 0.0, %v4299
  %v4301 = vand.u32 %v4086, 4294901760
  %v4302 = vsub.f32 %v4086, %v4301
  %v4303 = vand.u32 %v4302, 4294901760
  %v4304 = vsub.f32 %v4302, %v4303
  %v4305 = vand.u32 %v4304, 4294901760
  %4306 = vmatmul.f32.gmra.mxu0 %v4305
  %v4307 = vpop.f32.mrf.mxu0
  %v4308 = vadd.f32 0.0, %v4307
  %v4309 = vand.u32 %v4089, 4294901760
  %v4310 = vsub.f32 %v4089, %v4309
  %v4311 = vand.u32 %v4310, 4294901760
  %v4312 = vsub.f32 %v4310, %v4311
  %v4313 = vand.u32 %v4312, 4294901760
  %4314 = vmatmul.f32.gmra.mxu0 %v4313
  %v4315 = vpop.f32.mrf.mxu0
  %v4316 = vadd.f32 0.0, %v4315
  %v4317 = vand.u32 %v4092, 4294901760
  %v4318 = vsub.f32 %v4092, %v4317
  %v4319 = vand.u32 %v4318, 4294901760
  %v4320 = vsub.f32 %v4318, %v4319
  %v4321 = vand.u32 %v4320, 4294901760
  %4322 = vmatmul.f32.gmra.mxu0 %v4321
  %v4323 = vpop.f32.mrf.mxu0
  %v4324 = vadd.f32 0.0, %v4323
  %v4325 = vand.u32 %v4095, 4294901760
  %v4326 = vsub.f32 %v4095, %v4325
  %v4327 = vand.u32 %v4326, 4294901760
  %v4328 = vsub.f32 %v4326, %v4327
  %v4329 = vand.u32 %v4328, 4294901760
  %4330 = vmatmul.f32.gmra.mxu0 %v4329
  %v4331 = vpop.f32.mrf.mxu0
  %v4332 = vadd.f32 0.0, %v4331
  %v4333 = vand.u32 %v4098, 4294901760
  %v4334 = vsub.f32 %v4098, %v4333
  %v4335 = vand.u32 %v4334, 4294901760
  %v4336 = vsub.f32 %v4334, %v4335
  %v4337 = vand.u32 %v4336, 4294901760
  %4338 = vmatmul.f32.gmra.mxu0 %v4337
  %v4339 = vpop.f32.mrf.mxu0
  %v4340 = vadd.f32 0.0, %v4339
  %v4341 = vand.u32 %v4101, 4294901760
  %v4342 = vsub.f32 %v4101, %v4341
  %v4343 = vand.u32 %v4342, 4294901760
  %v4344 = vsub.f32 %v4342, %v4343
  %v4345 = vand.u32 %v4344, 4294901760
  %4346 = vmatmul.f32.gmra.mxu0 %v4345
  %v4347 = vpop.f32.mrf.mxu0
  %v4348 = vadd.f32 0.0, %v4347
  %v4349 = vand.u32 %v4104, 4294901760
  %v4350 = vsub.f32 %v4104, %v4349
  %v4351 = vand.u32 %v4350, 4294901760
  %v4352 = vsub.f32 %v4350, %v4351
  %v4353 = vand.u32 %v4352, 4294901760
  %4354 = vmatmul.f32.gmra.mxu0 %v4353
  %v4355 = vpop.f32.mrf.mxu0
  %v4356 = vadd.f32 0.0, %v4355
  %v4357 = vand.u32 %v4107, 4294901760
  %v4358 = vsub.f32 %v4107, %v4357
  %v4359 = vand.u32 %v4358, 4294901760
  %v4360 = vsub.f32 %v4358, %v4359
  %v4361 = vand.u32 %v4360, 4294901760
  %4362 = vmatmul.f32.gmra.mxu0 %v4361
  %v4363 = vpop.f32.mrf.mxu0
  %v4364 = vadd.f32 0.0, %v4363
  %v4365 = vand.u32 %v4110, 4294901760
  %v4366 = vsub.f32 %v4110, %v4365
  %v4367 = vand.u32 %v4366, 4294901760
  %v4368 = vsub.f32 %v4366, %v4367
  %v4369 = vand.u32 %v4368, 4294901760
  %4370 = vmatmul.f32.gmra.mxu0 %v4369
  %v4371 = vpop.f32.mrf.mxu0
  %v4372 = vadd.f32 0.0, %v4371
  %v4373 = vand.u32 %v4113, 4294901760
  %v4374 = vsub.f32 %v4113, %v4373
  %v4375 = vand.u32 %v4374, 4294901760
  %v4376 = vsub.f32 %v4374, %v4375
  %v4377 = vand.u32 %v4376, 4294901760
  %4378 = vmatmul.f32.gmra.mxu0 %v4377
  %v4379 = vpop.f32.mrf.mxu0
  %v4380 = vadd.f32 0.0, %v4379
  %v4381 = vand.u32 %v4116, 4294901760
  %v4382 = vsub.f32 %v4116, %v4381
  %v4383 = vand.u32 %v4382, 4294901760
  %v4384 = vsub.f32 %v4382, %v4383
  %v4385 = vand.u32 %v4384, 4294901760
  %4386 = vmatmul.f32.gmra.mxu0 %v4385
  %v4387 = vpop.f32.mrf.mxu0
  %v4388 = vadd.f32 0.0, %v4387
  %v4389 = vand.u32 %v4119, 4294901760
  %v4390 = vsub.f32 %v4119, %v4389
  %v4391 = vand.u32 %v4390, 4294901760
  %v4392 = vsub.f32 %v4390, %v4391
  %v4393 = vand.u32 %v4392, 4294901760
  %4394 = vmatmul.f32.gmra.mxu0 %v4393
  %v4395 = vpop.f32.mrf.mxu0
  %v4396 = vadd.f32 0.0, %v4395
  %4397 = vdwg.mxu0
  %4398 = vmatpush.msra.mxu0 0.0
  %4399 = vmatpush.msra.mxu0 0.0
  %4400 = vmatpush.msra.mxu0 0.0
  %4401 = vmatpush.msra.mxu0 0.0
  %4402 = vmatpush.msra.mxu0 0.0
  %4403 = vmatpush.msra.mxu0 0.0
  %4404 = vmatpush.msra.mxu0 0.0
  %4405 = vmatpush.msra.mxu0 0.0
  %4406 = vmatpush.msra.mxu0 0.0
  %4407 = vmatpush.msra.mxu0 0.0
  %4408 = vmatpush.msra.mxu0 0.0
  %4409 = vmatpush.msra.mxu0 0.0
  %4410 = vmatpush.msra.mxu0 0.0
  %4411 = vmatpush.msra.mxu0 0.0
  %4412 = vmatpush.msra.mxu0 0.0
  %v4413 = vand.u32 %v4122, 4294901760
  %v4414 = vsub.f32 %v4122, %v4413
  %v4415 = vand.u32 %v4414, 4294901760
  %v4416 = vsub.f32 %v4414, %v4415
  %v4417 = vand.u32 %v4416, 4294901760
  %4418 = vmatpush.msra.mxu0 %v4417
  %v4419 = vand.u32 %v4026, 4294901760
  %4420 = vmatmul.f32.gmra.mxu0 %v4419
  %v4421 = vpop.f32.mrf.mxu0
  %v4422 = vadd.f32 %v4148, %v4421
  %v4423 = vand.u32 %v4029, 4294901760
  %4424 = vmatmul.f32.gmra.mxu0 %v4423
  %v4425 = vpop.f32.mrf.mxu0
  %v4426 = vadd.f32 %v4156, %v4425
  %v4427 = vand.u32 %v4032, 4294901760
  %4428 = vmatmul.f32.gmra.mxu0 %v4427
  %v4429 = vpop.f32.mrf.mxu0
  %v4430 = vadd.f32 %v4164, %v4429
  %v4431 = vand.u32 %v4035, 4294901760
  %4432 = vmatmul.f32.gmra.mxu0 %v4431
  %v4433 = vpop.f32.mrf.mxu0
  %v4434 = vadd.f32 %v4172, %v4433
  %v4435 = vand.u32 %v4038, 4294901760
  %4436 = vmatmul.f32.gmra.mxu0 %v4435
  %v4437 = vpop.f32.mrf.mxu0
  %v4438 = vadd.f32 %v4180, %v4437
  %v4439 = vand.u32 %v4041, 4294901760
  %4440 = vmatmul.f32.gmra.mxu0 %v4439
  %v4441 = vpop.f32.mrf.mxu0
  %v4442 = vadd.f32 %v4188, %v4441
  %v4443 = vand.u32 %v4044, 4294901760
  %4444 = vmatmul.f32.gmra.mxu0 %v4443
  %v4445 = vpop.f32.mrf.mxu0
  %v4446 = vadd.f32 %v4196, %v4445
  %v4447 = vand.u32 %v4047, 4294901760
  %4448 = vmatmul.f32.gmra.mxu0 %v4447
  %v4449 = vpop.f32.mrf.mxu0
  %v4450 = vadd.f32 %v4204, %v4449
  %v4451 = vand.u32 %v4050, 4294901760
  %4452 = vmatmul.f32.gmra.mxu0 %v4451
  %v4453 = vpop.f32.mrf.mxu0
  %v4454 = vadd.f32 %v4212, %v4453
  %v4455 = vand.u32 %v4053, 4294901760
  %4456 = vmatmul.f32.gmra.mxu0 %v4455
  %v4457 = vpop.f32.mrf.mxu0
  %v4458 = vadd.f32 %v4220, %v4457
  %v4459 = vand.u32 %v4056, 4294901760
  %4460 = vmatmul.f32.gmra.mxu0 %v4459
  %v4461 = vpop.f32.mrf.mxu0
  %v4462 = vadd.f32 %v4228, %v4461
  %v4463 = vand.u32 %v4059, 4294901760
  %4464 = vmatmul.f32.gmra.mxu0 %v4463
  %v4465 = vpop.f32.mrf.mxu0
  %v4466 = vadd.f32 %v4236, %v4465
  %v4467 = vand.u32 %v4062, 4294901760
  %4468 = vmatmul.f32.gmra.mxu0 %v4467
  %v4469 = vpop.f32.mrf.mxu0
  %v4470 = vadd.f32 %v4244, %v4469
  %v4471 = vand.u32 %v4065, 4294901760
  %4472 = vmatmul.f32.gmra.mxu0 %v4471
  %v4473 = vpop.f32.mrf.mxu0
  %v4474 = vadd.f32 %v4252, %v4473
  %v4475 = vand.u32 %v4068, 4294901760
  %4476 = vmatmul.f32.gmra.mxu0 %v4475
  %v4477 = vpop.f32.mrf.mxu0
  %v4478 = vadd.f32 %v4260, %v4477
  %v4479 = vand.u32 %v4071, 4294901760
  %4480 = vmatmul.f32.gmra.mxu0 %v4479
  %v4481 = vpop.f32.mrf.mxu0
  %v4482 = vadd.f32 %v4268, %v4481
  %v4483 = vand.u32 %v4074, 4294901760
  %4484 = vmatmul.f32.gmra.mxu0 %v4483
  %v4485 = vpop.f32.mrf.mxu0
  %v4486 = vadd.f32 %v4276, %v4485
  %v4487 = vand.u32 %v4077, 4294901760
  %4488 = vmatmul.f32.gmra.mxu0 %v4487
  %v4489 = vpop.f32.mrf.mxu0
  %v4490 = vadd.f32 %v4284, %v4489
  %v4491 = vand.u32 %v4080, 4294901760
  %4492 = vmatmul.f32.gmra.mxu0 %v4491
  %v4493 = vpop.f32.mrf.mxu0
  %v4494 = vadd.f32 %v4292, %v4493
  %v4495 = vand.u32 %v4083, 4294901760
  %4496 = vmatmul.f32.gmra.mxu0 %v4495
  %v4497 = vpop.f32.mrf.mxu0
  %v4498 = vadd.f32 %v4300, %v4497
  %v4499 = vand.u32 %v4086, 4294901760
  %4500 = vmatmul.f32.gmra.mxu0 %v4499
  %v4501 = vpop.f32.mrf.mxu0
  %v4502 = vadd.f32 %v4308, %v4501
  %v4503 = vand.u32 %v4089, 4294901760
  %4504 = vmatmul.f32.gmra.mxu0 %v4503
  %v4505 = vpop.f32.mrf.mxu0
  %v4506 = vadd.f32 %v4316, %v4505
  %v4507 = vand.u32 %v4092, 4294901760
  %4508 = vmatmul.f32.gmra.mxu0 %v4507
  %v4509 = vpop.f32.mrf.mxu0
  %v4510 = vadd.f32 %v4324, %v4509
  %v4511 = vand.u32 %v4095, 4294901760
  %4512 = vmatmul.f32.gmra.mxu0 %v4511
  %v4513 = vpop.f32.mrf.mxu0
  %v4514 = vadd.f32 %v4332, %v4513
  %v4515 = vand.u32 %v4098, 4294901760
  %4516 = vmatmul.f32.gmra.mxu0 %v4515
  %v4517 = vpop.f32.mrf.mxu0
  %v4518 = vadd.f32 %v4340, %v4517
  %v4519 = vand.u32 %v4101, 4294901760
  %4520 = vmatmul.f32.gmra.mxu0 %v4519
  %v4521 = vpop.f32.mrf.mxu0
  %v4522 = vadd.f32 %v4348, %v4521
  %v4523 = vand.u32 %v4104, 4294901760
  %4524 = vmatmul.f32.gmra.mxu0 %v4523
  %v4525 = vpop.f32.mrf.mxu0
  %v4526 = vadd.f32 %v4356, %v4525
  %v4527 = vand.u32 %v4107, 4294901760
  %4528 = vmatmul.f32.gmra.mxu0 %v4527
  %v4529 = vpop.f32.mrf.mxu0
  %v4530 = vadd.f32 %v4364, %v4529
  %v4531 = vand.u32 %v4110, 4294901760
  %4532 = vmatmul.f32.gmra.mxu0 %v4531
  %v4533 = vpop.f32.mrf.mxu0
  %v4534 = vadd.f32 %v4372, %v4533
  %v4535 = vand.u32 %v4113, 4294901760
  %4536 = vmatmul.f32.gmra.mxu0 %v4535
  %v4537 = vpop.f32.mrf.mxu0
  %v4538 = vadd.f32 %v4380, %v4537
  %v4539 = vand.u32 %v4116, 4294901760
  %4540 = vmatmul.f32.gmra.mxu0 %v4539
  %v4541 = vpop.f32.mrf.mxu0
  %v4542 = vadd.f32 %v4388, %v4541
  %v4543 = vand.u32 %v4119, 4294901760
  %4544 = vmatmul.f32.gmra.mxu0 %v4543
  %v4545 = vpop.f32.mrf.mxu0
  %v4546 = vadd.f32 %v4396, %v4545
  %4547 = vdwg.mxu0
  %4548 = vmatpush.msra.mxu0 0.0
  %4549 = vmatpush.msra.mxu0 0.0
  %4550 = vmatpush.msra.mxu0 0.0
  %4551 = vmatpush.msra.mxu0 0.0
  %4552 = vmatpush.msra.mxu0 0.0
  %4553 = vmatpush.msra.mxu0 0.0
  %4554 = vmatpush.msra.mxu0 0.0
  %4555 = vmatpush.msra.mxu0 0.0
  %4556 = vmatpush.msra.mxu0 0.0
  %4557 = vmatpush.msra.mxu0 0.0
  %4558 = vmatpush.msra.mxu0 0.0
  %4559 = vmatpush.msra.mxu0 0.0
  %4560 = vmatpush.msra.mxu0 0.0
  %4561 = vmatpush.msra.mxu0 0.0
  %4562 = vmatpush.msra.mxu0 0.0
  %v4563 = vand.u32 %v4122, 4294901760
  %v4564 = vsub.f32 %v4122, %v4563
  %4565 = vmatpush.msra.mxu0 %v4564
  %v4566 = vand.u32 %v4026, 4294901760
  %v4567 = vsub.f32 %v4026, %v4566
  %4568 = vmatmul.f32.gmra.mxu0 %v4567
  %v4569 = vpop.f32.mrf.mxu0
  %v4570 = vadd.f32 %v4422, %v4569
  %v4571 = vand.u32 %v4029, 4294901760
  %v4572 = vsub.f32 %v4029, %v4571
  %4573 = vmatmul.f32.gmra.mxu0 %v4572
  %v4574 = vpop.f32.mrf.mxu0
  %v4575 = vadd.f32 %v4426, %v4574
  %v4576 = vand.u32 %v4032, 4294901760
  %v4577 = vsub.f32 %v4032, %v4576
  %4578 = vmatmul.f32.gmra.mxu0 %v4577
  %v4579 = vpop.f32.mrf.mxu0
  %v4580 = vadd.f32 %v4430, %v4579
  %v4581 = vand.u32 %v4035, 4294901760
  %v4582 = vsub.f32 %v4035, %v4581
  %4583 = vmatmul.f32.gmra.mxu0 %v4582
  %v4584 = vpop.f32.mrf.mxu0
  %v4585 = vadd.f32 %v4434, %v4584
  %v4586 = vand.u32 %v4038, 4294901760
  %v4587 = vsub.f32 %v4038, %v4586
  %4588 = vmatmul.f32.gmra.mxu0 %v4587
  %v4589 = vpop.f32.mrf.mxu0
  %v4590 = vadd.f32 %v4438, %v4589
  %v4591 = vand.u32 %v4041, 4294901760
  %v4592 = vsub.f32 %v4041, %v4591
  %4593 = vmatmul.f32.gmra.mxu0 %v4592
  %v4594 = vpop.f32.mrf.mxu0
  %v4595 = vadd.f32 %v4442, %v4594
  %v4596 = vand.u32 %v4044, 4294901760
  %v4597 = vsub.f32 %v4044, %v4596
  %4598 = vmatmul.f32.gmra.mxu0 %v4597
  %v4599 = vpop.f32.mrf.mxu0
  %v4600 = vadd.f32 %v4446, %v4599
  %v4601 = vand.u32 %v4047, 4294901760
  %v4602 = vsub.f32 %v4047, %v4601
  %4603 = vmatmul.f32.gmra.mxu0 %v4602
  %v4604 = vpop.f32.mrf.mxu0
  %v4605 = vadd.f32 %v4450, %v4604
  %v4606 = vand.u32 %v4050, 4294901760
  %v4607 = vsub.f32 %v4050, %v4606
  %4608 = vmatmul.f32.gmra.mxu0 %v4607
  %v4609 = vpop.f32.mrf.mxu0
  %v4610 = vadd.f32 %v4454, %v4609
  %v4611 = vand.u32 %v4053, 4294901760
  %v4612 = vsub.f32 %v4053, %v4611
  %4613 = vmatmul.f32.gmra.mxu0 %v4612
  %v4614 = vpop.f32.mrf.mxu0
  %v4615 = vadd.f32 %v4458, %v4614
  %v4616 = vand.u32 %v4056, 4294901760
  %v4617 = vsub.f32 %v4056, %v4616
  %4618 = vmatmul.f32.gmra.mxu0 %v4617
  %v4619 = vpop.f32.mrf.mxu0
  %v4620 = vadd.f32 %v4462, %v4619
  %v4621 = vand.u32 %v4059, 4294901760
  %v4622 = vsub.f32 %v4059, %v4621
  %4623 = vmatmul.f32.gmra.mxu0 %v4622
  %v4624 = vpop.f32.mrf.mxu0
  %v4625 = vadd.f32 %v4466, %v4624
  %v4626 = vand.u32 %v4062, 4294901760
  %v4627 = vsub.f32 %v4062, %v4626
  %4628 = vmatmul.f32.gmra.mxu0 %v4627
  %v4629 = vpop.f32.mrf.mxu0
  %v4630 = vadd.f32 %v4470, %v4629
  %v4631 = vand.u32 %v4065, 4294901760
  %v4632 = vsub.f32 %v4065, %v4631
  %4633 = vmatmul.f32.gmra.mxu0 %v4632
  %v4634 = vpop.f32.mrf.mxu0
  %v4635 = vadd.f32 %v4474, %v4634
  %v4636 = vand.u32 %v4068, 4294901760
  %v4637 = vsub.f32 %v4068, %v4636
  %4638 = vmatmul.f32.gmra.mxu0 %v4637
  %v4639 = vpop.f32.mrf.mxu0
  %v4640 = vadd.f32 %v4478, %v4639
  %v4641 = vand.u32 %v4071, 4294901760
  %v4642 = vsub.f32 %v4071, %v4641
  %4643 = vmatmul.f32.gmra.mxu0 %v4642
  %v4644 = vpop.f32.mrf.mxu0
  %v4645 = vadd.f32 %v4482, %v4644
  %v4646 = vand.u32 %v4074, 4294901760
  %v4647 = vsub.f32 %v4074, %v4646
  %4648 = vmatmul.f32.gmra.mxu0 %v4647
  %v4649 = vpop.f32.mrf.mxu0
  %v4650 = vadd.f32 %v4486, %v4649
  %v4651 = vand.u32 %v4077, 4294901760
  %v4652 = vsub.f32 %v4077, %v4651
  %4653 = vmatmul.f32.gmra.mxu0 %v4652
  %v4654 = vpop.f32.mrf.mxu0
  %v4655 = vadd.f32 %v4490, %v4654
  %v4656 = vand.u32 %v4080, 4294901760
  %v4657 = vsub.f32 %v4080, %v4656
  %4658 = vmatmul.f32.gmra.mxu0 %v4657
  %v4659 = vpop.f32.mrf.mxu0
  %v4660 = vadd.f32 %v4494, %v4659
  %v4661 = vand.u32 %v4083, 4294901760
  %v4662 = vsub.f32 %v4083, %v4661
  %4663 = vmatmul.f32.gmra.mxu0 %v4662
  %v4664 = vpop.f32.mrf.mxu0
  %v4665 = vadd.f32 %v4498, %v4664
  %v4666 = vand.u32 %v4086, 4294901760
  %v4667 = vsub.f32 %v4086, %v4666
  %4668 = vmatmul.f32.gmra.mxu0 %v4667
  %v4669 = vpop.f32.mrf.mxu0
  %v4670 = vadd.f32 %v4502, %v4669
  %v4671 = vand.u32 %v4089, 4294901760
  %v4672 = vsub.f32 %v4089, %v4671
  %4673 = vmatmul.f32.gmra.mxu0 %v4672
  %v4674 = vpop.f32.mrf.mxu0
  %v4675 = vadd.f32 %v4506, %v4674
  %v4676 = vand.u32 %v4092, 4294901760
  %v4677 = vsub.f32 %v4092, %v4676
  %4678 = vmatmul.f32.gmra.mxu0 %v4677
  %v4679 = vpop.f32.mrf.mxu0
  %v4680 = vadd.f32 %v4510, %v4679
  %v4681 = vand.u32 %v4095, 4294901760
  %v4682 = vsub.f32 %v4095, %v4681
  %4683 = vmatmul.f32.gmra.mxu0 %v4682
  %v4684 = vpop.f32.mrf.mxu0
  %v4685 = vadd.f32 %v4514, %v4684
  %v4686 = vand.u32 %v4098, 4294901760
  %v4687 = vsub.f32 %v4098, %v4686
  %4688 = vmatmul.f32.gmra.mxu0 %v4687
  %v4689 = vpop.f32.mrf.mxu0
  %v4690 = vadd.f32 %v4518, %v4689
  %v4691 = vand.u32 %v4101, 4294901760
  %v4692 = vsub.f32 %v4101, %v4691
  %4693 = vmatmul.f32.gmra.mxu0 %v4692
  %v4694 = vpop.f32.mrf.mxu0
  %v4695 = vadd.f32 %v4522, %v4694
  %v4696 = vand.u32 %v4104, 4294901760
  %v4697 = vsub.f32 %v4104, %v4696
  %4698 = vmatmul.f32.gmra.mxu0 %v4697
  %v4699 = vpop.f32.mrf.mxu0
  %v4700 = vadd.f32 %v4526, %v4699
  %v4701 = vand.u32 %v4107, 4294901760
  %v4702 = vsub.f32 %v4107, %v4701
  %4703 = vmatmul.f32.gmra.mxu0 %v4702
  %v4704 = vpop.f32.mrf.mxu0
  %v4705 = vadd.f32 %v4530, %v4704
  %v4706 = vand.u32 %v4110, 4294901760
  %v4707 = vsub.f32 %v4110, %v4706
  %4708 = vmatmul.f32.gmra.mxu0 %v4707
  %v4709 = vpop.f32.mrf.mxu0
  %v4710 = vadd.f32 %v4534, %v4709
  %v4711 = vand.u32 %v4113, 4294901760
  %v4712 = vsub.f32 %v4113, %v4711
  %4713 = vmatmul.f32.gmra.mxu0 %v4712
  %v4714 = vpop.f32.mrf.mxu0
  %v4715 = vadd.f32 %v4538, %v4714
  %v4716 = vand.u32 %v4116, 4294901760
  %v4717 = vsub.f32 %v4116, %v4716
  %4718 = vmatmul.f32.gmra.mxu0 %v4717
  %v4719 = vpop.f32.mrf.mxu0
  %v4720 = vadd.f32 %v4542, %v4719
  %v4721 = vand.u32 %v4119, 4294901760
  %v4722 = vsub.f32 %v4119, %v4721
  %4723 = vmatmul.f32.gmra.mxu0 %v4722
  %v4724 = vpop.f32.mrf.mxu0
  %v4725 = vadd.f32 %v4546, %v4724
  %4726 = vdwg.mxu0
  %4727 = vmatpush.msra.mxu0 0.0
  %4728 = vmatpush.msra.mxu0 0.0
  %4729 = vmatpush.msra.mxu0 0.0
  %4730 = vmatpush.msra.mxu0 0.0
  %4731 = vmatpush.msra.mxu0 0.0
  %4732 = vmatpush.msra.mxu0 0.0
  %4733 = vmatpush.msra.mxu0 0.0
  %4734 = vmatpush.msra.mxu0 0.0
  %4735 = vmatpush.msra.mxu0 0.0
  %4736 = vmatpush.msra.mxu0 0.0
  %4737 = vmatpush.msra.mxu0 0.0
  %4738 = vmatpush.msra.mxu0 0.0
  %4739 = vmatpush.msra.mxu0 0.0
  %4740 = vmatpush.msra.mxu0 0.0
  %4741 = vmatpush.msra.mxu0 0.0
  %v4742 = vand.u32 %v4122, 4294901760
  %4743 = vmatpush.msra.mxu0 %v4742
  %v4744 = vand.u32 %v4026, 4294901760
  %v4745 = vsub.f32 %v4026, %v4744
  %v4746 = vand.u32 %v4745, 4294901760
  %4747 = vmatmul.f32.gmra.mxu0 %v4746
  %v4748 = vpop.f32.mrf.mxu0
  %v4749 = vadd.f32 %v4570, %v4748
  %v4750 = vand.u32 %v4029, 4294901760
  %v4751 = vsub.f32 %v4029, %v4750
  %v4752 = vand.u32 %v4751, 4294901760
  %4753 = vmatmul.f32.gmra.mxu0 %v4752
  %v4754 = vpop.f32.mrf.mxu0
  %v4755 = vadd.f32 %v4575, %v4754
  %v4756 = vand.u32 %v4032, 4294901760
  %v4757 = vsub.f32 %v4032, %v4756
  %v4758 = vand.u32 %v4757, 4294901760
  %4759 = vmatmul.f32.gmra.mxu0 %v4758
  %v4760 = vpop.f32.mrf.mxu0
  %v4761 = vadd.f32 %v4580, %v4760
  %v4762 = vand.u32 %v4035, 4294901760
  %v4763 = vsub.f32 %v4035, %v4762
  %v4764 = vand.u32 %v4763, 4294901760
  %4765 = vmatmul.f32.gmra.mxu0 %v4764
  %v4766 = vpop.f32.mrf.mxu0
  %v4767 = vadd.f32 %v4585, %v4766
  %v4768 = vand.u32 %v4038, 4294901760
  %v4769 = vsub.f32 %v4038, %v4768
  %v4770 = vand.u32 %v4769, 4294901760
  %4771 = vmatmul.f32.gmra.mxu0 %v4770
  %v4772 = vpop.f32.mrf.mxu0
  %v4773 = vadd.f32 %v4590, %v4772
  %v4774 = vand.u32 %v4041, 4294901760
  %v4775 = vsub.f32 %v4041, %v4774
  %v4776 = vand.u32 %v4775, 4294901760
  %4777 = vmatmul.f32.gmra.mxu0 %v4776
  %v4778 = vpop.f32.mrf.mxu0
  %v4779 = vadd.f32 %v4595, %v4778
  %v4780 = vand.u32 %v4044, 4294901760
  %v4781 = vsub.f32 %v4044, %v4780
  %v4782 = vand.u32 %v4781, 4294901760
  %4783 = vmatmul.f32.gmra.mxu0 %v4782
  %v4784 = vpop.f32.mrf.mxu0
  %v4785 = vadd.f32 %v4600, %v4784
  %v4786 = vand.u32 %v4047, 4294901760
  %v4787 = vsub.f32 %v4047, %v4786
  %v4788 = vand.u32 %v4787, 4294901760
  %4789 = vmatmul.f32.gmra.mxu0 %v4788
  %v4790 = vpop.f32.mrf.mxu0
  %v4791 = vadd.f32 %v4605, %v4790
  %v4792 = vand.u32 %v4050, 4294901760
  %v4793 = vsub.f32 %v4050, %v4792
  %v4794 = vand.u32 %v4793, 4294901760
  %4795 = vmatmul.f32.gmra.mxu0 %v4794
  %v4796 = vpop.f32.mrf.mxu0
  %v4797 = vadd.f32 %v4610, %v4796
  %v4798 = vand.u32 %v4053, 4294901760
  %v4799 = vsub.f32 %v4053, %v4798
  %v4800 = vand.u32 %v4799, 4294901760
  %4801 = vmatmul.f32.gmra.mxu0 %v4800
  %v4802 = vpop.f32.mrf.mxu0
  %v4803 = vadd.f32 %v4615, %v4802
  %v4804 = vand.u32 %v4056, 4294901760
  %v4805 = vsub.f32 %v4056, %v4804
  %v4806 = vand.u32 %v4805, 4294901760
  %4807 = vmatmul.f32.gmra.mxu0 %v4806
  %v4808 = vpop.f32.mrf.mxu0
  %v4809 = vadd.f32 %v4620, %v4808
  %v4810 = vand.u32 %v4059, 4294901760
  %v4811 = vsub.f32 %v4059, %v4810
  %v4812 = vand.u32 %v4811, 4294901760
  %4813 = vmatmul.f32.gmra.mxu0 %v4812
  %v4814 = vpop.f32.mrf.mxu0
  %v4815 = vadd.f32 %v4625, %v4814
  %v4816 = vand.u32 %v4062, 4294901760
  %v4817 = vsub.f32 %v4062, %v4816
  %v4818 = vand.u32 %v4817, 4294901760
  %4819 = vmatmul.f32.gmra.mxu0 %v4818
  %v4820 = vpop.f32.mrf.mxu0
  %v4821 = vadd.f32 %v4630, %v4820
  %v4822 = vand.u32 %v4065, 4294901760
  %v4823 = vsub.f32 %v4065, %v4822
  %v4824 = vand.u32 %v4823, 4294901760
  %4825 = vmatmul.f32.gmra.mxu0 %v4824
  %v4826 = vpop.f32.mrf.mxu0
  %v4827 = vadd.f32 %v4635, %v4826
  %v4828 = vand.u32 %v4068, 4294901760
  %v4829 = vsub.f32 %v4068, %v4828
  %v4830 = vand.u32 %v4829, 4294901760
  %4831 = vmatmul.f32.gmra.mxu0 %v4830
  %v4832 = vpop.f32.mrf.mxu0
  %v4833 = vadd.f32 %v4640, %v4832
  %v4834 = vand.u32 %v4071, 4294901760
  %v4835 = vsub.f32 %v4071, %v4834
  %v4836 = vand.u32 %v4835, 4294901760
  %4837 = vmatmul.f32.gmra.mxu0 %v4836
  %v4838 = vpop.f32.mrf.mxu0
  %v4839 = vadd.f32 %v4645, %v4838
  %v4840 = vand.u32 %v4074, 4294901760
  %v4841 = vsub.f32 %v4074, %v4840
  %v4842 = vand.u32 %v4841, 4294901760
  %4843 = vmatmul.f32.gmra.mxu0 %v4842
  %v4844 = vpop.f32.mrf.mxu0
  %v4845 = vadd.f32 %v4650, %v4844
  %v4846 = vand.u32 %v4077, 4294901760
  %v4847 = vsub.f32 %v4077, %v4846
  %v4848 = vand.u32 %v4847, 4294901760
  %4849 = vmatmul.f32.gmra.mxu0 %v4848
  %v4850 = vpop.f32.mrf.mxu0
  %v4851 = vadd.f32 %v4655, %v4850
  %v4852 = vand.u32 %v4080, 4294901760
  %v4853 = vsub.f32 %v4080, %v4852
  %v4854 = vand.u32 %v4853, 4294901760
  %4855 = vmatmul.f32.gmra.mxu0 %v4854
  %v4856 = vpop.f32.mrf.mxu0
  %v4857 = vadd.f32 %v4660, %v4856
  %v4858 = vand.u32 %v4083, 4294901760
  %v4859 = vsub.f32 %v4083, %v4858
  %v4860 = vand.u32 %v4859, 4294901760
  %4861 = vmatmul.f32.gmra.mxu0 %v4860
  %v4862 = vpop.f32.mrf.mxu0
  %v4863 = vadd.f32 %v4665, %v4862
  %v4864 = vand.u32 %v4086, 4294901760
  %v4865 = vsub.f32 %v4086, %v4864
  %v4866 = vand.u32 %v4865, 4294901760
  %4867 = vmatmul.f32.gmra.mxu0 %v4866
  %v4868 = vpop.f32.mrf.mxu0
  %v4869 = vadd.f32 %v4670, %v4868
  %v4870 = vand.u32 %v4089, 4294901760
  %v4871 = vsub.f32 %v4089, %v4870
  %v4872 = vand.u32 %v4871, 4294901760
  %4873 = vmatmul.f32.gmra.mxu0 %v4872
  %v4874 = vpop.f32.mrf.mxu0
  %v4875 = vadd.f32 %v4675, %v4874
  %v4876 = vand.u32 %v4092, 4294901760
  %v4877 = vsub.f32 %v4092, %v4876
  %v4878 = vand.u32 %v4877, 4294901760
  %4879 = vmatmul.f32.gmra.mxu0 %v4878
  %v4880 = vpop.f32.mrf.mxu0
  %v4881 = vadd.f32 %v4680, %v4880
  %v4882 = vand.u32 %v4095, 4294901760
  %v4883 = vsub.f32 %v4095, %v4882
  %v4884 = vand.u32 %v4883, 4294901760
  %4885 = vmatmul.f32.gmra.mxu0 %v4884
  %v4886 = vpop.f32.mrf.mxu0
  %v4887 = vadd.f32 %v4685, %v4886
  %v4888 = vand.u32 %v4098, 4294901760
  %v4889 = vsub.f32 %v4098, %v4888
  %v4890 = vand.u32 %v4889, 4294901760
  %4891 = vmatmul.f32.gmra.mxu0 %v4890
  %v4892 = vpop.f32.mrf.mxu0
  %v4893 = vadd.f32 %v4690, %v4892
  %v4894 = vand.u32 %v4101, 4294901760
  %v4895 = vsub.f32 %v4101, %v4894
  %v4896 = vand.u32 %v4895, 4294901760
  %4897 = vmatmul.f32.gmra.mxu0 %v4896
  %v4898 = vpop.f32.mrf.mxu0
  %v4899 = vadd.f32 %v4695, %v4898
  %v4900 = vand.u32 %v4104, 4294901760
  %v4901 = vsub.f32 %v4104, %v4900
  %v4902 = vand.u32 %v4901, 4294901760
  %4903 = vmatmul.f32.gmra.mxu0 %v4902
  %v4904 = vpop.f32.mrf.mxu0
  %v4905 = vadd.f32 %v4700, %v4904
  %v4906 = vand.u32 %v4107, 4294901760
  %v4907 = vsub.f32 %v4107, %v4906
  %v4908 = vand.u32 %v4907, 4294901760
  %4909 = vmatmul.f32.gmra.mxu0 %v4908
  %v4910 = vpop.f32.mrf.mxu0
  %v4911 = vadd.f32 %v4705, %v4910
  %v4912 = vand.u32 %v4110, 4294901760
  %v4913 = vsub.f32 %v4110, %v4912
  %v4914 = vand.u32 %v4913, 4294901760
  %4915 = vmatmul.f32.gmra.mxu0 %v4914
  %v4916 = vpop.f32.mrf.mxu0
  %v4917 = vadd.f32 %v4710, %v4916
  %v4918 = vand.u32 %v4113, 4294901760
  %v4919 = vsub.f32 %v4113, %v4918
  %v4920 = vand.u32 %v4919, 4294901760
  %4921 = vmatmul.f32.gmra.mxu0 %v4920
  %v4922 = vpop.f32.mrf.mxu0
  %v4923 = vadd.f32 %v4715, %v4922
  %v4924 = vand.u32 %v4116, 4294901760
  %v4925 = vsub.f32 %v4116, %v4924
  %v4926 = vand.u32 %v4925, 4294901760
  %4927 = vmatmul.f32.gmra.mxu0 %v4926
  %v4928 = vpop.f32.mrf.mxu0
  %v4929 = vadd.f32 %v4720, %v4928
  %v4930 = vand.u32 %v4119, 4294901760
  %v4931 = vsub.f32 %v4119, %v4930
  %v4932 = vand.u32 %v4931, 4294901760
  %4933 = vmatmul.f32.gmra.mxu0 %v4932
  %v4934 = vpop.f32.mrf.mxu0
  %v4935 = vadd.f32 %v4725, %v4934
  %4936 = vdwg.mxu0
  %4937 = vmatpush.msra.mxu0 0.0
  %4938 = vmatpush.msra.mxu0 0.0
  %4939 = vmatpush.msra.mxu0 0.0
  %4940 = vmatpush.msra.mxu0 0.0
  %4941 = vmatpush.msra.mxu0 0.0
  %4942 = vmatpush.msra.mxu0 0.0
  %4943 = vmatpush.msra.mxu0 0.0
  %4944 = vmatpush.msra.mxu0 0.0
  %4945 = vmatpush.msra.mxu0 0.0
  %4946 = vmatpush.msra.mxu0 0.0
  %4947 = vmatpush.msra.mxu0 0.0
  %4948 = vmatpush.msra.mxu0 0.0
  %4949 = vmatpush.msra.mxu0 0.0
  %4950 = vmatpush.msra.mxu0 0.0
  %4951 = vmatpush.msra.mxu0 0.0
  %v4952 = vand.u32 %v4122, 4294901760
  %v4953 = vsub.f32 %v4122, %v4952
  %v4954 = vand.u32 %v4953, 4294901760
  %4955 = vmatpush.msra.mxu0 %v4954
  %v4956 = vand.u32 %v4026, 4294901760
  %4957 = vmatmul.f32.gmra.mxu0 %v4956
  %v4958 = vpop.f32.mrf.mxu0
  %v4959 = vadd.f32 %v4749, %v4958
  %v4960 = vand.u32 %v4029, 4294901760
  %4961 = vmatmul.f32.gmra.mxu0 %v4960
  %v4962 = vpop.f32.mrf.mxu0
  %v4963 = vadd.f32 %v4755, %v4962
  %v4964 = vand.u32 %v4032, 4294901760
  %4965 = vmatmul.f32.gmra.mxu0 %v4964
  %v4966 = vpop.f32.mrf.mxu0
  %v4967 = vadd.f32 %v4761, %v4966
  %v4968 = vand.u32 %v4035, 4294901760
  %4969 = vmatmul.f32.gmra.mxu0 %v4968
  %v4970 = vpop.f32.mrf.mxu0
  %v4971 = vadd.f32 %v4767, %v4970
  %v4972 = vand.u32 %v4038, 4294901760
  %4973 = vmatmul.f32.gmra.mxu0 %v4972
  %v4974 = vpop.f32.mrf.mxu0
  %v4975 = vadd.f32 %v4773, %v4974
  %v4976 = vand.u32 %v4041, 4294901760
  %4977 = vmatmul.f32.gmra.mxu0 %v4976
  %v4978 = vpop.f32.mrf.mxu0
  %v4979 = vadd.f32 %v4779, %v4978
  %v4980 = vand.u32 %v4044, 4294901760
  %4981 = vmatmul.f32.gmra.mxu0 %v4980
  %v4982 = vpop.f32.mrf.mxu0
  %v4983 = vadd.f32 %v4785, %v4982
  %v4984 = vand.u32 %v4047, 4294901760
  %4985 = vmatmul.f32.gmra.mxu0 %v4984
  %v4986 = vpop.f32.mrf.mxu0
  %v4987 = vadd.f32 %v4791, %v4986
  %v4988 = vand.u32 %v4050, 4294901760
  %4989 = vmatmul.f32.gmra.mxu0 %v4988
  %v4990 = vpop.f32.mrf.mxu0
  %v4991 = vadd.f32 %v4797, %v4990
  %v4992 = vand.u32 %v4053, 4294901760
  %4993 = vmatmul.f32.gmra.mxu0 %v4992
  %v4994 = vpop.f32.mrf.mxu0
  %v4995 = vadd.f32 %v4803, %v4994
  %v4996 = vand.u32 %v4056, 4294901760
  %4997 = vmatmul.f32.gmra.mxu0 %v4996
  %v4998 = vpop.f32.mrf.mxu0
  %v4999 = vadd.f32 %v4809, %v4998
  %v5000 = vand.u32 %v4059, 4294901760
  %5001 = vmatmul.f32.gmra.mxu0 %v5000
  %v5002 = vpop.f32.mrf.mxu0
  %v5003 = vadd.f32 %v4815, %v5002
  %v5004 = vand.u32 %v4062, 4294901760
  %5005 = vmatmul.f32.gmra.mxu0 %v5004
  %v5006 = vpop.f32.mrf.mxu0
  %v5007 = vadd.f32 %v4821, %v5006
  %v5008 = vand.u32 %v4065, 4294901760
  %5009 = vmatmul.f32.gmra.mxu0 %v5008
  %v5010 = vpop.f32.mrf.mxu0
  %v5011 = vadd.f32 %v4827, %v5010
  %v5012 = vand.u32 %v4068, 4294901760
  %5013 = vmatmul.f32.gmra.mxu0 %v5012
  %v5014 = vpop.f32.mrf.mxu0
  %v5015 = vadd.f32 %v4833, %v5014
  %v5016 = vand.u32 %v4071, 4294901760
  %5017 = vmatmul.f32.gmra.mxu0 %v5016
  %v5018 = vpop.f32.mrf.mxu0
  %v5019 = vadd.f32 %v4839, %v5018
  %v5020 = vand.u32 %v4074, 4294901760
  %5021 = vmatmul.f32.gmra.mxu0 %v5020
  %v5022 = vpop.f32.mrf.mxu0
  %v5023 = vadd.f32 %v4845, %v5022
  %v5024 = vand.u32 %v4077, 4294901760
  %5025 = vmatmul.f32.gmra.mxu0 %v5024
  %v5026 = vpop.f32.mrf.mxu0
  %v5027 = vadd.f32 %v4851, %v5026
  %v5028 = vand.u32 %v4080, 4294901760
  %5029 = vmatmul.f32.gmra.mxu0 %v5028
  %v5030 = vpop.f32.mrf.mxu0
  %v5031 = vadd.f32 %v4857, %v5030
  %v5032 = vand.u32 %v4083, 4294901760
  %5033 = vmatmul.f32.gmra.mxu0 %v5032
  %v5034 = vpop.f32.mrf.mxu0
  %v5035 = vadd.f32 %v4863, %v5034
  %v5036 = vand.u32 %v4086, 4294901760
  %5037 = vmatmul.f32.gmra.mxu0 %v5036
  %v5038 = vpop.f32.mrf.mxu0
  %v5039 = vadd.f32 %v4869, %v5038
  %v5040 = vand.u32 %v4089, 4294901760
  %5041 = vmatmul.f32.gmra.mxu0 %v5040
  %v5042 = vpop.f32.mrf.mxu0
  %v5043 = vadd.f32 %v4875, %v5042
  %v5044 = vand.u32 %v4092, 4294901760
  %5045 = vmatmul.f32.gmra.mxu0 %v5044
  %v5046 = vpop.f32.mrf.mxu0
  %v5047 = vadd.f32 %v4881, %v5046
  %v5048 = vand.u32 %v4095, 4294901760
  %5049 = vmatmul.f32.gmra.mxu0 %v5048
  %v5050 = vpop.f32.mrf.mxu0
  %v5051 = vadd.f32 %v4887, %v5050
  %v5052 = vand.u32 %v4098, 4294901760
  %5053 = vmatmul.f32.gmra.mxu0 %v5052
  %v5054 = vpop.f32.mrf.mxu0
  %v5055 = vadd.f32 %v4893, %v5054
  %v5056 = vand.u32 %v4101, 4294901760
  %5057 = vmatmul.f32.gmra.mxu0 %v5056
  %v5058 = vpop.f32.mrf.mxu0
  %v5059 = vadd.f32 %v4899, %v5058
  %v5060 = vand.u32 %v4104, 4294901760
  %5061 = vmatmul.f32.gmra.mxu0 %v5060
  %v5062 = vpop.f32.mrf.mxu0
  %v5063 = vadd.f32 %v4905, %v5062
  %v5064 = vand.u32 %v4107, 4294901760
  %5065 = vmatmul.f32.gmra.mxu0 %v5064
  %v5066 = vpop.f32.mrf.mxu0
  %v5067 = vadd.f32 %v4911, %v5066
  %v5068 = vand.u32 %v4110, 4294901760
  %5069 = vmatmul.f32.gmra.mxu0 %v5068
  %v5070 = vpop.f32.mrf.mxu0
  %v5071 = vadd.f32 %v4917, %v5070
  %v5072 = vand.u32 %v4113, 4294901760
  %5073 = vmatmul.f32.gmra.mxu0 %v5072
  %v5074 = vpop.f32.mrf.mxu0
  %v5075 = vadd.f32 %v4923, %v5074
  %v5076 = vand.u32 %v4116, 4294901760
  %5077 = vmatmul.f32.gmra.mxu0 %v5076
  %v5078 = vpop.f32.mrf.mxu0
  %v5079 = vadd.f32 %v4929, %v5078
  %v5080 = vand.u32 %v4119, 4294901760
  %5081 = vmatmul.f32.gmra.mxu0 %v5080
  %v5082 = vpop.f32.mrf.mxu0
  %v5083 = vadd.f32 %v4935, %v5082
  %5084 = vdwg.mxu0
  %5085 = vmatpush.msra.mxu0 0.0
  %5086 = vmatpush.msra.mxu0 0.0
  %5087 = vmatpush.msra.mxu0 0.0
  %5088 = vmatpush.msra.mxu0 0.0
  %5089 = vmatpush.msra.mxu0 0.0
  %5090 = vmatpush.msra.mxu0 0.0
  %5091 = vmatpush.msra.mxu0 0.0
  %5092 = vmatpush.msra.mxu0 0.0
  %5093 = vmatpush.msra.mxu0 0.0
  %5094 = vmatpush.msra.mxu0 0.0
  %5095 = vmatpush.msra.mxu0 0.0
  %5096 = vmatpush.msra.mxu0 0.0
  %5097 = vmatpush.msra.mxu0 0.0
  %5098 = vmatpush.msra.mxu0 0.0
  %5099 = vmatpush.msra.mxu0 0.0
  %v5100 = vand.u32 %v4122, 4294901760
  %5101 = vmatpush.msra.mxu0 %v5100
  %v5102 = vand.u32 %v4026, 4294901760
  %5103 = vmatmul.f32.gmra.mxu0 %v5102
  %v5104 = vpop.f32.mrf.mxu0
  %v5105 = vadd.f32 %v4959, %v5104
  %v5106 = vand.u32 %v4029, 4294901760
  %5107 = vmatmul.f32.gmra.mxu0 %v5106
  %v5108 = vpop.f32.mrf.mxu0
  %v5109 = vadd.f32 %v4963, %v5108
  %v5110 = vand.u32 %v4032, 4294901760
  %5111 = vmatmul.f32.gmra.mxu0 %v5110
  %v5112 = vpop.f32.mrf.mxu0
  %v5113 = vadd.f32 %v4967, %v5112
  %v5114 = vand.u32 %v4035, 4294901760
  %5115 = vmatmul.f32.gmra.mxu0 %v5114
  %v5116 = vpop.f32.mrf.mxu0
  %v5117 = vadd.f32 %v4971, %v5116
  %v5118 = vand.u32 %v4038, 4294901760
  %5119 = vmatmul.f32.gmra.mxu0 %v5118
  %v5120 = vpop.f32.mrf.mxu0
  %v5121 = vadd.f32 %v4975, %v5120
  %v5122 = vand.u32 %v4041, 4294901760
  %5123 = vmatmul.f32.gmra.mxu0 %v5122
  %v5124 = vpop.f32.mrf.mxu0
  %v5125 = vadd.f32 %v4979, %v5124
  %v5126 = vand.u32 %v4044, 4294901760
  %5127 = vmatmul.f32.gmra.mxu0 %v5126
  %v5128 = vpop.f32.mrf.mxu0
  %v5129 = vadd.f32 %v4983, %v5128
  %v5130 = vand.u32 %v4047, 4294901760
  %5131 = vmatmul.f32.gmra.mxu0 %v5130
  %v5132 = vpop.f32.mrf.mxu0
  %v5133 = vadd.f32 %v4987, %v5132
  %v5134 = vand.u32 %v4050, 4294901760
  %5135 = vmatmul.f32.gmra.mxu0 %v5134
  %v5136 = vpop.f32.mrf.mxu0
  %v5137 = vadd.f32 %v4991, %v5136
  %v5138 = vand.u32 %v4053, 4294901760
  %5139 = vmatmul.f32.gmra.mxu0 %v5138
  %v5140 = vpop.f32.mrf.mxu0
  %v5141 = vadd.f32 %v4995, %v5140
  %v5142 = vand.u32 %v4056, 4294901760
  %5143 = vmatmul.f32.gmra.mxu0 %v5142
  %v5144 = vpop.f32.mrf.mxu0
  %v5145 = vadd.f32 %v4999, %v5144
  %v5146 = vand.u32 %v4059, 4294901760
  %5147 = vmatmul.f32.gmra.mxu0 %v5146
  %v5148 = vpop.f32.mrf.mxu0
  %v5149 = vadd.f32 %v5003, %v5148
  %v5150 = vand.u32 %v4062, 4294901760
  %5151 = vmatmul.f32.gmra.mxu0 %v5150
  %v5152 = vpop.f32.mrf.mxu0
  %v5153 = vadd.f32 %v5007, %v5152
  %v5154 = vand.u32 %v4065, 4294901760
  %5155 = vmatmul.f32.gmra.mxu0 %v5154
  %v5156 = vpop.f32.mrf.mxu0
  %v5157 = vadd.f32 %v5011, %v5156
  %v5158 = vand.u32 %v4068, 4294901760
  %5159 = vmatmul.f32.gmra.mxu0 %v5158
  %v5160 = vpop.f32.mrf.mxu0
  %v5161 = vadd.f32 %v5015, %v5160
  %v5162 = vand.u32 %v4071, 4294901760
  %5163 = vmatmul.f32.gmra.mxu0 %v5162
  %v5164 = vpop.f32.mrf.mxu0
  %v5165 = vadd.f32 %v5019, %v5164
  %v5166 = vand.u32 %v4074, 4294901760
  %5167 = vmatmul.f32.gmra.mxu0 %v5166
  %v5168 = vpop.f32.mrf.mxu0
  %v5169 = vadd.f32 %v5023, %v5168
  %v5170 = vand.u32 %v4077, 4294901760
  %5171 = vmatmul.f32.gmra.mxu0 %v5170
  %v5172 = vpop.f32.mrf.mxu0
  %v5173 = vadd.f32 %v5027, %v5172
  %v5174 = vand.u32 %v4080, 4294901760
  %5175 = vmatmul.f32.gmra.mxu0 %v5174
  %v5176 = vpop.f32.mrf.mxu0
  %v5177 = vadd.f32 %v5031, %v5176
  %v5178 = vand.u32 %v4083, 4294901760
  %5179 = vmatmul.f32.gmra.mxu0 %v5178
  %v5180 = vpop.f32.mrf.mxu0
  %v5181 = vadd.f32 %v5035, %v5180
  %v5182 = vand.u32 %v4086, 4294901760
  %5183 = vmatmul.f32.gmra.mxu0 %v5182
  %v5184 = vpop.f32.mrf.mxu0
  %v5185 = vadd.f32 %v5039, %v5184
  %v5186 = vand.u32 %v4089, 4294901760
  %5187 = vmatmul.f32.gmra.mxu0 %v5186
  %v5188 = vpop.f32.mrf.mxu0
  %v5189 = vadd.f32 %v5043, %v5188
  %v5190 = vand.u32 %v4092, 4294901760
  %5191 = vmatmul.f32.gmra.mxu0 %v5190
  %v5192 = vpop.f32.mrf.mxu0
  %v5193 = vadd.f32 %v5047, %v5192
  %v5194 = vand.u32 %v4095, 4294901760
  %5195 = vmatmul.f32.gmra.mxu0 %v5194
  %v5196 = vpop.f32.mrf.mxu0
  %v5197 = vadd.f32 %v5051, %v5196
  %v5198 = vand.u32 %v4098, 4294901760
  %5199 = vmatmul.f32.gmra.mxu0 %v5198
  %v5200 = vpop.f32.mrf.mxu0
  %v5201 = vadd.f32 %v5055, %v5200
  %v5202 = vand.u32 %v4101, 4294901760
  %5203 = vmatmul.f32.gmra.mxu0 %v5202
  %v5204 = vpop.f32.mrf.mxu0
  %v5205 = vadd.f32 %v5059, %v5204
  %v5206 = vand.u32 %v4104, 4294901760
  %5207 = vmatmul.f32.gmra.mxu0 %v5206
  %v5208 = vpop.f32.mrf.mxu0
  %v5209 = vadd.f32 %v5063, %v5208
  %v5210 = vand.u32 %v4107, 4294901760
  %5211 = vmatmul.f32.gmra.mxu0 %v5210
  %v5212 = vpop.f32.mrf.mxu0
  %v5213 = vadd.f32 %v5067, %v5212
  %v5214 = vand.u32 %v4110, 4294901760
  %5215 = vmatmul.f32.gmra.mxu0 %v5214
  %v5216 = vpop.f32.mrf.mxu0
  %v5217 = vadd.f32 %v5071, %v5216
  %v5218 = vand.u32 %v4113, 4294901760
  %5219 = vmatmul.f32.gmra.mxu0 %v5218
  %v5220 = vpop.f32.mrf.mxu0
  %v5221 = vadd.f32 %v5075, %v5220
  %v5222 = vand.u32 %v4116, 4294901760
  %5223 = vmatmul.f32.gmra.mxu0 %v5222
  %v5224 = vpop.f32.mrf.mxu0
  %v5225 = vadd.f32 %v5079, %v5224
  %v5226 = vand.u32 %v4119, 4294901760
  %5227 = vmatmul.f32.gmra.mxu0 %v5226
  %v5228 = vpop.f32.mrf.mxu0
  %v5229 = vadd.f32 %v5083, %v5228
  %5230 = vdwg.mxu0
  %5263 = vrot.lane.b32.xlu0 %v444, 32
  %v5264 = vpop.permute.xlu0 %5263
  %5265 = vrot.lane.b32.xlu0 %v445, 32
  %v5266 = vpop.permute.xlu0 %5265
  %5267 = vrot.lane.b32.xlu0 %v446, 32
  %v5268 = vpop.permute.xlu0 %5267
  %5269 = vrot.lane.b32.xlu0 %v447, 32
  %v5270 = vpop.permute.xlu0 %5269
  %5271 = vrot.lane.b32.xlu0 %v448, 32
  %v5272 = vpop.permute.xlu0 %5271
  %5273 = vrot.lane.b32.xlu0 %v449, 32
  %v5274 = vpop.permute.xlu0 %5273
  %5275 = vrot.lane.b32.xlu0 %v450, 32
  %v5276 = vpop.permute.xlu0 %5275
  %5277 = vrot.lane.b32.xlu0 %v451, 32
  %v5278 = vpop.permute.xlu0 %5277
  %5279 = vrot.lane.b32.xlu0 %v452, 32
  %v5280 = vpop.permute.xlu0 %5279
  %5281 = vrot.lane.b32.xlu0 %v453, 32
  %v5282 = vpop.permute.xlu0 %5281
  %5283 = vrot.lane.b32.xlu0 %v454, 32
  %v5284 = vpop.permute.xlu0 %5283
  %5285 = vrot.lane.b32.xlu0 %v455, 32
  %v5286 = vpop.permute.xlu0 %5285
  %5287 = vrot.lane.b32.xlu0 %v456, 32
  %v5288 = vpop.permute.xlu0 %5287
  %5289 = vrot.lane.b32.xlu0 %v457, 32
  %v5290 = vpop.permute.xlu0 %5289
  %5291 = vrot.lane.b32.xlu0 %v458, 32
  %v5292 = vpop.permute.xlu0 %5291
  %5293 = vrot.lane.b32.xlu0 %v459, 32
  %v5294 = vpop.permute.xlu0 %5293
  %5295 = vrot.lane.b32.xlu0 %v460, 32
  %v5296 = vpop.permute.xlu0 %5295
  %5297 = vrot.lane.b32.xlu0 %v461, 32
  %v5298 = vpop.permute.xlu0 %5297
  %5299 = vrot.lane.b32.xlu0 %v462, 32
  %v5300 = vpop.permute.xlu0 %5299
  %5301 = vrot.lane.b32.xlu0 %v463, 32
  %v5302 = vpop.permute.xlu0 %5301
  %5303 = vrot.lane.b32.xlu0 %v464, 32
  %v5304 = vpop.permute.xlu0 %5303
  %5305 = vrot.lane.b32.xlu0 %v465, 32
  %v5306 = vpop.permute.xlu0 %5305
  %5307 = vrot.lane.b32.xlu0 %v466, 32
  %v5308 = vpop.permute.xlu0 %5307
  %5309 = vrot.lane.b32.xlu0 %v467, 32
  %v5310 = vpop.permute.xlu0 %5309
  %5311 = vrot.lane.b32.xlu0 %v468, 32
  %v5312 = vpop.permute.xlu0 %5311
  %5313 = vrot.lane.b32.xlu0 %v469, 32
  %v5314 = vpop.permute.xlu0 %5313
  %5315 = vrot.lane.b32.xlu0 %v470, 32
  %v5316 = vpop.permute.xlu0 %5315
  %5317 = vrot.lane.b32.xlu0 %v471, 32
  %v5318 = vpop.permute.xlu0 %5317
  %5319 = vrot.lane.b32.xlu0 %v472, 32
  %v5320 = vpop.permute.xlu0 %5319
  %5321 = vrot.lane.b32.xlu0 %v473, 32
  %v5322 = vpop.permute.xlu0 %5321
  %5323 = vrot.lane.b32.xlu0 %v474, 32
  %v5324 = vpop.permute.xlu0 %5323
  %5325 = vrot.lane.b32.xlu0 %v475, 32
  %v5326 = vpop.permute.xlu0 %5325
  %5391 = vrot.lane.b32.xlu0 %v640, 64
  %v5392 = vpop.permute.xlu0 %5391
  %5393 = vrot.lane.b32.xlu0 %v641, 64
  %v5394 = vpop.permute.xlu0 %5393
  %5395 = vrot.lane.b32.xlu0 %v642, 64
  %v5396 = vpop.permute.xlu0 %5395
  %5397 = vrot.lane.b32.xlu0 %v643, 64
  %v5398 = vpop.permute.xlu0 %5397
  %5399 = vrot.lane.b32.xlu0 %v644, 64
  %v5400 = vpop.permute.xlu0 %5399
  %5401 = vrot.lane.b32.xlu0 %v645, 64
  %v5402 = vpop.permute.xlu0 %5401
  %5403 = vrot.lane.b32.xlu0 %v646, 64
  %v5404 = vpop.permute.xlu0 %5403
  %5405 = vrot.lane.b32.xlu0 %v647, 64
  %v5406 = vpop.permute.xlu0 %5405
  %5407 = vrot.lane.b32.xlu0 %v648, 64
  %v5408 = vpop.permute.xlu0 %5407
  %5409 = vrot.lane.b32.xlu0 %v649, 64
  %v5410 = vpop.permute.xlu0 %5409
  %5411 = vrot.lane.b32.xlu0 %v650, 64
  %v5412 = vpop.permute.xlu0 %5411
  %5413 = vrot.lane.b32.xlu0 %v651, 64
  %v5414 = vpop.permute.xlu0 %5413
  %5415 = vrot.lane.b32.xlu0 %v652, 64
  %v5416 = vpop.permute.xlu0 %5415
  %5417 = vrot.lane.b32.xlu0 %v653, 64
  %v5418 = vpop.permute.xlu0 %5417
  %5419 = vrot.lane.b32.xlu0 %v654, 64
  %v5420 = vpop.permute.xlu0 %5419
  %5421 = vrot.lane.b32.xlu0 %v655, 64
  %v5422 = vpop.permute.xlu0 %5421
  %5423 = vrot.lane.b32.xlu0 %v656, 64
  %v5424 = vpop.permute.xlu0 %5423
  %5425 = vrot.lane.b32.xlu0 %v657, 64
  %v5426 = vpop.permute.xlu0 %5425
  %5427 = vrot.lane.b32.xlu0 %v658, 64
  %v5428 = vpop.permute.xlu0 %5427
  %5429 = vrot.lane.b32.xlu0 %v659, 64
  %v5430 = vpop.permute.xlu0 %5429
  %5431 = vrot.lane.b32.xlu0 %v660, 64
  %v5432 = vpop.permute.xlu0 %5431
  %5433 = vrot.lane.b32.xlu0 %v661, 64
  %v5434 = vpop.permute.xlu0 %5433
  %5435 = vrot.lane.b32.xlu0 %v662, 64
  %v5436 = vpop.permute.xlu0 %5435
  %5437 = vrot.lane.b32.xlu0 %v663, 64
  %v5438 = vpop.permute.xlu0 %5437
  %5439 = vrot.lane.b32.xlu0 %v664, 64
  %v5440 = vpop.permute.xlu0 %5439
  %5441 = vrot.lane.b32.xlu0 %v665, 64
  %v5442 = vpop.permute.xlu0 %5441
  %5443 = vrot.lane.b32.xlu0 %v666, 64
  %v5444 = vpop.permute.xlu0 %5443
  %5445 = vrot.lane.b32.xlu0 %v667, 64
  %v5446 = vpop.permute.xlu0 %5445
  %5447 = vrot.lane.b32.xlu0 %v668, 64
  %v5448 = vpop.permute.xlu0 %5447
  %5449 = vrot.lane.b32.xlu0 %v669, 64
  %v5450 = vpop.permute.xlu0 %5449
  %5451 = vrot.lane.b32.xlu0 %v670, 64
  %v5452 = vpop.permute.xlu0 %5451
  %5453 = vrot.lane.b32.xlu0 %v671, 64
  %v5454 = vpop.permute.xlu0 %5453
  %5519 = vrot.lane.b32.xlu0 %v836, 96
  %v5520 = vpop.permute.xlu0 %5519
  %5521 = vrot.lane.b32.xlu0 %v837, 96
  %v5522 = vpop.permute.xlu0 %5521
  %5523 = vrot.lane.b32.xlu0 %v838, 96
  %v5524 = vpop.permute.xlu0 %5523
  %5525 = vrot.lane.b32.xlu0 %v839, 96
  %v5526 = vpop.permute.xlu0 %5525
  %5527 = vrot.lane.b32.xlu0 %v840, 96
  %v5528 = vpop.permute.xlu0 %5527
  %5529 = vrot.lane.b32.xlu0 %v841, 96
  %v5530 = vpop.permute.xlu0 %5529
  %5531 = vrot.lane.b32.xlu0 %v842, 96
  %v5532 = vpop.permute.xlu0 %5531
  %5533 = vrot.lane.b32.xlu0 %v843, 96
  %v5534 = vpop.permute.xlu0 %5533
  %5535 = vrot.lane.b32.xlu0 %v844, 96
  %v5536 = vpop.permute.xlu0 %5535
  %5537 = vrot.lane.b32.xlu0 %v845, 96
  %v5538 = vpop.permute.xlu0 %5537
  %5539 = vrot.lane.b32.xlu0 %v846, 96
  %v5540 = vpop.permute.xlu0 %5539
  %5541 = vrot.lane.b32.xlu0 %v847, 96
  %v5542 = vpop.permute.xlu0 %5541
  %5543 = vrot.lane.b32.xlu0 %v848, 96
  %v5544 = vpop.permute.xlu0 %5543
  %5545 = vrot.lane.b32.xlu0 %v849, 96
  %v5546 = vpop.permute.xlu0 %5545
  %5547 = vrot.lane.b32.xlu0 %v850, 96
  %v5548 = vpop.permute.xlu0 %5547
  %5549 = vrot.lane.b32.xlu0 %v851, 96
  %v5550 = vpop.permute.xlu0 %5549
  %5551 = vrot.lane.b32.xlu0 %v852, 96
  %v5552 = vpop.permute.xlu0 %5551
  %5553 = vrot.lane.b32.xlu0 %v853, 96
  %v5554 = vpop.permute.xlu0 %5553
  %5555 = vrot.lane.b32.xlu0 %v854, 96
  %v5556 = vpop.permute.xlu0 %5555
  %5557 = vrot.lane.b32.xlu0 %v855, 96
  %v5558 = vpop.permute.xlu0 %5557
  %5559 = vrot.lane.b32.xlu0 %v856, 96
  %v5560 = vpop.permute.xlu0 %5559
  %5561 = vrot.lane.b32.xlu0 %v857, 96
  %v5562 = vpop.permute.xlu0 %5561
  %5563 = vrot.lane.b32.xlu0 %v858, 96
  %v5564 = vpop.permute.xlu0 %5563
  %5565 = vrot.lane.b32.xlu0 %v859, 96
  %v5566 = vpop.permute.xlu0 %5565
  %5567 = vrot.lane.b32.xlu0 %v860, 96
  %v5568 = vpop.permute.xlu0 %5567
  %5569 = vrot.lane.b32.xlu0 %v861, 96
  %v5570 = vpop.permute.xlu0 %5569
  %5571 = vrot.lane.b32.xlu0 %v862, 96
  %v5572 = vpop.permute.xlu0 %5571
  %5573 = vrot.lane.b32.xlu0 %v863, 96
  %v5574 = vpop.permute.xlu0 %5573
  %5575 = vrot.lane.b32.xlu0 %v864, 96
  %v5576 = vpop.permute.xlu0 %5575
  %5577 = vrot.lane.b32.xlu0 %v865, 96
  %v5578 = vpop.permute.xlu0 %5577
  %5579 = vrot.lane.b32.xlu0 %v866, 96
  %v5580 = vpop.permute.xlu0 %5579
  %5581 = vrot.lane.b32.xlu0 %v867, 96
  %v5582 = vpop.permute.xlu0 %5581
  %5647 = vrot.lane.b32.xlu0 %v3705, 32
  %v5648 = vpop.permute.xlu0 %5647
  %5649 = vrot.lane.b32.xlu0 %v3709, 32
  %v5650 = vpop.permute.xlu0 %5649
  %5651 = vrot.lane.b32.xlu0 %v3713, 32
  %v5652 = vpop.permute.xlu0 %5651
  %5653 = vrot.lane.b32.xlu0 %v3717, 32
  %v5654 = vpop.permute.xlu0 %5653
  %5655 = vrot.lane.b32.xlu0 %v3721, 32
  %v5656 = vpop.permute.xlu0 %5655
  %5657 = vrot.lane.b32.xlu0 %v3725, 32
  %v5658 = vpop.permute.xlu0 %5657
  %5659 = vrot.lane.b32.xlu0 %v3729, 32
  %v5660 = vpop.permute.xlu0 %5659
  %5661 = vrot.lane.b32.xlu0 %v3733, 32
  %v5662 = vpop.permute.xlu0 %5661
  %5663 = vrot.lane.b32.xlu0 %v3737, 32
  %v5664 = vpop.permute.xlu0 %5663
  %5665 = vrot.lane.b32.xlu0 %v3741, 32
  %v5666 = vpop.permute.xlu0 %5665
  %5667 = vrot.lane.b32.xlu0 %v3745, 32
  %v5668 = vpop.permute.xlu0 %5667
  %5669 = vrot.lane.b32.xlu0 %v3749, 32
  %v5670 = vpop.permute.xlu0 %5669
  %5671 = vrot.lane.b32.xlu0 %v3753, 32
  %v5672 = vpop.permute.xlu0 %5671
  %5673 = vrot.lane.b32.xlu0 %v3757, 32
  %v5674 = vpop.permute.xlu0 %5673
  %5675 = vrot.lane.b32.xlu0 %v3761, 32
  %v5676 = vpop.permute.xlu0 %5675
  %5677 = vrot.lane.b32.xlu0 %v3765, 32
  %v5678 = vpop.permute.xlu0 %5677
  %5679 = vrot.lane.b32.xlu0 %v3769, 32
  %v5680 = vpop.permute.xlu0 %5679
  %5681 = vrot.lane.b32.xlu0 %v3773, 32
  %v5682 = vpop.permute.xlu0 %5681
  %5683 = vrot.lane.b32.xlu0 %v3777, 32
  %v5684 = vpop.permute.xlu0 %5683
  %5685 = vrot.lane.b32.xlu0 %v3781, 32
  %v5686 = vpop.permute.xlu0 %5685
  %5687 = vrot.lane.b32.xlu0 %v3785, 32
  %v5688 = vpop.permute.xlu0 %5687
  %5689 = vrot.lane.b32.xlu0 %v3789, 32
  %v5690 = vpop.permute.xlu0 %5689
  %5691 = vrot.lane.b32.xlu0 %v3793, 32
  %v5692 = vpop.permute.xlu0 %5691
  %5693 = vrot.lane.b32.xlu0 %v3797, 32
  %v5694 = vpop.permute.xlu0 %5693
  %5695 = vrot.lane.b32.xlu0 %v3801, 32
  %v5696 = vpop.permute.xlu0 %5695
  %5697 = vrot.lane.b32.xlu0 %v3805, 32
  %v5698 = vpop.permute.xlu0 %5697
  %5699 = vrot.lane.b32.xlu0 %v3809, 32
  %v5700 = vpop.permute.xlu0 %5699
  %5701 = vrot.lane.b32.xlu0 %v3813, 32
  %v5702 = vpop.permute.xlu0 %5701
  %5703 = vrot.lane.b32.xlu0 %v3817, 32
  %v5704 = vpop.permute.xlu0 %5703
  %5705 = vrot.lane.b32.xlu0 %v3821, 32
  %v5706 = vpop.permute.xlu0 %5705
  %5707 = vrot.lane.b32.xlu0 %v3825, 32
  %v5708 = vpop.permute.xlu0 %5707
  %5709 = vrot.lane.b32.xlu0 %v3829, 32
  %v5710 = vpop.permute.xlu0 %5709
  %5775 = vrot.lane.b32.xlu0 %v5105, 64
  %v5776 = vpop.permute.xlu0 %5775
  %5777 = vrot.lane.b32.xlu0 %v5109, 64
  %v5778 = vpop.permute.xlu0 %5777
  %5779 = vrot.lane.b32.xlu0 %v5113, 64
  %v5780 = vpop.permute.xlu0 %5779
  %5781 = vrot.lane.b32.xlu0 %v5117, 64
  %v5782 = vpop.permute.xlu0 %5781
  %5783 = vrot.lane.b32.xlu0 %v5121, 64
  %v5784 = vpop.permute.xlu0 %5783
  %5785 = vrot.lane.b32.xlu0 %v5125, 64
  %v5786 = vpop.permute.xlu0 %5785
  %5787 = vrot.lane.b32.xlu0 %v5129, 64
  %v5788 = vpop.permute.xlu0 %5787
  %5789 = vrot.lane.b32.xlu0 %v5133, 64
  %v5790 = vpop.permute.xlu0 %5789
  %5791 = vrot.lane.b32.xlu0 %v5137, 64
  %v5792 = vpop.permute.xlu0 %5791
  %5793 = vrot.lane.b32.xlu0 %v5141, 64
  %v5794 = vpop.permute.xlu0 %5793
  %5795 = vrot.lane.b32.xlu0 %v5145, 64
  %v5796 = vpop.permute.xlu0 %5795
  %5797 = vrot.lane.b32.xlu0 %v5149, 64
  %v5798 = vpop.permute.xlu0 %5797
  %5799 = vrot.lane.b32.xlu0 %v5153, 64
  %v5800 = vpop.permute.xlu0 %5799
  %5801 = vrot.lane.b32.xlu0 %v5157, 64
  %v5802 = vpop.permute.xlu0 %5801
  %5803 = vrot.lane.b32.xlu0 %v5161, 64
  %v5804 = vpop.permute.xlu0 %5803
  %5805 = vrot.lane.b32.xlu0 %v5165, 64
  %v5806 = vpop.permute.xlu0 %5805
  %5807 = vrot.lane.b32.xlu0 %v5169, 64
  %v5808 = vpop.permute.xlu0 %5807
  %5809 = vrot.lane.b32.xlu0 %v5173, 64
  %v5810 = vpop.permute.xlu0 %5809
  %5811 = vrot.lane.b32.xlu0 %v5177, 64
  %v5812 = vpop.permute.xlu0 %5811
  %5813 = vrot.lane.b32.xlu0 %v5181, 64
  %v5814 = vpop.permute.xlu0 %5813
  %5815 = vrot.lane.b32.xlu0 %v5185, 64
  %v5816 = vpop.permute.xlu0 %5815
  %5817 = vrot.lane.b32.xlu0 %v5189, 64
  %v5818 = vpop.permute.xlu0 %5817
  %5819 = vrot.lane.b32.xlu0 %v5193, 64
  %v5820 = vpop.permute.xlu0 %5819
  %5821 = vrot.lane.b32.xlu0 %v5197, 64
  %v5822 = vpop.permute.xlu0 %5821
  %5823 = vrot.lane.b32.xlu0 %v5201, 64
  %v5824 = vpop.permute.xlu0 %5823
  %5825 = vrot.lane.b32.xlu0 %v5205, 64
  %v5826 = vpop.permute.xlu0 %5825
  %5827 = vrot.lane.b32.xlu0 %v5209, 64
  %v5828 = vpop.permute.xlu0 %5827
  %5829 = vrot.lane.b32.xlu0 %v5213, 64
  %v5830 = vpop.permute.xlu0 %5829
  %5831 = vrot.lane.b32.xlu0 %v5217, 64
  %v5832 = vpop.permute.xlu0 %5831
  %5833 = vrot.lane.b32.xlu0 %v5221, 64
  %v5834 = vpop.permute.xlu0 %5833
  %5835 = vrot.lane.b32.xlu0 %v5225, 64
  %v5836 = vpop.permute.xlu0 %5835
  %5837 = vrot.lane.b32.xlu0 %v5229, 64
  %v5838 = vpop.permute.xlu0 %5837
  %vm5871 = vcmask 261120
  %v5872 = vsel %vm5871, %v248, %v5264
  %v5873 = vsel %vm5871, %v249, %v5266
  %v5874 = vsel %vm5871, %v250, %v5268
  %v5875 = vsel %vm5871, %v251, %v5270
  %v5876 = vsel %vm5871, %v252, %v5272
  %v5877 = vsel %vm5871, %v253, %v5274
  %v5878 = vsel %vm5871, %v254, %v5276
  %v5879 = vsel %vm5871, %v255, %v5278
  %v5880 = vsel %vm5871, %v256, %v5280
  %v5881 = vsel %vm5871, %v257, %v5282
  %v5882 = vsel %vm5871, %v258, %v5284
  %v5883 = vsel %vm5871, %v259, %v5286
  %v5884 = vsel %vm5871, %v260, %v5288
  %v5885 = vsel %vm5871, %v261, %v5290
  %v5886 = vsel %vm5871, %v262, %v5292
  %v5887 = vsel %vm5871, %v263, %v5294
  %v5888 = vsel %vm5871, %v264, %v5296
  %v5889 = vsel %vm5871, %v265, %v5298
  %v5890 = vsel %vm5871, %v266, %v5300
  %v5891 = vsel %vm5871, %v267, %v5302
  %v5892 = vsel %vm5871, %v268, %v5304
  %v5893 = vsel %vm5871, %v269, %v5306
  %v5894 = vsel %vm5871, %v270, %v5308
  %v5895 = vsel %vm5871, %v271, %v5310
  %v5896 = vsel %vm5871, %v272, %v5312
  %v5897 = vsel %vm5871, %v273, %v5314
  %v5898 = vsel %vm5871, %v274, %v5316
  %v5899 = vsel %vm5871, %v275, %v5318
  %v5900 = vsel %vm5871, %v276, %v5320
  %v5901 = vsel %vm5871, %v277, %v5322
  %v5902 = vsel %vm5871, %v278, %v5324
  %v5903 = vsel %vm5871, %v279, %v5326
  %vm5904 = vcmask 523264
  %v5905 = vsel %vm5904, %v5872, %v5392
  %v5906 = vsel %vm5904, %v5873, %v5394
  %v5907 = vsel %vm5904, %v5874, %v5396
  %v5908 = vsel %vm5904, %v5875, %v5398
  %v5909 = vsel %vm5904, %v5876, %v5400
  %v5910 = vsel %vm5904, %v5877, %v5402
  %v5911 = vsel %vm5904, %v5878, %v5404
  %v5912 = vsel %vm5904, %v5879, %v5406
  %v5913 = vsel %vm5904, %v5880, %v5408
  %v5914 = vsel %vm5904, %v5881, %v5410
  %v5915 = vsel %vm5904, %v5882, %v5412
  %v5916 = vsel %vm5904, %v5883, %v5414
  %v5917 = vsel %vm5904, %v5884, %v5416
  %v5918 = vsel %vm5904, %v5885, %v5418
  %v5919 = vsel %vm5904, %v5886, %v5420
  %v5920 = vsel %vm5904, %v5887, %v5422
  %v5921 = vsel %vm5904, %v5888, %v5424
  %v5922 = vsel %vm5904, %v5889, %v5426
  %v5923 = vsel %vm5904, %v5890, %v5428
  %v5924 = vsel %vm5904, %v5891, %v5430
  %v5925 = vsel %vm5904, %v5892, %v5432
  %v5926 = vsel %vm5904, %v5893, %v5434
  %v5927 = vsel %vm5904, %v5894, %v5436
  %v5928 = vsel %vm5904, %v5895, %v5438
  %v5929 = vsel %vm5904, %v5896, %v5440
  %v5930 = vsel %vm5904, %v5897, %v5442
  %v5931 = vsel %vm5904, %v5898, %v5444
  %v5932 = vsel %vm5904, %v5899, %v5446
  %v5933 = vsel %vm5904, %v5900, %v5448
  %v5934 = vsel %vm5904, %v5901, %v5450
  %v5935 = vsel %vm5904, %v5902, %v5452
  %v5936 = vsel %vm5904, %v5903, %v5454
  %vm5937 = vcmask 785408
  %v5938 = vsel %vm5937, %v5905, %v5520
  %v5939 = vsel %vm5937, %v5906, %v5522
  %v5940 = vsel %vm5937, %v5907, %v5524
  %v5941 = vsel %vm5937, %v5908, %v5526
  %v5942 = vsel %vm5937, %v5909, %v5528
  %v5943 = vsel %vm5937, %v5910, %v5530
  %v5944 = vsel %vm5937, %v5911, %v5532
  %v5945 = vsel %vm5937, %v5912, %v5534
  %v5946 = vsel %vm5937, %v5913, %v5536
  %v5947 = vsel %vm5937, %v5914, %v5538
  %v5948 = vsel %vm5937, %v5915, %v5540
  %v5949 = vsel %vm5937, %v5916, %v5542
  %v5950 = vsel %vm5937, %v5917, %v5544
  %v5951 = vsel %vm5937, %v5918, %v5546
  %v5952 = vsel %vm5937, %v5919, %v5548
  %v5953 = vsel %vm5937, %v5920, %v5550
  %v5954 = vsel %vm5937, %v5921, %v5552
  %v5955 = vsel %vm5937, %v5922, %v5554
  %v5956 = vsel %vm5937, %v5923, %v5556
  %v5957 = vsel %vm5937, %v5924, %v5558
  %v5958 = vsel %vm5937, %v5925, %v5560
  %v5959 = vsel %vm5937, %v5926, %v5562
  %v5960 = vsel %vm5937, %v5927, %v5564
  %v5961 = vsel %vm5937, %v5928, %v5566
  %v5962 = vsel %vm5937, %v5929, %v5568
  %v5963 = vsel %vm5937, %v5930, %v5570
  %v5964 = vsel %vm5937, %v5931, %v5572
  %v5965 = vsel %vm5937, %v5932, %v5574
  %v5966 = vsel %vm5937, %v5933, %v5576
  %v5967 = vsel %vm5937, %v5934, %v5578
  %v5968 = vsel %vm5937, %v5935, %v5580
  %v5969 = vsel %vm5937, %v5936, %v5582
  %v5970 = vsel %vm5871, %v2305, %v5648
  %v5971 = vsel %vm5871, %v2309, %v5650
  %v5972 = vsel %vm5871, %v2313, %v5652
  %v5973 = vsel %vm5871, %v2317, %v5654
  %v5974 = vsel %vm5871, %v2321, %v5656
  %v5975 = vsel %vm5871, %v2325, %v5658
  %v5976 = vsel %vm5871, %v2329, %v5660
  %v5977 = vsel %vm5871, %v2333, %v5662
  %v5978 = vsel %vm5871, %v2337, %v5664
  %v5979 = vsel %vm5871, %v2341, %v5666
  %v5980 = vsel %vm5871, %v2345, %v5668
  %v5981 = vsel %vm5871, %v2349, %v5670
  %v5982 = vsel %vm5871, %v2353, %v5672
  %v5983 = vsel %vm5871, %v2357, %v5674
  %v5984 = vsel %vm5871, %v2361, %v5676
  %v5985 = vsel %vm5871, %v2365, %v5678
  %v5986 = vsel %vm5871, %v2369, %v5680
  %v5987 = vsel %vm5871, %v2373, %v5682
  %v5988 = vsel %vm5871, %v2377, %v5684
  %v5989 = vsel %vm5871, %v2381, %v5686
  %v5990 = vsel %vm5871, %v2385, %v5688
  %v5991 = vsel %vm5871, %v2389, %v5690
  %v5992 = vsel %vm5871, %v2393, %v5692
  %v5993 = vsel %vm5871, %v2397, %v5694
  %v5994 = vsel %vm5871, %v2401, %v5696
  %v5995 = vsel %vm5871, %v2405, %v5698
  %v5996 = vsel %vm5871, %v2409, %v5700
  %v5997 = vsel %vm5871, %v2413, %v5702
  %v5998 = vsel %vm5871, %v2417, %v5704
  %v5999 = vsel %vm5871, %v2421, %v5706
  %v6000 = vsel %vm5871, %v2425, %v5708
  %v6001 = vsel %vm5871, %v2429, %v5710
  %v6002 = vsel %vm5904, %v5970, %v5776
  %v6003 = vsel %vm5904, %v5971, %v5778
  %v6004 = vsel %vm5904, %v5972, %v5780
  %v6005 = vsel %vm5904, %v5973, %v5782
  %v6006 = vsel %vm5904, %v5974, %v5784
  %v6007 = vsel %vm5904, %v5975, %v5786
  %v6008 = vsel %vm5904, %v5976, %v5788
  %v6009 = vsel %vm5904, %v5977, %v5790
  %v6010 = vsel %vm5904, %v5978, %v5792
  %v6011 = vsel %vm5904, %v5979, %v5794
  %v6012 = vsel %vm5904, %v5980, %v5796
  %v6013 = vsel %vm5904, %v5981, %v5798
  %v6014 = vsel %vm5904, %v5982, %v5800
  %v6015 = vsel %vm5904, %v5983, %v5802
  %v6016 = vsel %vm5904, %v5984, %v5804
  %v6017 = vsel %vm5904, %v5985, %v5806
  %v6018 = vsel %vm5904, %v5986, %v5808
  %v6019 = vsel %vm5904, %v5987, %v5810
  %v6020 = vsel %vm5904, %v5988, %v5812
  %v6021 = vsel %vm5904, %v5989, %v5814
  %v6022 = vsel %vm5904, %v5990, %v5816
  %v6023 = vsel %vm5904, %v5991, %v5818
  %v6024 = vsel %vm5904, %v5992, %v5820
  %v6025 = vsel %vm5904, %v5993, %v5822
  %v6026 = vsel %vm5904, %v5994, %v5824
  %v6027 = vsel %vm5904, %v5995, %v5826
  %v6028 = vsel %vm5904, %v5996, %v5828
  %v6029 = vsel %vm5904, %v5997, %v5830
  %v6030 = vsel %vm5904, %v5998, %v5832
  %v6031 = vsel %vm5904, %v5999, %v5834
  %v6032 = vsel %vm5904, %v6000, %v5836
  %v6033 = vsel %vm5904, %v6001, %v5838
  %6034 = vst [vmem:[%s5] sm:$0xff] %v5938
  %6035 = vst.msk [vmem:[%s5 + $0x8] sm:$0xff] %vm5937, %v6002
  %6036 = vst [vmem:[%s5 + $0x10] sm:$0xff] %v5939
  %6037 = vst.msk [vmem:[%s5 + $0x18] sm:$0xff] %vm5937, %v6003
  %6038 = vst [vmem:[%s5 + $0x20] sm:$0xff] %v5940
  %6039 = vst.msk [vmem:[%s5 + $0x28] sm:$0xff] %vm5937, %v6004
  %6040 = vst [vmem:[%s5 + $0x30] sm:$0xff] %v5941
  %6041 = vst.msk [vmem:[%s5 + $0x38] sm:$0xff] %vm5937, %v6005
  %6042 = vst [vmem:[%s5 + $0x40] sm:$0xff] %v5942
  %6043 = vst.msk [vmem:[%s5 + $0x48] sm:$0xff] %vm5937, %v6006
  %6044 = vst [vmem:[%s5 + $0x50] sm:$0xff] %v5943
  %6045 = vst.msk [vmem:[%s5 + $0x58] sm:$0xff] %vm5937, %v6007
  %6046 = vst [vmem:[%s5 + $0x60] sm:$0xff] %v5944
  %6047 = vst.msk [vmem:[%s5 + $0x68] sm:$0xff] %vm5937, %v6008
  %6048 = vst [vmem:[%s5 + $0x70] sm:$0xff] %v5945
  %6049 = vst.msk [vmem:[%s5 + $0x78] sm:$0xff] %vm5937, %v6009
  %6050 = vst [vmem:[%s5 + $0x80] sm:$0xff] %v5946
  %6051 = vst.msk [vmem:[%s5 + $0x88] sm:$0xff] %vm5937, %v6010
  %6052 = vst [vmem:[%s5 + $0x90] sm:$0xff] %v5947
  %6053 = vst.msk [vmem:[%s5 + $0x98] sm:$0xff] %vm5937, %v6011
  %6054 = vst [vmem:[%s5 + $0xa0] sm:$0xff] %v5948
  %6055 = vst.msk [vmem:[%s5 + $0xa8] sm:$0xff] %vm5937, %v6012
  %6056 = vst [vmem:[%s5 + $0xb0] sm:$0xff] %v5949
  %6057 = vst.msk [vmem:[%s5 + $0xb8] sm:$0xff] %vm5937, %v6013
  %6058 = vst [vmem:[%s5 + $0xc0] sm:$0xff] %v5950
  %6059 = vst.msk [vmem:[%s5 + $0xc8] sm:$0xff] %vm5937, %v6014
  %6060 = vst [vmem:[%s5 + $0xd0] sm:$0xff] %v5951
  %6061 = vst.msk [vmem:[%s5 + $0xd8] sm:$0xff] %vm5937, %v6015
  %6062 = vst [vmem:[%s5 + $0xe0] sm:$0xff] %v5952
  %6063 = vst.msk [vmem:[%s5 + $0xe8] sm:$0xff] %vm5937, %v6016
  %6064 = vst [vmem:[%s5 + $0xf0] sm:$0xff] %v5953
  %6065 = vst.msk [vmem:[%s5 + $0xf8] sm:$0xff] %vm5937, %v6017
  %6066 = vst [vmem:[%s5 + $0x100] sm:$0xff] %v5954
  %6067 = vst.msk [vmem:[%s5 + $0x108] sm:$0xff] %vm5937, %v6018
  %6068 = vst [vmem:[%s5 + $0x110] sm:$0xff] %v5955
  %6069 = vst.msk [vmem:[%s5 + $0x118] sm:$0xff] %vm5937, %v6019
  %6070 = vst [vmem:[%s5 + $0x120] sm:$0xff] %v5956
  %6071 = vst.msk [vmem:[%s5 + $0x128] sm:$0xff] %vm5937, %v6020
  %6072 = vst [vmem:[%s5 + $0x130] sm:$0xff] %v5957
  %6073 = vst.msk [vmem:[%s5 + $0x138] sm:$0xff] %vm5937, %v6021
  %6074 = vst [vmem:[%s5 + $0x140] sm:$0xff] %v5958
  %6075 = vst.msk [vmem:[%s5 + $0x148] sm:$0xff] %vm5937, %v6022
  %6076 = vst [vmem:[%s5 + $0x150] sm:$0xff] %v5959
  %6077 = vst.msk [vmem:[%s5 + $0x158] sm:$0xff] %vm5937, %v6023
  %6078 = vst [vmem:[%s5 + $0x160] sm:$0xff] %v5960
  %6079 = vst.msk [vmem:[%s5 + $0x168] sm:$0xff] %vm5937, %v6024
  %6080 = vst [vmem:[%s5 + $0x170] sm:$0xff] %v5961
  %6081 = vst.msk [vmem:[%s5 + $0x178] sm:$0xff] %vm5937, %v6025
  %6082 = vst [vmem:[%s5 + $0x180] sm:$0xff] %v5962
  %6083 = vst.msk [vmem:[%s5 + $0x188] sm:$0xff] %vm5937, %v6026
  %6084 = vst [vmem:[%s5 + $0x190] sm:$0xff] %v5963
  %6085 = vst.msk [vmem:[%s5 + $0x198] sm:$0xff] %vm5937, %v6027
  %6086 = vst [vmem:[%s5 + $0x1a0] sm:$0xff] %v5964
  %6087 = vst.msk [vmem:[%s5 + $0x1a8] sm:$0xff] %vm5937, %v6028
  %6088 = vst [vmem:[%s5 + $0x1b0] sm:$0xff] %v5965
  %6089 = vst.msk [vmem:[%s5 + $0x1b8] sm:$0xff] %vm5937, %v6029
  %6090 = vst [vmem:[%s5 + $0x1c0] sm:$0xff] %v5966
  %6091 = vst.msk [vmem:[%s5 + $0x1c8] sm:$0xff] %vm5937, %v6030
  %6092 = vst [vmem:[%s5 + $0x1d0] sm:$0xff] %v5967
  %6093 = vst.msk [vmem:[%s5 + $0x1d8] sm:$0xff] %vm5937, %v6031
  %6094 = vst [vmem:[%s5 + $0x1e0] sm:$0xff] %v5968
  %6095 = vst.msk [vmem:[%s5 + $0x1e8] sm:$0xff] %vm5937, %v6032
  %6096 = vst [vmem:[%s5 + $0x1f0] sm:$0xff] %v5969
  %6097 = vst.msk [vmem:[%s5 + $0x1f8] sm:$0xff] %vm5937, %v6033
  // Predicated region
  $region22: #{tpu_custom_call.1} parent=0 // pred_check
    _
  $region23: #{tpu_custom_call.1} parent=0 // pred_check_branch
    %6099 = sbr.rel (0) target = $region25
  $region24: #{tpu_custom_call.1} parent=0 // pred_region
    _
  $region25: #{tpu_custom_call.1} parent=0 // pred_fallthru
    _
  // Predicated region
  $region26: #{tpu_custom_call.1} parent=0 // pred_check
    _
  $region27: #{tpu_custom_call.1} parent=0 // pred_check_branch
    %6101 = sbr.rel (0) target = $region29
  $region28: #{tpu_custom_call.1} parent=0 // pred_region
    _
  $region29: #{tpu_custom_call.1} parent=0 // pred_fallthru
    _

</llo_original>
